<compile_context>
chip_gen: v6e
topology: v6e:2x2x1
jax: 0.10.0
libtpu: 0.0.40
codegen_flags: <defaults>
</compile_context>

<pallas_src>
import functools

import jax
import jax.numpy as jnp
from jax.experimental import pallas as pl
from jax.experimental.pallas import tpu as pltpu

# Per-sample row counts.  Input H=188 (implied by fc1 in_features=384):
#   conv1 -> 186 -pool/3-> 62 -conv2-> 60 -pool-> 20 -conv3-> 18 -pool-> 6.
# Stages are padded to 63 / 21 rows per sample so the whole batch tile stays
# folded as one 2-D (bt*rows, C) array and every stride-3 pool read never
# crosses a sample boundary.
#
# Garbage-row invariant (do NOT change _L1/_L2 without re-deriving):
#   p1 row 62, c2 rows 60..62, c3 rows 18..20 of each sample are garbage, and
#   every VALID downstream row only ever reads valid rows:
#     conv2 q<=59 reads p1 rows q..q+2 <= 61;  pool2 s<=19 reads c2 rows <=59;
#     conv3 t<=17 reads p2 rows t..t+2 <= 19;  pool3 h<=5 reads c3 rows <=17.
_HIN = 188
_L1, _L2 = 63, 21           # padded rows per sample entering conv2 / conv3


def _gelu(x):
    # exact GELU: 0.5 * x * (1 + erf(x / sqrt(2)))  (PyTorch nn.GELU() default)
    return 0.5 * x * (1.0 + jax.lax.erf(x * 0.7071067811865476))


def _earthquake_kernel(x_ref,
                       w1_ref, t1_ref, sel_ref,
                       w2_ref, t2_ref, w3_ref, t3_ref,
                       fw1_ref, fb1_ref, fw2_ref, fb2_ref, fw3_ref, fb3_ref,
                       out_ref,
                       c2, c3, p3, *, bt):
    f32 = jnp.float32
    bf16 = jnp.bfloat16
    n1, n2 = bt * _L1, bt * _L2

    # ---- conv1 + folded bias/BN1 + GELU + maxpool1 --------------------------
    # x row g = b*63 + p holds x[b, 3p : 3p+8]; one dot against the packed
    # (8, 48) weight computes conv1 at h = 3p+r for r = 0,1,2 (lanes r*16+co),
    # so GELU runs lane-dense on 48 lanes instead of 3x on 16 lanes.
    xb = x_ref[...].astype(bf16)                                   # (n1, 8)
    h_all = (jnp.dot(xb, w1_ref[...], preferred_element_type=f32)
             + t1_ref[...])                                        # (n1, 48)
    g = _gelu(h_all).astype(bf16)
    # maxpool1: exact 0/1-selection dots extract the three 16-lane slabs on the
    # (mostly idle) MXU; the pooling max stays elementwise f32.
    p1 = jnp.maximum(
        jnp.maximum(jnp.dot(g, sel_ref[0], preferred_element_type=f32),
                    jnp.dot(g, sel_ref[1], preferred_element_type=f32)),
        jnp.dot(g, sel_ref[2], preferred_element_type=f32))        # (n1, 16)
    # dropout1: identity (inference)

    # ---- conv2 (16->32): three accumulating bf16 MXU dots -------------------
    a = (jnp.dot(p1[0:n1 - 2, :].astype(bf16), w2_ref[0],
                 preferred_element_type=f32)
         + jnp.dot(p1[1:n1 - 1, :].astype(bf16), w2_ref[1],
                   preferred_element_type=f32)
         + jnp.dot(p1[2:n1, :].astype(bf16), w2_ref[2],
                   preferred_element_type=f32)
         + t2_ref[...])
    c2[pl.ds(0, n1 - 2), :] = _gelu(a)
    c2[pl.ds(n1 - 2, 2), :] = jnp.zeros((2, 32), f32)

    # maxpool2 -> (n2, 32); stride-3 reads stay inside a sample (63 = 3*21).
    p2 = jnp.maximum(jnp.maximum(c2[pl.ds(0, n2, 3), :],
                                 c2[pl.ds(1, n2, 3), :]),
                     c2[pl.ds(2, n2, 3), :])
    # dropout2: identity (inference)

    # ---- conv3 (32->64) ------------------------------------------------------
    c = (jnp.dot(p2[0:n2 - 2, :].astype(bf16), w3_ref[0],
                 preferred_element_type=f32)
         + jnp.dot(p2[1:n2 - 1, :].astype(bf16), w3_ref[1],
                   preferred_element_type=f32)
         + jnp.dot(p2[2:n2, :].astype(bf16), w3_ref[2],
                   preferred_element_type=f32)
         + t3_ref[...])
    c3[pl.ds(0, n2 - 2), :] = _gelu(c)
    c3[pl.ds(n2 - 2, 2), :] = jnp.zeros((2, 64), f32)
    # dropout3: identity (inference)

    # ---- maxpool3 packed lane-dense (bt, 384), then fc1 as ONE K=384 dot -----
    # PyTorch flattens NCHW C-major; that ordering is folded into fw1 so that
    # fw1[h*64 + c, j] == W_fc1_torch[j, c*6 + h].
    for hh in range(6):
        ph = jnp.maximum(jnp.maximum(c3[pl.ds(3 * hh, bt, _L2), :],
                                     c3[pl.ds(3 * hh + 1, bt, _L2), :]),
                         c3[pl.ds(3 * hh + 2, bt, _L2), :])        # (bt, 64)
        p3[:, pl.ds(hh * 64, 64)] = ph
    f = _gelu(jnp.dot(p3[...].astype(bf16), fw1_ref[...],
                      preferred_element_type=f32) + fb1_ref[...])
    f = _gelu(jnp.dot(f.astype(bf16), fw2_ref[...],
                      preferred_element_type=f32) + fb2_ref[...])
    # fc3 padded to 8 output columns (full-last-dim output block).
    out_ref[...] = (jnp.dot(f.astype(bf16), fw3_ref[...],
                            preferred_element_type=f32) + fb3_ref[...])


def earthquake_cnn_forward(x_nchw, params, *, block_b=128):
    (w1, b1, s1, t1, w2, b2, s2, t2, w3, b3, s3, t3,
     fw1, fb1, fw2, fb2, fw3, fb3) = params
    B = x_nchw.shape[0]
    f32, bf16 = jnp.float32, jnp.bfloat16

    # Batch tile: multiple of 8, chosen so the grid has >=4 steps for large B
    # (>=2 whenever B > 8) while block_b caps per-tile VMEM.  block_b=128 fits
    # comfortably in v5e/v6e's 128 MiB and v7x's 64 MiB with the scratch below.
    bt = -(-B // 4)                  # ceil(B / 4)
    bt = -(-bt // 8) * 8             # round up to a multiple of 8
    bt = max(8, min(block_b, bt))
    bp = -(-B // bt) * bt
    grid = (bp // bt,)

    # Fold conv bias + eval-mode BatchNorm into the conv weights / shift:
    #   bn(conv(x) + b) = conv_{w*s}(x) + (t + s*b)
    w1e = (w1 * s1[0]).reshape(3, 16)
    w2e = (w2 * s2[0]).astype(bf16)
    w3e = (w3 * s3[0]).astype(bf16)
    t1e = t1 + s1 * b1
    t2e = t2 + s2 * b2
    t3e = t3 + s3 * b3

    # Packed conv1 weight: lanes r*16+co hold the conv at pool-window offset r;
    # rows m are the 8 input taps x[b, 3p+m].
    w1all = jnp.zeros((8, 48), f32)
    for r in range(3):
        w1all = w1all.at[r:r + 3, r * 16:(r + 1) * 16].set(w1e)
    w1all = w1all.astype(bf16)
    t1all = jnp.concatenate([t1e, t1e, t1e], axis=1)               # (1, 48)

    # 0/1 slab-selection matrices for maxpool1 (exact in bf16).
    sel = jnp.zeros((3, 48, 16), f32)
    eye16 = jnp.eye(16, dtype=f32)
    for r in range(3):
        sel = sel.at[r, r * 16:(r + 1) * 16, :].set(eye16)
    sel = sel.astype(bf16)

    # fc weights: fc1 re-laid for the (h-major, c) lane order of packed p3,
    # fc3 padded 3->8 output columns for a small full-last-dim output block.
    fw1m = fw1.reshape(384, 64).astype(bf16)          # row index = h*64 + c
    fw2b = fw2.astype(bf16)
    fw3p = jnp.zeros((16, 8), f32).at[:, :3].set(fw3).astype(bf16)
    fb3p = jnp.zeros((1, 8), f32).at[:, :3].set(fb3)

    # Input: NCHW (B,1,188,1) -> lane-dense pool-window rows
    #   x8[b*63 + p, m] = x[b, 3p + m]   (m in 0..7; zero-padded past 187).
    x = x_nchw.reshape(B, _HIN).astype(f32)
    x = jnp.pad(x, ((0, bp - B), (0, 8)))                          # (bp, 196)
    win = jnp.arange(63)[:, None] * 3 + jnp.arange(8)[None, :]     # (63, 8)
    x8 = x[:, win].reshape(bp * _L1, 8)

    kparams = (w1all, t1all, sel, w2e, t2e, w3e, t3e,
               fw1m, fb1, fw2b, fb2, fw3p, fb3p)

    def _full(p):
        nd = p.ndim
        return pl.BlockSpec(p.shape, lambda i, _nd=nd: (0,) * _nd)

    out = pl.pallas_call(
        functools.partial(_earthquake_kernel, bt=bt),
        out_shape=jax.ShapeDtypeStruct((bp, 8), f32),
        grid=grid,
        in_specs=[pl.BlockSpec((bt * _L1, 8), lambda i: (i, 0))]
                 + [_full(p) for p in kparams],
        out_specs=pl.BlockSpec((bt, 8), lambda i: (i, 0)),
        scratch_shapes=[
            pltpu.VMEM((bt * _L1, 32), f32),   # conv2 activations
            pltpu.VMEM((bt * _L2, 64), f32),   # conv3 activations
            pltpu.VMEM((bt, 384), f32),        # packed maxpool3 output
        ],
        compiler_params=pltpu.CompilerParams(
            dimension_semantics=("parallel",),
            vmem_limit_bytes=48 * 1024 * 1024),
    )(x8, *kparams)
    return out[:B, :3]


def reference_forward(x_nchw, params):
    """Plain-JAX f32 reference (unfolded params) for validation."""
    (w1, b1, s1, t1, w2, b2, s2, t2, w3, b3, s3, t3,
     fw1, fb1, fw2, fb2, fw3, fb3) = params
    x = jnp.transpose(x_nchw, (0, 2, 3, 1)).reshape(x_nchw.shape[0], 188, 1)

    def one(xb):
        h = xb[0:186] * w1[0] + xb[1:187] * w1[1] + xb[2:188] * w1[2] + b1
        h = _gelu(h * s1 + t1)
        p1 = jnp.max(h.reshape(62, 3, 16), axis=1)
        a = p1[0:60] @ w2[0] + p1[1:61] @ w2[1] + p1[2:62] @ w2[2] + b2
        a = _gelu(a * s2 + t2)
        p2 = jnp.max(a.reshape(20, 3, 32), axis=1)
        c = p2[0:18] @ w3[0] + p2[1:19] @ w3[1] + p2[2:20] @ w3[2] + b3
        c = _gelu(c * s3 + t3)
        p3 = jnp.max(c.reshape(6, 3, 64), axis=1)
        f = jnp.einsum('hc,hcj->j', p3, fw1) + fb1[0]
        f = _gelu(f)
        f = _gelu(f @ fw2 + fb2[0])
        return f @ fw3 + fb3[0]

    return jax.vmap(one)(x)


def _make_bn(kg, kb, km, kv, C):
    gamma = jax.random.uniform(kg, (C,), jnp.float32, 0.5, 1.5)
    beta = jax.random.normal(kb, (C,), jnp.float32) * 0.1
    mean = jax.random.normal(km, (C,), jnp.float32) * 0.1
    var = jax.random.uniform(kv, (C,), jnp.float32, 0.5, 1.5)
    eps = 1e-5
    scale = gamma / jnp.sqrt(var + eps)
    shift = beta - mean * scale
    return scale.reshape(1, C), shift.reshape(1, C)


if __name__ == "__main__":
    H = 188
    key = jax.random.PRNGKey(0)
    ks = jax.random.split(key, 27)

    # ---- conv weights in PyTorch layout (Co, Ci, Kh, Kw), then re-laid out ----
    W1t = jax.random.normal(ks[1], (16, 1, 3, 1), jnp.float32) / jnp.sqrt(3.0)
    b1t = jax.random.normal(ks[2], (16,), jnp.float32) * 0.1
    W2t = jax.random.normal(ks[3], (32, 16, 3, 1), jnp.float32) / jnp.sqrt(48.0)
    b2t = jax.random.normal(ks[4], (32,), jnp.float32) * 0.1
    W3t = jax.random.normal(ks[5], (64, 32, 3, 1), jnp.float32) / jnp.sqrt(96.0)
    b3t = jax.random.normal(ks[6], (64,), jnp.float32) * 0.1

    w1 = jnp.transpose(W1t[..., 0], (2, 1, 0))   # (3, 1, 16)  [k, ci, co]
    w2 = jnp.transpose(W2t[..., 0], (2, 1, 0))   # (3, 16, 32)
    w3 = jnp.transpose(W3t[..., 0], (2, 1, 0))   # (3, 32, 64)
    b1 = b1t.reshape(1, 16)
    b2 = b2t.reshape(1, 32)
    b3 = b3t.reshape(1, 64)

    s1, t1 = _make_bn(ks[7], ks[8], ks[9], ks[10], 16)
    s2, t2 = _make_bn(ks[11], ks[12], ks[13], ks[14], 32)
    s3, t3 = _make_bn(ks[15], ks[16], ks[17], ks[18], 64)

    # ---- fc weights in PyTorch layout (out, in) ----
    Wf1 = jax.random.normal(ks[19], (64, 384), jnp.float32) / jnp.sqrt(384.0)
    bf1 = jax.random.normal(ks[20], (64,), jnp.float32) * 0.1
    Wf2 = jax.random.normal(ks[21], (16, 64), jnp.float32) / jnp.sqrt(64.0)
    bf2 = jax.random.normal(ks[22], (16,), jnp.float32) * 0.1
    Wf3 = jax.random.normal(ks[23], (3, 16), jnp.float32) / jnp.sqrt(16.0)
    bf3 = jax.random.normal(ks[24], (3,), jnp.float32) * 0.1

    # fold PyTorch C-major flatten (index = c*6 + h) into the fc1 weight layout
    fw1 = jnp.transpose(Wf1.reshape(64, 64, 6), (2, 1, 0))  # (6, 64, 64) [h,c,j]
    fb1 = bf1.reshape(1, 64)
    fw2 = Wf2.T                                             # (64, 16)
    fb2 = bf2.reshape(1, 16)
    fw3 = Wf3.T                                             # (16, 3)
    fb3 = bf3.reshape(1, 3)

    params = (w1, b1, s1, t1, w2, b2, s2, t2, w3, b3, s3, t3,
              fw1, fb1, fw2, fb2, fw3, fb3)

    # Tolerance reflects bf16 MXU operands (accumulation stays f32).
    # Single-tile case (B=2, grid=(1,)).
    x_small = jax.random.normal(ks[0], (2, 1, H, 1), dtype=jnp.float32)
    out = jax.block_until_ready(earthquake_cnn_forward(x_small, params))
    ref = jax.block_until_ready(reference_forward(x_small, params))
    assert out.shape == (2, 3), out.shape
    assert jnp.allclose(out, ref, atol=3e-2, rtol=3e-2), (
        f"max diff {jnp.max(jnp.abs(out - ref))}")

    # Multi-tile case (exercises the batched grid + padding path).
    x_big = jax.random.normal(ks[25], (24, 1, H, 1), dtype=jnp.float32)
    out_b = jax.block_until_ready(earthquake_cnn_forward(x_big, params))
    ref_b = jax.block_until_ready(reference_forward(x_big, params))
    assert out_b.shape == (24, 3), out_b.shape
    assert jnp.allclose(out_b, ref_b, atol=3e-2, rtol=3e-2), (
        f"max diff {jnp.max(jnp.abs(out_b - ref_b))}")

    print("KERNEL_OK")
</pallas_src>

<mosaic_0001>
module attributes {stable_mosaic.version = 11 : i64} {
  func.func @_earthquake_kernel(%arg0: i32, %arg1: memref<504x8xf32, #tpu.memory_space<vmem>>, %arg2: memref<8x48xbf16, #tpu.memory_space<vmem>>, %arg3: memref<1x48xf32, #tpu.memory_space<vmem>>, %arg4: memref<3x48x16xbf16, #tpu.memory_space<vmem>>, %arg5: memref<3x16x32xbf16, #tpu.memory_space<vmem>>, %arg6: memref<1x32xf32, #tpu.memory_space<vmem>>, %arg7: memref<3x32x64xbf16, #tpu.memory_space<vmem>>, %arg8: memref<1x64xf32, #tpu.memory_space<vmem>>, %arg9: memref<384x64xbf16, #tpu.memory_space<vmem>>, %arg10: memref<1x64xf32, #tpu.memory_space<vmem>>, %arg11: memref<64x16xbf16, #tpu.memory_space<vmem>>, %arg12: memref<1x16xf32, #tpu.memory_space<vmem>>, %arg13: memref<16x8xbf16, #tpu.memory_space<vmem>>, %arg14: memref<1x8xf32, #tpu.memory_space<vmem>>, %arg15: memref<8x8xf32, #tpu.memory_space<vmem>>, %arg16: memref<504x32xf32, #tpu.memory_space<vmem>>, %arg17: memref<168x64xf32, #tpu.memory_space<vmem>>, %arg18: memref<8x384xf32, #tpu.memory_space<vmem>>) attributes {dimension_semantics = [#tpu.dimension_semantics<parallel>], iteration_bounds = array<i64: 1>, scalar_prefetch = 0 : i64, scratch_operands = 3 : i64, tpu.core_type = #tpu.core_type<tc>, window_params = [{transform_indices = @transform_0, window_bounds = array<i64: 504, 8>}, {pipeline_mode = #tpu.pipeline_mode<synchronous>, transform_indices = @transform_1, window_bounds = array<i64: 8, 48>}, {pipeline_mode = #tpu.pipeline_mode<synchronous>, transform_indices = @transform_2, window_bounds = array<i64: 1, 48>}, {pipeline_mode = #tpu.pipeline_mode<synchronous>, transform_indices = @transform_3, window_bounds = array<i64: 3, 48, 16>}, {pipeline_mode = #tpu.pipeline_mode<synchronous>, transform_indices = @transform_4, window_bounds = array<i64: 3, 16, 32>}, {pipeline_mode = #tpu.pipeline_mode<synchronous>, transform_indices = @transform_5, window_bounds = array<i64: 1, 32>}, {pipeline_mode = #tpu.pipeline_mode<synchronous>, transform_indices = @transform_6, window_bounds = array<i64: 3, 32, 64>}, {pipeline_mode = #tpu.pipeline_mode<synchronous>, transform_indices = @transform_7, window_bounds = array<i64: 1, 64>}, {pipeline_mode = #tpu.pipeline_mode<synchronous>, transform_indices = @transform_8, window_bounds = array<i64: 384, 64>}, {pipeline_mode = #tpu.pipeline_mode<synchronous>, transform_indices = @transform_9, window_bounds = array<i64: 1, 64>}, {pipeline_mode = #tpu.pipeline_mode<synchronous>, transform_indices = @transform_10, window_bounds = array<i64: 64, 16>}, {pipeline_mode = #tpu.pipeline_mode<synchronous>, transform_indices = @transform_11, window_bounds = array<i64: 1, 16>}, {pipeline_mode = #tpu.pipeline_mode<synchronous>, transform_indices = @transform_12, window_bounds = array<i64: 16, 8>}, {pipeline_mode = #tpu.pipeline_mode<synchronous>, transform_indices = @transform_13, window_bounds = array<i64: 1, 8>}, {transform_indices = @transform_14, window_bounds = array<i64: 8, 8>}]} {
    %c0 = arith.constant 0 : index
    %c0_0 = arith.constant 0 : index
    %0 = vector.load %arg1[%c0, %c0_0] : memref<504x8xf32, #tpu.memory_space<vmem>>, vector<504x8xf32>
    %1 = arith.truncf %0 : vector<504x8xf32> to vector<504x8xbf16>
    %c0_1 = arith.constant 0 : index
    %c0_2 = arith.constant 0 : index
    %2 = vector.load %arg2[%c0_1, %c0_2] : memref<8x48xbf16, #tpu.memory_space<vmem>>, vector<8x48xbf16>
    %cst = arith.constant dense<0.000000e+00> : vector<504x48xf32>
    %3 = tpu.matmul %1, %2, %cst {dimension_numbers = #tpu.dot_dimension_numbers<[1], [0], [0], [1], [0, 0, 1, 1], [], []>} : vector<504x8xbf16>, vector<8x48xbf16>, vector<504x48xf32> -> vector<504x48xf32>
    %c0_3 = arith.constant 0 : index
    %c0_4 = arith.constant 0 : index
    %4 = vector.load %arg3[%c0_3, %c0_4] : memref<1x48xf32, #tpu.memory_space<vmem>>, vector<1x48xf32>
    %5 = vector.broadcast %4 : vector<1x48xf32> to vector<504x48xf32>
    %6 = arith.addf %3, %5 : vector<504x48xf32>
    %cst_5 = arith.constant 5.000000e-01 : f32
    %7 = vector.broadcast %cst_5 : f32 to vector<504x48xf32>
    %8 = arith.mulf %7, %6 : vector<504x48xf32>
    %cst_6 = arith.constant 0.707106769 : f32
    %9 = vector.broadcast %cst_6 : f32 to vector<504x48xf32>
    %10 = arith.mulf %6, %9 : vector<504x48xf32>
    %11 = math.erf %10 : vector<504x48xf32>
    %cst_7 = arith.constant 1.000000e+00 : f32
    %12 = vector.broadcast %cst_7 : f32 to vector<504x48xf32>
    %13 = arith.addf %12, %11 : vector<504x48xf32>
    %14 = arith.mulf %8, %13 : vector<504x48xf32>
    %15 = arith.truncf %14 : vector<504x48xf32> to vector<504x48xbf16>
    %c0_8 = arith.constant 0 : index
    %c0_9 = arith.constant 0 : index
    %c0_10 = arith.constant 0 : index
    %16 = vector.load %arg4[%c0_8, %c0_9, %c0_10] : memref<3x48x16xbf16, #tpu.memory_space<vmem>>, vector<1x48x16xbf16>
    %17 = vector.shape_cast %16 : vector<1x48x16xbf16> to vector<48x16xbf16>
    %cst_11 = arith.constant dense<0.000000e+00> : vector<504x16xf32>
    %18 = tpu.matmul %15, %17, %cst_11 {dimension_numbers = #tpu.dot_dimension_numbers<[1], [0], [0], [1], [0, 0, 1, 1], [], []>} : vector<504x48xbf16>, vector<48x16xbf16>, vector<504x16xf32> -> vector<504x16xf32>
    %c1 = arith.constant 1 : index
    %c0_12 = arith.constant 0 : index
    %c0_13 = arith.constant 0 : index
    %19 = vector.load %arg4[%c1, %c0_12, %c0_13] : memref<3x48x16xbf16, #tpu.memory_space<vmem>>, vector<1x48x16xbf16>
    %20 = vector.shape_cast %19 : vector<1x48x16xbf16> to vector<48x16xbf16>
    %cst_14 = arith.constant dense<0.000000e+00> : vector<504x16xf32>
    %21 = tpu.matmul %15, %20, %cst_14 {dimension_numbers = #tpu.dot_dimension_numbers<[1], [0], [0], [1], [0, 0, 1, 1], [], []>} : vector<504x48xbf16>, vector<48x16xbf16>, vector<504x16xf32> -> vector<504x16xf32>
    %22 = arith.maximumf %18, %21 : vector<504x16xf32>
    %c2 = arith.constant 2 : index
    %c0_15 = arith.constant 0 : index
    %c0_16 = arith.constant 0 : index
    %23 = vector.load %arg4[%c2, %c0_15, %c0_16] : memref<3x48x16xbf16, #tpu.memory_space<vmem>>, vector<1x48x16xbf16>
    %24 = vector.shape_cast %23 : vector<1x48x16xbf16> to vector<48x16xbf16>
    %cst_17 = arith.constant dense<0.000000e+00> : vector<504x16xf32>
    %25 = tpu.matmul %15, %24, %cst_17 {dimension_numbers = #tpu.dot_dimension_numbers<[1], [0], [0], [1], [0, 0, 1, 1], [], []>} : vector<504x48xbf16>, vector<48x16xbf16>, vector<504x16xf32> -> vector<504x16xf32>
    %26 = arith.maximumf %22, %25 : vector<504x16xf32>
    %27 = vector.extract_strided_slice %26 {offsets = [0, 0], sizes = [502, 16], strides = [1, 1]} : vector<504x16xf32> to vector<502x16xf32>
    %28 = arith.truncf %27 : vector<502x16xf32> to vector<502x16xbf16>
    %c0_18 = arith.constant 0 : index
    %c0_19 = arith.constant 0 : index
    %c0_20 = arith.constant 0 : index
    %29 = vector.load %arg5[%c0_18, %c0_19, %c0_20] : memref<3x16x32xbf16, #tpu.memory_space<vmem>>, vector<1x16x32xbf16>
    %30 = vector.shape_cast %29 : vector<1x16x32xbf16> to vector<16x32xbf16>
    %cst_21 = arith.constant dense<0.000000e+00> : vector<502x32xf32>
    %31 = tpu.matmul %28, %30, %cst_21 {dimension_numbers = #tpu.dot_dimension_numbers<[1], [0], [0], [1], [0, 0, 1, 1], [], []>} : vector<502x16xbf16>, vector<16x32xbf16>, vector<502x32xf32> -> vector<502x32xf32>
    %32 = vector.extract_strided_slice %26 {offsets = [1, 0], sizes = [502, 16], strides = [1, 1]} : vector<504x16xf32> to vector<502x16xf32>
    %33 = arith.truncf %32 : vector<502x16xf32> to vector<502x16xbf16>
    %c1_22 = arith.constant 1 : index
    %c0_23 = arith.constant 0 : index
    %c0_24 = arith.constant 0 : index
    %34 = vector.load %arg5[%c1_22, %c0_23, %c0_24] : memref<3x16x32xbf16, #tpu.memory_space<vmem>>, vector<1x16x32xbf16>
    %35 = vector.shape_cast %34 : vector<1x16x32xbf16> to vector<16x32xbf16>
    %cst_25 = arith.constant dense<0.000000e+00> : vector<502x32xf32>
    %36 = tpu.matmul %33, %35, %cst_25 {dimension_numbers = #tpu.dot_dimension_numbers<[1], [0], [0], [1], [0, 0, 1, 1], [], []>} : vector<502x16xbf16>, vector<16x32xbf16>, vector<502x32xf32> -> vector<502x32xf32>
    %37 = arith.addf %31, %36 : vector<502x32xf32>
    %38 = vector.extract_strided_slice %26 {offsets = [2, 0], sizes = [502, 16], strides = [1, 1]} : vector<504x16xf32> to vector<502x16xf32>
    %39 = arith.truncf %38 : vector<502x16xf32> to vector<502x16xbf16>
    %c2_26 = arith.constant 2 : index
    %c0_27 = arith.constant 0 : index
    %c0_28 = arith.constant 0 : index
    %40 = vector.load %arg5[%c2_26, %c0_27, %c0_28] : memref<3x16x32xbf16, #tpu.memory_space<vmem>>, vector<1x16x32xbf16>
    %41 = vector.shape_cast %40 : vector<1x16x32xbf16> to vector<16x32xbf16>
    %cst_29 = arith.constant dense<0.000000e+00> : vector<502x32xf32>
    %42 = tpu.matmul %39, %41, %cst_29 {dimension_numbers = #tpu.dot_dimension_numbers<[1], [0], [0], [1], [0, 0, 1, 1], [], []>} : vector<502x16xbf16>, vector<16x32xbf16>, vector<502x32xf32> -> vector<502x32xf32>
    %43 = arith.addf %37, %42 : vector<502x32xf32>
    %c0_30 = arith.constant 0 : index
    %c0_31 = arith.constant 0 : index
    %44 = vector.load %arg6[%c0_30, %c0_31] : memref<1x32xf32, #tpu.memory_space<vmem>>, vector<1x32xf32>
    %45 = vector.broadcast %44 : vector<1x32xf32> to vector<502x32xf32>
    %46 = arith.addf %43, %45 : vector<502x32xf32>
    %cst_32 = arith.constant 5.000000e-01 : f32
    %47 = vector.broadcast %cst_32 : f32 to vector<502x32xf32>
    %48 = arith.mulf %47, %46 : vector<502x32xf32>
    %cst_33 = arith.constant 0.707106769 : f32
    %49 = vector.broadcast %cst_33 : f32 to vector<502x32xf32>
    %50 = arith.mulf %46, %49 : vector<502x32xf32>
    %51 = math.erf %50 : vector<502x32xf32>
    %cst_34 = arith.constant 1.000000e+00 : f32
    %52 = vector.broadcast %cst_34 : f32 to vector<502x32xf32>
    %53 = arith.addf %52, %51 : vector<502x32xf32>
    %54 = arith.mulf %48, %53 : vector<502x32xf32>
    %c0_35 = arith.constant 0 : index
    %c0_36 = arith.constant 0 : index
    %55 = vector.load %arg16[%c0_35, %c0_36] : memref<504x32xf32, #tpu.memory_space<vmem>>, vector<502x32xf32>
    tpu.vector_store %arg16[%c0_35, %c0_36], %54 {strides = array<i32>} : memref<504x32xf32, #tpu.memory_space<vmem>>, vector<502x32xf32>,
    %cst_37 = arith.constant 0.000000e+00 : f32
    %56 = vector.broadcast %cst_37 : f32 to vector<2x32xf32>
    %c502 = arith.constant 502 : index
    %c0_38 = arith.constant 0 : index
    %57 = vector.load %arg16[%c502, %c0_38] : memref<504x32xf32, #tpu.memory_space<vmem>>, vector<2x32xf32>
    tpu.vector_store %arg16[%c502, %c0_38], %56 {strides = array<i32>} : memref<504x32xf32, #tpu.memory_space<vmem>>, vector<2x32xf32>,
    %c0_39 = arith.constant 0 : index
    %c0_40 = arith.constant 0 : index
    %58 = tpu.strided_load %arg16[%c0_39, %c0_40] {strides = array<i32: 3, 1>} : memref<504x32xf32, #tpu.memory_space<vmem>>, vector<168x32xf32>
    %c1_41 = arith.constant 1 : index
    %c0_42 = arith.constant 0 : index
    %59 = tpu.strided_load %arg16[%c1_41, %c0_42] {strides = array<i32: 3, 1>} : memref<504x32xf32, #tpu.memory_space<vmem>>, vector<168x32xf32>
    %60 = arith.maximumf %58, %59 : vector<168x32xf32>
    %c2_43 = arith.constant 2 : index
    %c0_44 = arith.constant 0 : index
    %61 = tpu.strided_load %arg16[%c2_43, %c0_44] {strides = array<i32: 3, 1>} : memref<504x32xf32, #tpu.memory_space<vmem>>, vector<168x32xf32>
    %62 = arith.maximumf %60, %61 : vector<168x32xf32>
    %63 = vector.extract_strided_slice %62 {offsets = [0, 0], sizes = [166, 32], strides = [1, 1]} : vector<168x32xf32> to vector<166x32xf32>
    %64 = arith.truncf %63 : vector<166x32xf32> to vector<166x32xbf16>
    %c0_45 = arith.constant 0 : index
    %c0_46 = arith.constant 0 : index
    %c0_47 = arith.constant 0 : index
    %65 = vector.load %arg7[%c0_45, %c0_46, %c0_47] : memref<3x32x64xbf16, #tpu.memory_space<vmem>>, vector<1x32x64xbf16>
    %66 = vector.shape_cast %65 : vector<1x32x64xbf16> to vector<32x64xbf16>
    %cst_48 = arith.constant dense<0.000000e+00> : vector<166x64xf32>
    %67 = tpu.matmul %64, %66, %cst_48 {dimension_numbers = #tpu.dot_dimension_numbers<[1], [0], [0], [1], [0, 0, 1, 1], [], []>} : vector<166x32xbf16>, vector<32x64xbf16>, vector<166x64xf32> -> vector<166x64xf32>
    %68 = vector.extract_strided_slice %62 {offsets = [1, 0], sizes = [166, 32], strides = [1, 1]} : vector<168x32xf32> to vector<166x32xf32>
    %69 = arith.truncf %68 : vector<166x32xf32> to vector<166x32xbf16>
    %c1_49 = arith.constant 1 : index
    %c0_50 = arith.constant 0 : index
    %c0_51 = arith.constant 0 : index
    %70 = vector.load %arg7[%c1_49, %c0_50, %c0_51] : memref<3x32x64xbf16, #tpu.memory_space<vmem>>, vector<1x32x64xbf16>
    %71 = vector.shape_cast %70 : vector<1x32x64xbf16> to vector<32x64xbf16>
    %cst_52 = arith.constant dense<0.000000e+00> : vector<166x64xf32>
    %72 = tpu.matmul %69, %71, %cst_52 {dimension_numbers = #tpu.dot_dimension_numbers<[1], [0], [0], [1], [0, 0, 1, 1], [], []>} : vector<166x32xbf16>, vector<32x64xbf16>, vector<166x64xf32> -> vector<166x64xf32>
    %73 = arith.addf %67, %72 : vector<166x64xf32>
    %74 = vector.extract_strided_slice %62 {offsets = [2, 0], sizes = [166, 32], strides = [1, 1]} : vector<168x32xf32> to vector<166x32xf32>
    %75 = arith.truncf %74 : vector<166x32xf32> to vector<166x32xbf16>
    %c2_53 = arith.constant 2 : index
    %c0_54 = arith.constant 0 : index
    %c0_55 = arith.constant 0 : index
    %76 = vector.load %arg7[%c2_53, %c0_54, %c0_55] : memref<3x32x64xbf16, #tpu.memory_space<vmem>>, vector<1x32x64xbf16>
    %77 = vector.shape_cast %76 : vector<1x32x64xbf16> to vector<32x64xbf16>
    %cst_56 = arith.constant dense<0.000000e+00> : vector<166x64xf32>
    %78 = tpu.matmul %75, %77, %cst_56 {dimension_numbers = #tpu.dot_dimension_numbers<[1], [0], [0], [1], [0, 0, 1, 1], [], []>} : vector<166x32xbf16>, vector<32x64xbf16>, vector<166x64xf32> -> vector<166x64xf32>
    %79 = arith.addf %73, %78 : vector<166x64xf32>
    %c0_57 = arith.constant 0 : index
    %c0_58 = arith.constant 0 : index
    %80 = vector.load %arg8[%c0_57, %c0_58] : memref<1x64xf32, #tpu.memory_space<vmem>>, vector<1x64xf32>
    %81 = vector.broadcast %80 : vector<1x64xf32> to vector<166x64xf32>
    %82 = arith.addf %79, %81 : vector<166x64xf32>
    %cst_59 = arith.constant 5.000000e-01 : f32
    %83 = vector.broadcast %cst_59 : f32 to vector<166x64xf32>
    %84 = arith.mulf %83, %82 : vector<166x64xf32>
    %cst_60 = arith.constant 0.707106769 : f32
    %85 = vector.broadcast %cst_60 : f32 to vector<166x64xf32>
    %86 = arith.mulf %82, %85 : vector<166x64xf32>
    %87 = math.erf %86 : vector<166x64xf32>
    %cst_61 = arith.constant 1.000000e+00 : f32
    %88 = vector.broadcast %cst_61 : f32 to vector<166x64xf32>
    %89 = arith.addf %88, %87 : vector<166x64xf32>
    %90 = arith.mulf %84, %89 : vector<166x64xf32>
    %c0_62 = arith.constant 0 : index
    %c0_63 = arith.constant 0 : index
    %91 = vector.load %arg17[%c0_62, %c0_63] : memref<168x64xf32, #tpu.memory_space<vmem>>, vector<166x64xf32>
    tpu.vector_store %arg17[%c0_62, %c0_63], %90 {strides = array<i32>} : memref<168x64xf32, #tpu.memory_space<vmem>>, vector<166x64xf32>,
    %cst_64 = arith.constant 0.000000e+00 : f32
    %92 = vector.broadcast %cst_64 : f32 to vector<2x64xf32>
    %c166 = arith.constant 166 : index
    %c0_65 = arith.constant 0 : index
    %93 = vector.load %arg17[%c166, %c0_65] : memref<168x64xf32, #tpu.memory_space<vmem>>, vector<2x64xf32>
    tpu.vector_store %arg17[%c166, %c0_65], %92 {strides = array<i32>} : memref<168x64xf32, #tpu.memory_space<vmem>>, vector<2x64xf32>,
    %c0_66 = arith.constant 0 : index
    %c0_67 = arith.constant 0 : index
    %94 = tpu.strided_load %arg17[%c0_66, %c0_67] {strides = array<i32: 21, 1>} : memref<168x64xf32, #tpu.memory_space<vmem>>, vector<8x64xf32>
    %c1_68 = arith.constant 1 : index
    %c0_69 = arith.constant 0 : index
    %95 = tpu.strided_load %arg17[%c1_68, %c0_69] {strides = array<i32: 21, 1>} : memref<168x64xf32, #tpu.memory_space<vmem>>, vector<8x64xf32>
    %96 = arith.maximumf %94, %95 : vector<8x64xf32>
    %c2_70 = arith.constant 2 : index
    %c0_71 = arith.constant 0 : index
    %97 = tpu.strided_load %arg17[%c2_70, %c0_71] {strides = array<i32: 21, 1>} : memref<168x64xf32, #tpu.memory_space<vmem>>, vector<8x64xf32>
    %98 = arith.maximumf %96, %97 : vector<8x64xf32>
    %c0_72 = arith.constant 0 : index
    %c0_73 = arith.constant 0 : index
    %99 = vector.load %arg18[%c0_72, %c0_73] : memref<8x384xf32, #tpu.memory_space<vmem>>, vector<8x64xf32>
    tpu.vector_store %arg18[%c0_72, %c0_73], %98 {strides = array<i32>} : memref<8x384xf32, #tpu.memory_space<vmem>>, vector<8x64xf32>,
    %c3 = arith.constant 3 : index
    %c0_74 = arith.constant 0 : index
    %100 = tpu.strided_load %arg17[%c3, %c0_74] {strides = array<i32: 21, 1>} : memref<168x64xf32, #tpu.memory_space<vmem>>, vector<8x64xf32>
    %c4 = arith.constant 4 : index
    %c0_75 = arith.constant 0 : index
    %101 = tpu.strided_load %arg17[%c4, %c0_75] {strides = array<i32: 21, 1>} : memref<168x64xf32, #tpu.memory_space<vmem>>, vector<8x64xf32>
    %102 = arith.maximumf %100, %101 : vector<8x64xf32>
    %c5 = arith.constant 5 : index
    %c0_76 = arith.constant 0 : index
    %103 = tpu.strided_load %arg17[%c5, %c0_76] {strides = array<i32: 21, 1>} : memref<168x64xf32, #tpu.memory_space<vmem>>, vector<8x64xf32>
    %104 = arith.maximumf %102, %103 : vector<8x64xf32>
    %c0_77 = arith.constant 0 : index
    %c64 = arith.constant 64 : index
    %105 = vector.load %arg18[%c0_77, %c64] : memref<8x384xf32, #tpu.memory_space<vmem>>, vector<8x64xf32>
    tpu.vector_store %arg18[%c0_77, %c64], %104 {strides = array<i32>} : memref<8x384xf32, #tpu.memory_space<vmem>>, vector<8x64xf32>,
    %c6 = arith.constant 6 : index
    %c0_78 = arith.constant 0 : index
    %106 = tpu.strided_load %arg17[%c6, %c0_78] {strides = array<i32: 21, 1>} : memref<168x64xf32, #tpu.memory_space<vmem>>, vector<8x64xf32>
    %c7 = arith.constant 7 : index
    %c0_79 = arith.constant 0 : index
    %107 = tpu.strided_load %arg17[%c7, %c0_79] {strides = array<i32: 21, 1>} : memref<168x64xf32, #tpu.memory_space<vmem>>, vector<8x64xf32>
    %108 = arith.maximumf %106, %107 : vector<8x64xf32>
    %c8 = arith.constant 8 : index
    %c0_80 = arith.constant 0 : index
    %109 = tpu.strided_load %arg17[%c8, %c0_80] {strides = array<i32: 21, 1>} : memref<168x64xf32, #tpu.memory_space<vmem>>, vector<8x64xf32>
    %110 = arith.maximumf %108, %109 : vector<8x64xf32>
    %c0_81 = arith.constant 0 : index
    %c128 = arith.constant 128 : index
    %111 = vector.load %arg18[%c0_81, %c128] : memref<8x384xf32, #tpu.memory_space<vmem>>, vector<8x64xf32>
    tpu.vector_store %arg18[%c0_81, %c128], %110 {strides = array<i32>} : memref<8x384xf32, #tpu.memory_space<vmem>>, vector<8x64xf32>,
    %c9 = arith.constant 9 : index
    %c0_82 = arith.constant 0 : index
    %112 = tpu.strided_load %arg17[%c9, %c0_82] {strides = array<i32: 21, 1>} : memref<168x64xf32, #tpu.memory_space<vmem>>, vector<8x64xf32>
    %c10 = arith.constant 10 : index
    %c0_83 = arith.constant 0 : index
    %113 = tpu.strided_load %arg17[%c10, %c0_83] {strides = array<i32: 21, 1>} : memref<168x64xf32, #tpu.memory_space<vmem>>, vector<8x64xf32>
    %114 = arith.maximumf %112, %113 : vector<8x64xf32>
    %c11 = arith.constant 11 : index
    %c0_84 = arith.constant 0 : index
    %115 = tpu.strided_load %arg17[%c11, %c0_84] {strides = array<i32: 21, 1>} : memref<168x64xf32, #tpu.memory_space<vmem>>, vector<8x64xf32>
    %116 = arith.maximumf %114, %115 : vector<8x64xf32>
    %c0_85 = arith.constant 0 : index
    %c192 = arith.constant 192 : index
    %117 = vector.load %arg18[%c0_85, %c192] : memref<8x384xf32, #tpu.memory_space<vmem>>, vector<8x64xf32>
    tpu.vector_store %arg18[%c0_85, %c192], %116 {strides = array<i32>} : memref<8x384xf32, #tpu.memory_space<vmem>>, vector<8x64xf32>,
    %c12 = arith.constant 12 : index
    %c0_86 = arith.constant 0 : index
    %118 = tpu.strided_load %arg17[%c12, %c0_86] {strides = array<i32: 21, 1>} : memref<168x64xf32, #tpu.memory_space<vmem>>, vector<8x64xf32>
    %c13 = arith.constant 13 : index
    %c0_87 = arith.constant 0 : index
    %119 = tpu.strided_load %arg17[%c13, %c0_87] {strides = array<i32: 21, 1>} : memref<168x64xf32, #tpu.memory_space<vmem>>, vector<8x64xf32>
    %120 = arith.maximumf %118, %119 : vector<8x64xf32>
    %c14 = arith.constant 14 : index
    %c0_88 = arith.constant 0 : index
    %121 = tpu.strided_load %arg17[%c14, %c0_88] {strides = array<i32: 21, 1>} : memref<168x64xf32, #tpu.memory_space<vmem>>, vector<8x64xf32>
    %122 = arith.maximumf %120, %121 : vector<8x64xf32>
    %c0_89 = arith.constant 0 : index
    %c256 = arith.constant 256 : index
    %123 = vector.load %arg18[%c0_89, %c256] : memref<8x384xf32, #tpu.memory_space<vmem>>, vector<8x64xf32>
    tpu.vector_store %arg18[%c0_89, %c256], %122 {strides = array<i32>} : memref<8x384xf32, #tpu.memory_space<vmem>>, vector<8x64xf32>,
    %c15 = arith.constant 15 : index
    %c0_90 = arith.constant 0 : index
    %124 = tpu.strided_load %arg17[%c15, %c0_90] {strides = array<i32: 21, 1>} : memref<168x64xf32, #tpu.memory_space<vmem>>, vector<8x64xf32>
    %c16 = arith.constant 16 : index
    %c0_91 = arith.constant 0 : index
    %125 = tpu.strided_load %arg17[%c16, %c0_91] {strides = array<i32: 21, 1>} : memref<168x64xf32, #tpu.memory_space<vmem>>, vector<8x64xf32>
    %126 = arith.maximumf %124, %125 : vector<8x64xf32>
    %c17 = arith.constant 17 : index
    %c0_92 = arith.constant 0 : index
    %127 = tpu.strided_load %arg17[%c17, %c0_92] {strides = array<i32: 21, 1>} : memref<168x64xf32, #tpu.memory_space<vmem>>, vector<8x64xf32>
    %128 = arith.maximumf %126, %127 : vector<8x64xf32>
    %c0_93 = arith.constant 0 : index
    %c320 = arith.constant 320 : index
    %129 = vector.load %arg18[%c0_93, %c320] : memref<8x384xf32, #tpu.memory_space<vmem>>, vector<8x64xf32>
    tpu.vector_store %arg18[%c0_93, %c320], %128 {strides = array<i32>} : memref<8x384xf32, #tpu.memory_space<vmem>>, vector<8x64xf32>,
    %c0_94 = arith.constant 0 : index
    %c0_95 = arith.constant 0 : index
    %130 = vector.load %arg18[%c0_94, %c0_95] : memref<8x384xf32, #tpu.memory_space<vmem>>, vector<8x384xf32>
    %131 = arith.truncf %130 : vector<8x384xf32> to vector<8x384xbf16>
    %c0_96 = arith.constant 0 : index
    %c0_97 = arith.constant 0 : index
    %132 = vector.load %arg9[%c0_96, %c0_97] : memref<384x64xbf16, #tpu.memory_space<vmem>>, vector<384x64xbf16>
    %cst_98 = arith.constant dense<0.000000e+00> : vector<8x64xf32>
    %133 = tpu.matmul %131, %132, %cst_98 {dimension_numbers = #tpu.dot_dimension_numbers<[1], [0], [0], [1], [0, 0, 1, 1], [], []>} : vector<8x384xbf16>, vector<384x64xbf16>, vector<8x64xf32> -> vector<8x64xf32>
    %c0_99 = arith.constant 0 : index
    %c0_100 = arith.constant 0 : index
    %134 = vector.load %arg10[%c0_99, %c0_100] : memref<1x64xf32, #tpu.memory_space<vmem>>, vector<1x64xf32>
    %135 = vector.broadcast %134 : vector<1x64xf32> to vector<8x64xf32>
    %136 = arith.addf %133, %135 : vector<8x64xf32>
    %cst_101 = arith.constant 5.000000e-01 : f32
    %137 = vector.broadcast %cst_101 : f32 to vector<8x64xf32>
    %138 = arith.mulf %137, %136 : vector<8x64xf32>
    %cst_102 = arith.constant 0.707106769 : f32
    %139 = vector.broadcast %cst_102 : f32 to vector<8x64xf32>
    %140 = arith.mulf %136, %139 : vector<8x64xf32>
    %141 = math.erf %140 : vector<8x64xf32>
    %cst_103 = arith.constant 1.000000e+00 : f32
    %142 = vector.broadcast %cst_103 : f32 to vector<8x64xf32>
    %143 = arith.addf %142, %141 : vector<8x64xf32>
    %144 = arith.mulf %138, %143 : vector<8x64xf32>
    %145 = arith.truncf %144 : vector<8x64xf32> to vector<8x64xbf16>
    %c0_104 = arith.constant 0 : index
    %c0_105 = arith.constant 0 : index
    %146 = vector.load %arg11[%c0_104, %c0_105] : memref<64x16xbf16, #tpu.memory_space<vmem>>, vector<64x16xbf16>
    %cst_106 = arith.constant dense<0.000000e+00> : vector<8x16xf32>
    %147 = tpu.matmul %145, %146, %cst_106 {dimension_numbers = #tpu.dot_dimension_numbers<[1], [0], [0], [1], [0, 0, 1, 1], [], []>} : vector<8x64xbf16>, vector<64x16xbf16>, vector<8x16xf32> -> vector<8x16xf32>
    %c0_107 = arith.constant 0 : index
    %c0_108 = arith.constant 0 : index
    %148 = vector.load %arg12[%c0_107, %c0_108] : memref<1x16xf32, #tpu.memory_space<vmem>>, vector<1x16xf32>
    %149 = vector.broadcast %148 : vector<1x16xf32> to vector<8x16xf32>
    %150 = arith.addf %147, %149 : vector<8x16xf32>
    %cst_109 = arith.constant 5.000000e-01 : f32
    %151 = vector.broadcast %cst_109 : f32 to vector<8x16xf32>
    %152 = arith.mulf %151, %150 : vector<8x16xf32>
    %cst_110 = arith.constant 0.707106769 : f32
    %153 = vector.broadcast %cst_110 : f32 to vector<8x16xf32>
    %154 = arith.mulf %150, %153 : vector<8x16xf32>
    %155 = math.erf %154 : vector<8x16xf32>
    %cst_111 = arith.constant 1.000000e+00 : f32
    %156 = vector.broadcast %cst_111 : f32 to vector<8x16xf32>
    %157 = arith.addf %156, %155 : vector<8x16xf32>
    %158 = arith.mulf %152, %157 : vector<8x16xf32>
    %159 = arith.truncf %158 : vector<8x16xf32> to vector<8x16xbf16>
    %c0_112 = arith.constant 0 : index
    %c0_113 = arith.constant 0 : index
    %160 = vector.load %arg13[%c0_112, %c0_113] : memref<16x8xbf16, #tpu.memory_space<vmem>>, vector<16x8xbf16>
    %cst_114 = arith.constant dense<0.000000e+00> : vector<8x8xf32>
    %161 = tpu.matmul %159, %160, %cst_114 {dimension_numbers = #tpu.dot_dimension_numbers<[1], [0], [0], [1], [0, 0, 1, 1], [], []>} : vector<8x16xbf16>, vector<16x8xbf16>, vector<8x8xf32> -> vector<8x8xf32>
    %c0_115 = arith.constant 0 : index
    %c0_116 = arith.constant 0 : index
    %162 = vector.load %arg14[%c0_115, %c0_116] : memref<1x8xf32, #tpu.memory_space<vmem>>, vector<1x8xf32>
    %163 = vector.broadcast %162 : vector<1x8xf32> to vector<8x8xf32>
    %164 = arith.addf %161, %163 : vector<8x8xf32>
    %c0_117 = arith.constant 0 : index
    %c0_118 = arith.constant 0 : index
    %165 = vector.load %arg15[%c0_117, %c0_118] : memref<8x8xf32, #tpu.memory_space<vmem>>, vector<8x8xf32>
    tpu.vector_store %arg15[%c0_117, %c0_118], %164 {strides = array<i32>} : memref<8x8xf32, #tpu.memory_space<vmem>>, vector<8x8xf32>,
    return
  }
  func.func @transform_0(%arg0: i32) -> (i32, i32) {
    %c0_i32 = arith.constant 0 : i32
    %c0_i32_0 = arith.constant 0 : i32
    return %arg0, %c0_i32 : i32, i32
  }
  func.func @transform_1(%arg0: i32) -> (i32, i32) {
    %c0_i32 = arith.constant 0 : i32
    %c0_i32_0 = arith.constant 0 : i32
    %c0_i32_1 = arith.constant 0 : i32
    return %c0_i32, %c0_i32_0 : i32, i32
  }
  func.func @transform_2(%arg0: i32) -> (i32, i32) {
    %c0_i32 = arith.constant 0 : i32
    %c0_i32_0 = arith.constant 0 : i32
    %c0_i32_1 = arith.constant 0 : i32
    return %c0_i32, %c0_i32_0 : i32, i32
  }
  func.func @transform_3(%arg0: i32) -> (i32, i32, i32) {
    %c0_i32 = arith.constant 0 : i32
    %c0_i32_0 = arith.constant 0 : i32
    %c0_i32_1 = arith.constant 0 : i32
    %c0_i32_2 = arith.constant 0 : i32
    return %c0_i32, %c0_i32_0, %c0_i32_1 : i32, i32, i32
  }
  func.func @transform_4(%arg0: i32) -> (i32, i32, i32) {
    %c0_i32 = arith.constant 0 : i32
    %c0_i32_0 = arith.constant 0 : i32
    %c0_i32_1 = arith.constant 0 : i32
    %c0_i32_2 = arith.constant 0 : i32
    return %c0_i32, %c0_i32_0, %c0_i32_1 : i32, i32, i32
  }
  func.func @transform_5(%arg0: i32) -> (i32, i32) {
    %c0_i32 = arith.constant 0 : i32
    %c0_i32_0 = arith.constant 0 : i32
    %c0_i32_1 = arith.constant 0 : i32
    return %c0_i32, %c0_i32_0 : i32, i32
  }
  func.func @transform_6(%arg0: i32) -> (i32, i32, i32) {
    %c0_i32 = arith.constant 0 : i32
    %c0_i32_0 = arith.constant 0 : i32
    %c0_i32_1 = arith.constant 0 : i32
    %c0_i32_2 = arith.constant 0 : i32
    return %c0_i32, %c0_i32_0, %c0_i32_1 : i32, i32, i32
  }
  func.func @transform_7(%arg0: i32) -> (i32, i32) {
    %c0_i32 = arith.constant 0 : i32
    %c0_i32_0 = arith.constant 0 : i32
    %c0_i32_1 = arith.constant 0 : i32
    return %c0_i32, %c0_i32_0 : i32, i32
  }
  func.func @transform_8(%arg0: i32) -> (i32, i32) {
    %c0_i32 = arith.constant 0 : i32
    %c0_i32_0 = arith.constant 0 : i32
    %c0_i32_1 = arith.constant 0 : i32
    return %c0_i32, %c0_i32_0 : i32, i32
  }
  func.func @transform_9(%arg0: i32) -> (i32, i32) {
    %c0_i32 = arith.constant 0 : i32
    %c0_i32_0 = arith.constant 0 : i32
    %c0_i32_1 = arith.constant 0 : i32
    return %c0_i32, %c0_i32_0 : i32, i32
  }
  func.func @transform_10(%arg0: i32) -> (i32, i32) {
    %c0_i32 = arith.constant 0 : i32
    %c0_i32_0 = arith.constant 0 : i32
    %c0_i32_1 = arith.constant 0 : i32
    return %c0_i32, %c0_i32_0 : i32, i32
  }
  func.func @transform_11(%arg0: i32) -> (i32, i32) {
    %c0_i32 = arith.constant 0 : i32
    %c0_i32_0 = arith.constant 0 : i32
    %c0_i32_1 = arith.constant 0 : i32
    return %c0_i32, %c0_i32_0 : i32, i32
  }
  func.func @transform_12(%arg0: i32) -> (i32, i32) {
    %c0_i32 = arith.constant 0 : i32
    %c0_i32_0 = arith.constant 0 : i32
    %c0_i32_1 = arith.constant 0 : i32
    return %c0_i32, %c0_i32_0 : i32, i32
  }
  func.func @transform_13(%arg0: i32) -> (i32, i32) {
    %c0_i32 = arith.constant 0 : i32
    %c0_i32_0 = arith.constant 0 : i32
    %c0_i32_1 = arith.constant 0 : i32
    return %c0_i32, %c0_i32_0 : i32, i32
  }
  func.func @transform_14(%arg0: i32) -> (i32, i32) {
    %c0_i32 = arith.constant 0 : i32
    %c0_i32_0 = arith.constant 0 : i32
    return %arg0, %c0_i32 : i32, i32
  }
}

</mosaic_0001>

<llo_original>
// kernel: tpu_custom_call.1
$region0: #{tpu_custom_call.1}
  #allocation0 [shape = 'u32[]', space=smem, size = 0x4, offset = 0x4, fixed_abs, tag = 'smem constant byte address 0x4 - core index']
  #allocation1 [shape = 'u32[144,128]{1,0:T(1,128)}', space=vmem, size = 0x12000, scoped, tag = 'internal scratch']
  #allocation2 [shape = 'f32[504,32]{1,0:T(8,128)}', space=vmem, size = 0x3f000, scoped, tag = 'scratch operand']
  #allocation3 [shape = 'f32[168,64]{1,0:T(8,128)}', space=vmem, size = 0x15000, scoped, tag = 'scratch operand']
  #allocation4 [shape = 'f32[8,384]{1,0:T(8,128)}', space=vmem, size = 0x3000, scoped, tag = 'scratch operand']
  %s0 = inlined_call_operand.vmem [shape: f32[504,8], index: 0, kind: input, shape index: {}]
  %s1 = inlined_call_operand.vmem [shape: bf16[8,48], index: 1, kind: input, shape index: {}]
  %s2 = inlined_call_operand.vmem [shape: f32[1,48], index: 2, kind: input, shape index: {}]
  %s3 = inlined_call_operand.vmem [shape: bf16[3,48,16], index: 3, kind: input, shape index: {}]
  %s4 = inlined_call_operand.vmem [shape: bf16[3,16,32], index: 4, kind: input, shape index: {}]
  %s5 = inlined_call_operand.vmem [shape: f32[1,32], index: 5, kind: input, shape index: {}]
  %s6 = inlined_call_operand.vmem [shape: bf16[3,32,64], index: 6, kind: input, shape index: {}]
  %s7 = inlined_call_operand.vmem [shape: f32[1,64], index: 7, kind: input, shape index: {}]
  %s8 = inlined_call_operand.vmem [shape: bf16[384,64], index: 8, kind: input, shape index: {}]
  %s9 = inlined_call_operand.vmem [shape: f32[1,64], index: 9, kind: input, shape index: {}]
  %s10 = inlined_call_operand.vmem [shape: bf16[64,16], index: 10, kind: input, shape index: {}]
  %s11 = inlined_call_operand.vmem [shape: f32[1,16], index: 11, kind: input, shape index: {}]
  %s12 = inlined_call_operand.vmem [shape: bf16[16,8], index: 12, kind: input, shape index: {}]
  %s13 = inlined_call_operand.vmem [shape: f32[1,8], index: 13, kind: input, shape index: {}]
  %s14 = inlined_call_operand.hbm [shape: f32[8,8], index: 14, kind: output, shape index: {}]
  %s15 = sld [smem:[#allocation0]]
  $region66: #{tpu_custom_call.1} parent=0
    _
  %s17 = ssub.s32 1, %s15
  %s18 = scalar_select 0, %s17, %s15
  $region1: #{tpu_custom_call.1} parent=0
    #allocation5 [shape = 'u8[4096]{0}', space=vmem, size = 0x1000, scoped, tag = 'output window, operand 0, single buffered']
    #allocation6 [shape = 's32[1]{0}', space=sflag, size = 0x4, scoped, tag = 'scoped memory for tpu_custom_call.1']
    %19 = vsyncpa [#allocation6], 0
    // Predicated region
    $region2: #{tpu_custom_call.1} parent=1 // pred_check
      _
    $region3: #{tpu_custom_call.1} parent=1 // pred_check_branch
      %21 = sbr.rel (0) target = $region5
    $region4: #{tpu_custom_call.1} parent=1 // pred_region
      _
    $region5: #{tpu_custom_call.1} parent=1 // pred_fallthru
      _
    // Predicated region
    $region6: #{tpu_custom_call.1} parent=1 // pred_check
      _
    $region7: #{tpu_custom_call.1} parent=1 // pred_check_branch
      %23 = sbr.rel (0) target = $region9
    $region8: #{tpu_custom_call.1} parent=1 // pred_region
      _
    $region9: #{tpu_custom_call.1} parent=1 // pred_fallthru
      _
    // Predicated region
    $region10: #{tpu_custom_call.1} parent=1 // pred_check
      _
    $region11: #{tpu_custom_call.1} parent=1 // pred_check_branch
      %25 = sbr.rel (0) target = $region13
    $region12: #{tpu_custom_call.1} parent=1 // pred_region
      _
    $region13: #{tpu_custom_call.1} parent=1 // pred_fallthru
      _
    // Predicated region
    $region14: #{tpu_custom_call.1} parent=1 // pred_check
      _
    $region15: #{tpu_custom_call.1} parent=1 // pred_check_branch
      %27 = sbr.rel (0) target = $region17
    $region16: #{tpu_custom_call.1} parent=1 // pred_region
      _
    $region17: #{tpu_custom_call.1} parent=1 // pred_fallthru
      _
    // Predicated region
    $region18: #{tpu_custom_call.1} parent=1 // pred_check
      _
    $region19: #{tpu_custom_call.1} parent=1 // pred_check_branch
      %29 = sbr.rel (0) target = $region21
    $region20: #{tpu_custom_call.1} parent=1 // pred_region
      _
    $region21: #{tpu_custom_call.1} parent=1 // pred_fallthru
      _
    // Predicated region
    $region22: #{tpu_custom_call.1} parent=1 // pred_check
      _
    $region23: #{tpu_custom_call.1} parent=1 // pred_check_branch
      %31 = sbr.rel (0) target = $region25
    $region24: #{tpu_custom_call.1} parent=1 // pred_region
      _
    $region25: #{tpu_custom_call.1} parent=1 // pred_fallthru
      _
    // Predicated region
    $region26: #{tpu_custom_call.1} parent=1 // pred_check
      _
    $region27: #{tpu_custom_call.1} parent=1 // pred_check_branch
      %33 = sbr.rel (0) target = $region29
    $region28: #{tpu_custom_call.1} parent=1 // pred_region
      _
    $region29: #{tpu_custom_call.1} parent=1 // pred_fallthru
      _
    // Predicated region
    $region30: #{tpu_custom_call.1} parent=1 // pred_check
      _
    $region31: #{tpu_custom_call.1} parent=1 // pred_check_branch
      %35 = sbr.rel (0) target = $region33
    $region32: #{tpu_custom_call.1} parent=1 // pred_region
      _
    $region33: #{tpu_custom_call.1} parent=1 // pred_fallthru
      _
    // Predicated region
    $region34: #{tpu_custom_call.1} parent=1 // pred_check
      _
    $region35: #{tpu_custom_call.1} parent=1 // pred_check_branch
      %37 = sbr.rel (0) target = $region37
    $region36: #{tpu_custom_call.1} parent=1 // pred_region
      _
    $region37: #{tpu_custom_call.1} parent=1 // pred_fallthru
      _
    // Predicated region
    $region38: #{tpu_custom_call.1} parent=1 // pred_check
      _
    $region39: #{tpu_custom_call.1} parent=1 // pred_check_branch
      %39 = sbr.rel (0) target = $region41
    $region40: #{tpu_custom_call.1} parent=1 // pred_region
      _
    $region41: #{tpu_custom_call.1} parent=1 // pred_fallthru
      _
    // Predicated region
    $region42: #{tpu_custom_call.1} parent=1 // pred_check
      _
    $region43: #{tpu_custom_call.1} parent=1 // pred_check_branch
      %41 = sbr.rel (0) target = $region45
    $region44: #{tpu_custom_call.1} parent=1 // pred_region
      _
    $region45: #{tpu_custom_call.1} parent=1 // pred_fallthru
      _
    // Predicated region
    $region46: #{tpu_custom_call.1} parent=1 // pred_check
      _
    $region47: #{tpu_custom_call.1} parent=1 // pred_check_branch
      %43 = sbr.rel (0) target = $region49
    $region48: #{tpu_custom_call.1} parent=1 // pred_region
      _
    $region49: #{tpu_custom_call.1} parent=1 // pred_fallthru
      _
    // Predicated region
    $region50: #{tpu_custom_call.1} parent=1 // pred_check
      _
    $region51: #{tpu_custom_call.1} parent=1 // pred_check_branch
      %45 = sbr.rel (0) target = $region53
    $region52: #{tpu_custom_call.1} parent=1 // pred_region
      _
    $region53: #{tpu_custom_call.1} parent=1 // pred_fallthru
      _
    // Predicated region
    $region54: #{tpu_custom_call.1} parent=1 // pred_check
      _
    $region55: #{tpu_custom_call.1} parent=1 // pred_check_branch
      %47 = sbr.rel (0) target = $region57
    $region56: #{tpu_custom_call.1} parent=1 // pred_region
      _
    $region57: #{tpu_custom_call.1} parent=1 // pred_fallthru
      _
    %v49 = vld [vmem:[%s0] sm:$0xff]
    %v50 = vld [vmem:[%s0 + $0x8] sm:$0xff]
    %v51 = vld [vmem:[%s0 + $0x10] sm:$0xff]
    %v52 = vld [vmem:[%s0 + $0x18] sm:$0xff]
    %v53 = vld [vmem:[%s0 + $0x20] sm:$0xff]
    %v54 = vld [vmem:[%s0 + $0x28] sm:$0xff]
    %v55 = vld [vmem:[%s0 + $0x30] sm:$0xff]
    %v56 = vld [vmem:[%s0 + $0x38] sm:$0xff]
    %v57 = vld [vmem:[%s0 + $0x40] sm:$0xff]
    %v58 = vld [vmem:[%s0 + $0x48] sm:$0xff]
    %v59 = vld [vmem:[%s0 + $0x50] sm:$0xff]
    %v60 = vld [vmem:[%s0 + $0x58] sm:$0xff]
    %v61 = vld [vmem:[%s0 + $0x60] sm:$0xff]
    %v62 = vld [vmem:[%s0 + $0x68] sm:$0xff]
    %v63 = vld [vmem:[%s0 + $0x70] sm:$0xff]
    %v64 = vld [vmem:[%s0 + $0x78] sm:$0xff]
    %v65 = vld [vmem:[%s0 + $0x80] sm:$0xff]
    %v66 = vld [vmem:[%s0 + $0x88] sm:$0xff]
    %v67 = vld [vmem:[%s0 + $0x90] sm:$0xff]
    %v68 = vld [vmem:[%s0 + $0x98] sm:$0xff]
    %v69 = vld [vmem:[%s0 + $0xa0] sm:$0xff]
    %v70 = vld [vmem:[%s0 + $0xa8] sm:$0xff]
    %v71 = vld [vmem:[%s0 + $0xb0] sm:$0xff]
    %v72 = vld [vmem:[%s0 + $0xb8] sm:$0xff]
    %v73 = vld [vmem:[%s0 + $0xc0] sm:$0xff]
    %v74 = vld [vmem:[%s0 + $0xc8] sm:$0xff]
    %v75 = vld [vmem:[%s0 + $0xd0] sm:$0xff]
    %v76 = vld [vmem:[%s0 + $0xd8] sm:$0xff]
    %v77 = vld [vmem:[%s0 + $0xe0] sm:$0xff]
    %v78 = vld [vmem:[%s0 + $0xe8] sm:$0xff]
    %v79 = vld [vmem:[%s0 + $0xf0] sm:$0xff]
    %v80 = vld [vmem:[%s0 + $0xf8] sm:$0xff]
    %v81 = vld [vmem:[%s0 + $0x100] sm:$0xff]
    %v82 = vld [vmem:[%s0 + $0x108] sm:$0xff]
    %v83 = vld [vmem:[%s0 + $0x110] sm:$0xff]
    %v84 = vld [vmem:[%s0 + $0x118] sm:$0xff]
    %v85 = vld [vmem:[%s0 + $0x120] sm:$0xff]
    %v86 = vld [vmem:[%s0 + $0x128] sm:$0xff]
    %v87 = vld [vmem:[%s0 + $0x130] sm:$0xff]
    %v88 = vld [vmem:[%s0 + $0x138] sm:$0xff]
    %v89 = vld [vmem:[%s0 + $0x140] sm:$0xff]
    %v90 = vld [vmem:[%s0 + $0x148] sm:$0xff]
    %v91 = vld [vmem:[%s0 + $0x150] sm:$0xff]
    %v92 = vld [vmem:[%s0 + $0x158] sm:$0xff]
    %v93 = vld [vmem:[%s0 + $0x160] sm:$0xff]
    %v94 = vld [vmem:[%s0 + $0x168] sm:$0xff]
    %v95 = vld [vmem:[%s0 + $0x170] sm:$0xff]
    %v96 = vld [vmem:[%s0 + $0x178] sm:$0xff]
    %v97 = vld [vmem:[%s0 + $0x180] sm:$0xff]
    %v98 = vld [vmem:[%s0 + $0x188] sm:$0xff]
    %v99 = vld [vmem:[%s0 + $0x190] sm:$0xff]
    %v100 = vld [vmem:[%s0 + $0x198] sm:$0xff]
    %v101 = vld [vmem:[%s0 + $0x1a0] sm:$0xff]
    %v102 = vld [vmem:[%s0 + $0x1a8] sm:$0xff]
    %v103 = vld [vmem:[%s0 + $0x1b0] sm:$0xff]
    %v104 = vld [vmem:[%s0 + $0x1b8] sm:$0xff]
    %v105 = vld [vmem:[%s0 + $0x1c0] sm:$0xff]
    %v106 = vld [vmem:[%s0 + $0x1c8] sm:$0xff]
    %v107 = vld [vmem:[%s0 + $0x1d0] sm:$0xff]
    %v108 = vld [vmem:[%s0 + $0x1d8] sm:$0xff]
    %v109 = vld [vmem:[%s0 + $0x1e0] sm:$0xff]
    %v110 = vld [vmem:[%s0 + $0x1e8] sm:$0xff]
    %v111 = vld [vmem:[%s0 + $0x1f0] sm:$0xff]
    %v112 = vpack.c.bf16 %v50, %v49
    %v113 = vpack.c.bf16 %v52, %v51
    %v114 = vpack.c.bf16 %v54, %v53
    %v115 = vpack.c.bf16 %v56, %v55
    %v116 = vpack.c.bf16 %v58, %v57
    %v117 = vpack.c.bf16 %v60, %v59
    %v118 = vpack.c.bf16 %v62, %v61
    %v119 = vpack.c.bf16 %v64, %v63
    %v120 = vpack.c.bf16 %v66, %v65
    %v121 = vpack.c.bf16 %v68, %v67
    %v122 = vpack.c.bf16 %v70, %v69
    %v123 = vpack.c.bf16 %v72, %v71
    %v124 = vpack.c.bf16 %v74, %v73
    %v125 = vpack.c.bf16 %v76, %v75
    %v126 = vpack.c.bf16 %v78, %v77
    %v127 = vpack.c.bf16 %v80, %v79
    %v128 = vpack.c.bf16 %v82, %v81
    %v129 = vpack.c.bf16 %v84, %v83
    %v130 = vpack.c.bf16 %v86, %v85
    %v131 = vpack.c.bf16 %v88, %v87
    %v132 = vpack.c.bf16 %v90, %v89
    %v133 = vpack.c.bf16 %v92, %v91
    %v134 = vpack.c.bf16 %v94, %v93
    %v135 = vpack.c.bf16 %v96, %v95
    %v136 = vpack.c.bf16 %v98, %v97
    %v137 = vpack.c.bf16 %v100, %v99
    %v138 = vpack.c.bf16 %v102, %v101
    %v139 = vpack.c.bf16 %v104, %v103
    %v140 = vpack.c.bf16 %v106, %v105
    %v141 = vpack.c.bf16 %v108, %v107
    %v142 = vpack.c.bf16 %v110, %v109
    %v143 = vpack.c.bf16 %v111, %v111
    %v144 = vld [vmem:[%s1] sm:$0xf]
    %v145 = vld [vmem:[%s2] sm:$0x1]
    %v147 = vlaneseq
    %v148 = vshrl.u32 %v147, 7
    %v149 = vsub.s32 0, %v148
    %v150 = vrot.slane %v145, %v149
    %vm152 = vcmask 64512
    %v154 = vsel %vm152, %v112, 0
    %v157 = vsel %vm152, %v113, 0
    %v160 = vsel %vm152, %v114, 0
    %v163 = vsel %vm152, %v115, 0
    %v166 = vsel %vm152, %v116, 0
    %v169 = vsel %vm152, %v117, 0
    %v172 = vsel %vm152, %v118, 0
    %v175 = vsel %vm152, %v119, 0
    %v178 = vsel %vm152, %v120, 0
    %v181 = vsel %vm152, %v121, 0
    %v184 = vsel %vm152, %v122, 0
    %v187 = vsel %vm152, %v123, 0
    %v190 = vsel %vm152, %v124, 0
    %v193 = vsel %vm152, %v125, 0
    %v196 = vsel %vm152, %v126, 0
    %v199 = vsel %vm152, %v127, 0
    %v202 = vsel %vm152, %v128, 0
    %v205 = vsel %vm152, %v129, 0
    %v208 = vsel %vm152, %v130, 0
    %v211 = vsel %vm152, %v131, 0
    %v214 = vsel %vm152, %v132, 0
    %v217 = vsel %vm152, %v133, 0
    %v220 = vsel %vm152, %v134, 0
    %v223 = vsel %vm152, %v135, 0
    %v226 = vsel %vm152, %v136, 0
    %v229 = vsel %vm152, %v137, 0
    %v232 = vsel %vm152, %v138, 0
    %v235 = vsel %vm152, %v139, 0
    %v238 = vsel %vm152, %v140, 0
    %v241 = vsel %vm152, %v141, 0
    %v244 = vsel %vm152, %v142, 0
    %v247 = vsel %vm152, %v143, 0
    %vm249 = vcmask 1043456
    %v251 = vsel %vm249, %v144, 0
    %253 = vmatprep.subr.bf16.mxu0 0
    %254 = vmatpush1.bf16.msra.mxu0 0
    %255 = vmatprep.subr.bf16.mxu0 0
    %256 = vmatpush1.bf16.msra.mxu0 0
    %257 = vmatprep.subr.bf16.mxu0 0
    %258 = vmatpush1.bf16.msra.mxu0 0
    %259 = vmatprep.subr.bf16.mxu0 0
    %260 = vmatpush1.bf16.msra.mxu0 0
    %261 = vmatprep.subr.bf16.mxu0 0
    %262 = vmatpush1.bf16.msra.mxu0 0
    %263 = vmatprep.subr.bf16.mxu0 0
    %264 = vmatpush1.bf16.msra.mxu0 0
    %265 = vmatprep.subr.bf16.mxu0 0
    %266 = vmatpush1.bf16.msra.mxu0 0
    %267 = vmatprep.subr.bf16.mxu0 0
    %268 = vmatpush1.bf16.msra.mxu0 %v251
    %269 = vmatprep.subr.bf16.mxu0 0
    %270 = vmatpush2.bf16.msra.mxu0 0
    %271 = vmatprep.subr.bf16.mxu0 0
    %272 = vmatpush2.bf16.msra.mxu0 0
    %273 = vmatprep.subr.bf16.mxu0 0
    %274 = vmatpush2.bf16.msra.mxu0 0
    %275 = vmatprep.subr.bf16.mxu0 0
    %276 = vmatpush2.bf16.msra.mxu0 0
    %277 = vmatprep.subr.bf16.mxu0 0
    %278 = vmatpush2.bf16.msra.mxu0 0
    %279 = vmatprep.subr.bf16.mxu0 0
    %280 = vmatpush2.bf16.msra.mxu0 0
    %281 = vmatprep.subr.bf16.mxu0 0
    %282 = vmatpush2.bf16.msra.mxu0 0
    %283 = vmatprep.subr.bf16.mxu0 0
    %284 = vmatpush2.bf16.msra.mxu0 0
    %285 = vmatprep.mubr.bf16.mxu0 0
    %286 = vmatmul.mubr.bf16.gmra.mxu0 %v154
    %v287 = vpop.f32.mrf.mxu0
    %v288 = vadd.f32 %v150, %v287
    %v289 = vpop.f32.mrf.mxu0
    %v290 = vpop.f32.mrf.mxu0
    %v291 = vadd.f32 %v150, %v290
    %v292 = vpop.f32.mrf.mxu0
    %293 = vmatprep.mubr.bf16.mxu0 0
    %294 = vmatmul.mubr.bf16.gmra.mxu0 %v157
    %v295 = vpop.f32.mrf.mxu0
    %v296 = vadd.f32 %v150, %v295
    %v297 = vpop.f32.mrf.mxu0
    %v298 = vpop.f32.mrf.mxu0
    %v299 = vadd.f32 %v150, %v298
    %v300 = vpop.f32.mrf.mxu0
    %301 = vmatprep.mubr.bf16.mxu0 0
    %302 = vmatmul.mubr.bf16.gmra.mxu0 %v160
    %v303 = vpop.f32.mrf.mxu0
    %v304 = vadd.f32 %v150, %v303
    %v305 = vpop.f32.mrf.mxu0
    %v306 = vpop.f32.mrf.mxu0
    %v307 = vadd.f32 %v150, %v306
    %v308 = vpop.f32.mrf.mxu0
    %309 = vmatprep.mubr.bf16.mxu0 0
    %310 = vmatmul.mubr.bf16.gmra.mxu0 %v163
    %v311 = vpop.f32.mrf.mxu0
    %v312 = vadd.f32 %v150, %v311
    %v313 = vpop.f32.mrf.mxu0
    %v314 = vpop.f32.mrf.mxu0
    %v315 = vadd.f32 %v150, %v314
    %v316 = vpop.f32.mrf.mxu0
    %317 = vmatprep.mubr.bf16.mxu0 0
    %318 = vmatmul.mubr.bf16.gmra.mxu0 %v166
    %v319 = vpop.f32.mrf.mxu0
    %v320 = vadd.f32 %v150, %v319
    %v321 = vpop.f32.mrf.mxu0
    %v322 = vpop.f32.mrf.mxu0
    %v323 = vadd.f32 %v150, %v322
    %v324 = vpop.f32.mrf.mxu0
    %325 = vmatprep.mubr.bf16.mxu0 0
    %326 = vmatmul.mubr.bf16.gmra.mxu0 %v169
    %v327 = vpop.f32.mrf.mxu0
    %v328 = vadd.f32 %v150, %v327
    %v329 = vpop.f32.mrf.mxu0
    %v330 = vpop.f32.mrf.mxu0
    %v331 = vadd.f32 %v150, %v330
    %v332 = vpop.f32.mrf.mxu0
    %333 = vmatprep.mubr.bf16.mxu0 0
    %334 = vmatmul.mubr.bf16.gmra.mxu0 %v172
    %v335 = vpop.f32.mrf.mxu0
    %v336 = vadd.f32 %v150, %v335
    %v337 = vpop.f32.mrf.mxu0
    %v338 = vpop.f32.mrf.mxu0
    %v339 = vadd.f32 %v150, %v338
    %v340 = vpop.f32.mrf.mxu0
    %341 = vmatprep.mubr.bf16.mxu0 0
    %342 = vmatmul.mubr.bf16.gmra.mxu0 %v175
    %v343 = vpop.f32.mrf.mxu0
    %v344 = vadd.f32 %v150, %v343
    %v345 = vpop.f32.mrf.mxu0
    %v346 = vpop.f32.mrf.mxu0
    %v347 = vadd.f32 %v150, %v346
    %v348 = vpop.f32.mrf.mxu0
    %349 = vmatprep.mubr.bf16.mxu0 0
    %350 = vmatmul.mubr.bf16.gmra.mxu0 %v178
    %v351 = vpop.f32.mrf.mxu0
    %v352 = vadd.f32 %v150, %v351
    %v353 = vpop.f32.mrf.mxu0
    %v354 = vpop.f32.mrf.mxu0
    %v355 = vadd.f32 %v150, %v354
    %v356 = vpop.f32.mrf.mxu0
    %357 = vmatprep.mubr.bf16.mxu0 0
    %358 = vmatmul.mubr.bf16.gmra.mxu0 %v181
    %v359 = vpop.f32.mrf.mxu0
    %v360 = vadd.f32 %v150, %v359
    %v361 = vpop.f32.mrf.mxu0
    %v362 = vpop.f32.mrf.mxu0
    %v363 = vadd.f32 %v150, %v362
    %v364 = vpop.f32.mrf.mxu0
    %365 = vmatprep.mubr.bf16.mxu0 0
    %366 = vmatmul.mubr.bf16.gmra.mxu0 %v184
    %v367 = vpop.f32.mrf.mxu0
    %v368 = vadd.f32 %v150, %v367
    %v369 = vpop.f32.mrf.mxu0
    %v370 = vpop.f32.mrf.mxu0
    %v371 = vadd.f32 %v150, %v370
    %v372 = vpop.f32.mrf.mxu0
    %373 = vmatprep.mubr.bf16.mxu0 0
    %374 = vmatmul.mubr.bf16.gmra.mxu0 %v187
    %v375 = vpop.f32.mrf.mxu0
    %v376 = vadd.f32 %v150, %v375
    %v377 = vpop.f32.mrf.mxu0
    %v378 = vpop.f32.mrf.mxu0
    %v379 = vadd.f32 %v150, %v378
    %v380 = vpop.f32.mrf.mxu0
    %381 = vmatprep.mubr.bf16.mxu0 0
    %382 = vmatmul.mubr.bf16.gmra.mxu0 %v190
    %v383 = vpop.f32.mrf.mxu0
    %v384 = vadd.f32 %v150, %v383
    %v385 = vpop.f32.mrf.mxu0
    %v386 = vpop.f32.mrf.mxu0
    %v387 = vadd.f32 %v150, %v386
    %v388 = vpop.f32.mrf.mxu0
    %389 = vmatprep.mubr.bf16.mxu0 0
    %390 = vmatmul.mubr.bf16.gmra.mxu0 %v193
    %v391 = vpop.f32.mrf.mxu0
    %v392 = vadd.f32 %v150, %v391
    %v393 = vpop.f32.mrf.mxu0
    %v394 = vpop.f32.mrf.mxu0
    %v395 = vadd.f32 %v150, %v394
    %v396 = vpop.f32.mrf.mxu0
    %397 = vmatprep.mubr.bf16.mxu0 0
    %398 = vmatmul.mubr.bf16.gmra.mxu0 %v196
    %v399 = vpop.f32.mrf.mxu0
    %v400 = vadd.f32 %v150, %v399
    %v401 = vpop.f32.mrf.mxu0
    %v402 = vpop.f32.mrf.mxu0
    %v403 = vadd.f32 %v150, %v402
    %v404 = vpop.f32.mrf.mxu0
    %405 = vmatprep.mubr.bf16.mxu0 0
    %406 = vmatmul.mubr.bf16.gmra.mxu0 %v199
    %v407 = vpop.f32.mrf.mxu0
    %v408 = vadd.f32 %v150, %v407
    %v409 = vpop.f32.mrf.mxu0
    %v410 = vpop.f32.mrf.mxu0
    %v411 = vadd.f32 %v150, %v410
    %v412 = vpop.f32.mrf.mxu0
    %413 = vmatprep.mubr.bf16.mxu0 0
    %414 = vmatmul.mubr.bf16.gmra.mxu0 %v202
    %v415 = vpop.f32.mrf.mxu0
    %v416 = vadd.f32 %v150, %v415
    %v417 = vpop.f32.mrf.mxu0
    %v418 = vpop.f32.mrf.mxu0
    %v419 = vadd.f32 %v150, %v418
    %v420 = vpop.f32.mrf.mxu0
    %421 = vmatprep.mubr.bf16.mxu0 0
    %422 = vmatmul.mubr.bf16.gmra.mxu0 %v205
    %v423 = vpop.f32.mrf.mxu0
    %v424 = vadd.f32 %v150, %v423
    %v425 = vpop.f32.mrf.mxu0
    %v426 = vpop.f32.mrf.mxu0
    %v427 = vadd.f32 %v150, %v426
    %v428 = vpop.f32.mrf.mxu0
    %429 = vmatprep.mubr.bf16.mxu0 0
    %430 = vmatmul.mubr.bf16.gmra.mxu0 %v208
    %v431 = vpop.f32.mrf.mxu0
    %v432 = vadd.f32 %v150, %v431
    %v433 = vpop.f32.mrf.mxu0
    %v434 = vpop.f32.mrf.mxu0
    %v435 = vadd.f32 %v150, %v434
    %v436 = vpop.f32.mrf.mxu0
    %437 = vmatprep.mubr.bf16.mxu0 0
    %438 = vmatmul.mubr.bf16.gmra.mxu0 %v211
    %v439 = vpop.f32.mrf.mxu0
    %v440 = vadd.f32 %v150, %v439
    %v441 = vpop.f32.mrf.mxu0
    %v442 = vpop.f32.mrf.mxu0
    %v443 = vadd.f32 %v150, %v442
    %v444 = vpop.f32.mrf.mxu0
    %445 = vmatprep.mubr.bf16.mxu0 0
    %446 = vmatmul.mubr.bf16.gmra.mxu0 %v214
    %v447 = vpop.f32.mrf.mxu0
    %v448 = vadd.f32 %v150, %v447
    %v449 = vpop.f32.mrf.mxu0
    %v450 = vpop.f32.mrf.mxu0
    %v451 = vadd.f32 %v150, %v450
    %v452 = vpop.f32.mrf.mxu0
    %453 = vmatprep.mubr.bf16.mxu0 0
    %454 = vmatmul.mubr.bf16.gmra.mxu0 %v217
    %v455 = vpop.f32.mrf.mxu0
    %v456 = vadd.f32 %v150, %v455
    %v457 = vpop.f32.mrf.mxu0
    %v458 = vpop.f32.mrf.mxu0
    %v459 = vadd.f32 %v150, %v458
    %v460 = vpop.f32.mrf.mxu0
    %461 = vmatprep.mubr.bf16.mxu0 0
    %462 = vmatmul.mubr.bf16.gmra.mxu0 %v220
    %v463 = vpop.f32.mrf.mxu0
    %v464 = vadd.f32 %v150, %v463
    %v465 = vpop.f32.mrf.mxu0
    %v466 = vpop.f32.mrf.mxu0
    %v467 = vadd.f32 %v150, %v466
    %v468 = vpop.f32.mrf.mxu0
    %469 = vmatprep.mubr.bf16.mxu0 0
    %470 = vmatmul.mubr.bf16.gmra.mxu0 %v223
    %v471 = vpop.f32.mrf.mxu0
    %v472 = vadd.f32 %v150, %v471
    %v473 = vpop.f32.mrf.mxu0
    %v474 = vpop.f32.mrf.mxu0
    %v475 = vadd.f32 %v150, %v474
    %v476 = vpop.f32.mrf.mxu0
    %477 = vmatprep.mubr.bf16.mxu0 0
    %478 = vmatmul.mubr.bf16.gmra.mxu0 %v226
    %v479 = vpop.f32.mrf.mxu0
    %v480 = vadd.f32 %v150, %v479
    %v481 = vpop.f32.mrf.mxu0
    %v482 = vpop.f32.mrf.mxu0
    %v483 = vadd.f32 %v150, %v482
    %v484 = vpop.f32.mrf.mxu0
    %485 = vmatprep.mubr.bf16.mxu0 0
    %486 = vmatmul.mubr.bf16.gmra.mxu0 %v229
    %v487 = vpop.f32.mrf.mxu0
    %v488 = vadd.f32 %v150, %v487
    %v489 = vpop.f32.mrf.mxu0
    %v490 = vpop.f32.mrf.mxu0
    %v491 = vadd.f32 %v150, %v490
    %v492 = vpop.f32.mrf.mxu0
    %493 = vmatprep.mubr.bf16.mxu0 0
    %494 = vmatmul.mubr.bf16.gmra.mxu0 %v232
    %v495 = vpop.f32.mrf.mxu0
    %v496 = vadd.f32 %v150, %v495
    %v497 = vpop.f32.mrf.mxu0
    %v498 = vpop.f32.mrf.mxu0
    %v499 = vadd.f32 %v150, %v498
    %v500 = vpop.f32.mrf.mxu0
    %501 = vmatprep.mubr.bf16.mxu0 0
    %502 = vmatmul.mubr.bf16.gmra.mxu0 %v235
    %v503 = vpop.f32.mrf.mxu0
    %v504 = vadd.f32 %v150, %v503
    %v505 = vpop.f32.mrf.mxu0
    %v506 = vpop.f32.mrf.mxu0
    %v507 = vadd.f32 %v150, %v506
    %v508 = vpop.f32.mrf.mxu0
    %509 = vmatprep.mubr.bf16.mxu0 0
    %510 = vmatmul.mubr.bf16.gmra.mxu0 %v238
    %v511 = vpop.f32.mrf.mxu0
    %v512 = vadd.f32 %v150, %v511
    %v513 = vpop.f32.mrf.mxu0
    %v514 = vpop.f32.mrf.mxu0
    %v515 = vadd.f32 %v150, %v514
    %v516 = vpop.f32.mrf.mxu0
    %517 = vmatprep.mubr.bf16.mxu0 0
    %518 = vmatmul.mubr.bf16.gmra.mxu0 %v241
    %v519 = vpop.f32.mrf.mxu0
    %v520 = vadd.f32 %v150, %v519
    %v521 = vpop.f32.mrf.mxu0
    %v522 = vpop.f32.mrf.mxu0
    %v523 = vadd.f32 %v150, %v522
    %v524 = vpop.f32.mrf.mxu0
    %525 = vmatprep.mubr.bf16.mxu0 0
    %526 = vmatmul.mubr.bf16.gmra.mxu0 %v244
    %v527 = vpop.f32.mrf.mxu0
    %v528 = vadd.f32 %v150, %v527
    %v529 = vpop.f32.mrf.mxu0
    %v530 = vpop.f32.mrf.mxu0
    %v531 = vadd.f32 %v150, %v530
    %v532 = vpop.f32.mrf.mxu0
    %533 = vmatprep.mubr.bf16.mxu0 0
    %534 = vmatmul.mubr.bf16.gmra.mxu0 %v247
    %v535 = vpop.f32.mrf.mxu0
    %v536 = vadd.f32 %v150, %v535
    %v537 = vpop.f32.mrf.mxu0
    %v538 = vpop.f32.mrf.mxu0
    %v539 = vpop.f32.mrf.mxu0
    %540 = vdwg.mxu0
    %v541 = vmul.f32 %v288, 0.5
    %v542 = vmul.f32 %v291, 0.5
    %v543 = vmul.f32 %v296, 0.5
    %v544 = vmul.f32 %v299, 0.5
    %v545 = vmul.f32 %v304, 0.5
    %v546 = vmul.f32 %v307, 0.5
    %v547 = vmul.f32 %v312, 0.5
    %v548 = vmul.f32 %v315, 0.5
    %v549 = vmul.f32 %v320, 0.5
    %v550 = vmul.f32 %v323, 0.5
    %v551 = vmul.f32 %v328, 0.5
    %v552 = vmul.f32 %v331, 0.5
    %v553 = vmul.f32 %v336, 0.5
    %v554 = vmul.f32 %v339, 0.5
    %v555 = vmul.f32 %v344, 0.5
    %v556 = vmul.f32 %v347, 0.5
    %v557 = vmul.f32 %v352, 0.5
    %v558 = vmul.f32 %v355, 0.5
    %v559 = vmul.f32 %v360, 0.5
    %v560 = vmul.f32 %v363, 0.5
    %v561 = vmul.f32 %v368, 0.5
    %v562 = vmul.f32 %v371, 0.5
    %v563 = vmul.f32 %v376, 0.5
    %v564 = vmul.f32 %v379, 0.5
    %v565 = vmul.f32 %v384, 0.5
    %v566 = vmul.f32 %v387, 0.5
    %v567 = vmul.f32 %v392, 0.5
    %v568 = vmul.f32 %v395, 0.5
    %v569 = vmul.f32 %v400, 0.5
    %v570 = vmul.f32 %v403, 0.5
    %v571 = vmul.f32 %v408, 0.5
    %v572 = vmul.f32 %v411, 0.5
    %v573 = vmul.f32 %v416, 0.5
    %v574 = vmul.f32 %v419, 0.5
    %v575 = vmul.f32 %v424, 0.5
    %v576 = vmul.f32 %v427, 0.5
    %v577 = vmul.f32 %v432, 0.5
    %v578 = vmul.f32 %v435, 0.5
    %v579 = vmul.f32 %v440, 0.5
    %v580 = vmul.f32 %v443, 0.5
    %v581 = vmul.f32 %v448, 0.5
    %v582 = vmul.f32 %v451, 0.5
    %v583 = vmul.f32 %v456, 0.5
    %v584 = vmul.f32 %v459, 0.5
    %v585 = vmul.f32 %v464, 0.5
    %v586 = vmul.f32 %v467, 0.5
    %v587 = vmul.f32 %v472, 0.5
    %v588 = vmul.f32 %v475, 0.5
    %v589 = vmul.f32 %v480, 0.5
    %v590 = vmul.f32 %v483, 0.5
    %v591 = vmul.f32 %v488, 0.5
    %v592 = vmul.f32 %v491, 0.5
    %v593 = vmul.f32 %v496, 0.5
    %v594 = vmul.f32 %v499, 0.5
    %v595 = vmul.f32 %v504, 0.5
    %v596 = vmul.f32 %v507, 0.5
    %v597 = vmul.f32 %v512, 0.5
    %v598 = vmul.f32 %v515, 0.5
    %v599 = vmul.f32 %v520, 0.5
    %v600 = vmul.f32 %v523, 0.5
    %v601 = vmul.f32 %v528, 0.5
    %v602 = vmul.f32 %v531, 0.5
    %v603 = vmul.f32 %v536, 0.5
    %v604 = vmul.f32 %v288, 0.70710677
    %v605 = vmul.f32 %v291, 0.70710677
    %v606 = vmul.f32 %v296, 0.70710677
    %v607 = vmul.f32 %v299, 0.70710677
    %v608 = vmul.f32 %v304, 0.70710677
    %v609 = vmul.f32 %v307, 0.70710677
    %v610 = vmul.f32 %v312, 0.70710677
    %v611 = vmul.f32 %v315, 0.70710677
    %v612 = vmul.f32 %v320, 0.70710677
    %v613 = vmul.f32 %v323, 0.70710677
    %v614 = vmul.f32 %v328, 0.70710677
    %v615 = vmul.f32 %v331, 0.70710677
    %v616 = vmul.f32 %v336, 0.70710677
    %v617 = vmul.f32 %v339, 0.70710677
    %v618 = vmul.f32 %v344, 0.70710677
    %v619 = vmul.f32 %v347, 0.70710677
    %v620 = vmul.f32 %v352, 0.70710677
    %v621 = vmul.f32 %v355, 0.70710677
    %v622 = vmul.f32 %v360, 0.70710677
    %v623 = vmul.f32 %v363, 0.70710677
    %v624 = vmul.f32 %v368, 0.70710677
    %v625 = vmul.f32 %v371, 0.70710677
    %v626 = vmul.f32 %v376, 0.70710677
    %v627 = vmul.f32 %v379, 0.70710677
    %v628 = vmul.f32 %v384, 0.70710677
    %v629 = vmul.f32 %v387, 0.70710677
    %v630 = vmul.f32 %v392, 0.70710677
    %v631 = vmul.f32 %v395, 0.70710677
    %v632 = vmul.f32 %v400, 0.70710677
    %v633 = vmul.f32 %v403, 0.70710677
    %v634 = vmul.f32 %v408, 0.70710677
    %v635 = vmul.f32 %v411, 0.70710677
    %v636 = vmul.f32 %v416, 0.70710677
    %v637 = vmul.f32 %v419, 0.70710677
    %v638 = vmul.f32 %v424, 0.70710677
    %v639 = vmul.f32 %v427, 0.70710677
    %v640 = vmul.f32 %v432, 0.70710677
    %v641 = vmul.f32 %v435, 0.70710677
    %v642 = vmul.f32 %v440, 0.70710677
    %v643 = vmul.f32 %v443, 0.70710677
    %v644 = vmul.f32 %v448, 0.70710677
    %v645 = vmul.f32 %v451, 0.70710677
    %v646 = vmul.f32 %v456, 0.70710677
    %v647 = vmul.f32 %v459, 0.70710677
    %v648 = vmul.f32 %v464, 0.70710677
    %v649 = vmul.f32 %v467, 0.70710677
    %v650 = vmul.f32 %v472, 0.70710677
    %v651 = vmul.f32 %v475, 0.70710677
    %v652 = vmul.f32 %v480, 0.70710677
    %v653 = vmul.f32 %v483, 0.70710677
    %v654 = vmul.f32 %v488, 0.70710677
    %v655 = vmul.f32 %v491, 0.70710677
    %v656 = vmul.f32 %v496, 0.70710677
    %v657 = vmul.f32 %v499, 0.70710677
    %v658 = vmul.f32 %v504, 0.70710677
    %v659 = vmul.f32 %v507, 0.70710677
    %v660 = vmul.f32 %v512, 0.70710677
    %v661 = vmul.f32 %v515, 0.70710677
    %v662 = vmul.f32 %v520, 0.70710677
    %v663 = vmul.f32 %v523, 0.70710677
    %v664 = vmul.f32 %v528, 0.70710677
    %v665 = vmul.f32 %v531, 0.70710677
    %v666 = vmul.f32 %v536, 0.70710677
    %v667 = verf.f32.pop %v604
    %v668 = verf.f32.pop %v605
    %v669 = verf.f32.pop %v606
    %v670 = verf.f32.pop %v607
    %v671 = verf.f32.pop %v608
    %v672 = verf.f32.pop %v609
    %v673 = verf.f32.pop %v610
    %v674 = verf.f32.pop %v611
    %v675 = verf.f32.pop %v612
    %v676 = verf.f32.pop %v613
    %v677 = verf.f32.pop %v614
    %v678 = verf.f32.pop %v615
    %v679 = verf.f32.pop %v616
    %v680 = verf.f32.pop %v617
    %v681 = verf.f32.pop %v618
    %v682 = verf.f32.pop %v619
    %v683 = verf.f32.pop %v620
    %v684 = verf.f32.pop %v621
    %v685 = verf.f32.pop %v622
    %v686 = verf.f32.pop %v623
    %v687 = verf.f32.pop %v624
    %v688 = verf.f32.pop %v625
    %v689 = verf.f32.pop %v626
    %v690 = verf.f32.pop %v627
    %v691 = verf.f32.pop %v628
    %v692 = verf.f32.pop %v629
    %v693 = verf.f32.pop %v630
    %v694 = verf.f32.pop %v631
    %v695 = verf.f32.pop %v632
    %v696 = verf.f32.pop %v633
    %v697 = verf.f32.pop %v634
    %v698 = verf.f32.pop %v635
    %v699 = verf.f32.pop %v636
    %v700 = verf.f32.pop %v637
    %v701 = verf.f32.pop %v638
    %v702 = verf.f32.pop %v639
    %v703 = verf.f32.pop %v640
    %v704 = verf.f32.pop %v641
    %v705 = verf.f32.pop %v642
    %v706 = verf.f32.pop %v643
    %v707 = verf.f32.pop %v644
    %v708 = verf.f32.pop %v645
    %v709 = verf.f32.pop %v646
    %v710 = verf.f32.pop %v647
    %v711 = verf.f32.pop %v648
    %v712 = verf.f32.pop %v649
    %v713 = verf.f32.pop %v650
    %v714 = verf.f32.pop %v651
    %v715 = verf.f32.pop %v652
    %v716 = verf.f32.pop %v653
    %v717 = verf.f32.pop %v654
    %v718 = verf.f32.pop %v655
    %v719 = verf.f32.pop %v656
    %v720 = verf.f32.pop %v657
    %v721 = verf.f32.pop %v658
    %v722 = verf.f32.pop %v659
    %v723 = verf.f32.pop %v660
    %v724 = verf.f32.pop %v661
    %v725 = verf.f32.pop %v662
    %v726 = verf.f32.pop %v663
    %v727 = verf.f32.pop %v664
    %v728 = verf.f32.pop %v665
    %v729 = verf.f32.pop %v666
    %v730 = vadd.f32 %v667, 1.0
    %v731 = vadd.f32 %v668, 1.0
    %v732 = vadd.f32 %v669, 1.0
    %v733 = vadd.f32 %v670, 1.0
    %v734 = vadd.f32 %v671, 1.0
    %v735 = vadd.f32 %v672, 1.0
    %v736 = vadd.f32 %v673, 1.0
    %v737 = vadd.f32 %v674, 1.0
    %v738 = vadd.f32 %v675, 1.0
    %v739 = vadd.f32 %v676, 1.0
    %v740 = vadd.f32 %v677, 1.0
    %v741 = vadd.f32 %v678, 1.0
    %v742 = vadd.f32 %v679, 1.0
    %v743 = vadd.f32 %v680, 1.0
    %v744 = vadd.f32 %v681, 1.0
    %v745 = vadd.f32 %v682, 1.0
    %v746 = vadd.f32 %v683, 1.0
    %v747 = vadd.f32 %v684, 1.0
    %v748 = vadd.f32 %v685, 1.0
    %v749 = vadd.f32 %v686, 1.0
    %v750 = vadd.f32 %v687, 1.0
    %v751 = vadd.f32 %v688, 1.0
    %v752 = vadd.f32 %v689, 1.0
    %v753 = vadd.f32 %v690, 1.0
    %v754 = vadd.f32 %v691, 1.0
    %v755 = vadd.f32 %v692, 1.0
    %v756 = vadd.f32 %v693, 1.0
    %v757 = vadd.f32 %v694, 1.0
    %v758 = vadd.f32 %v695, 1.0
    %v759 = vadd.f32 %v696, 1.0
    %v760 = vadd.f32 %v697, 1.0
    %v761 = vadd.f32 %v698, 1.0
    %v762 = vadd.f32 %v699, 1.0
    %v763 = vadd.f32 %v700, 1.0
    %v764 = vadd.f32 %v701, 1.0
    %v765 = vadd.f32 %v702, 1.0
    %v766 = vadd.f32 %v703, 1.0
    %v767 = vadd.f32 %v704, 1.0
    %v768 = vadd.f32 %v705, 1.0
    %v769 = vadd.f32 %v706, 1.0
    %v770 = vadd.f32 %v707, 1.0
    %v771 = vadd.f32 %v708, 1.0
    %v772 = vadd.f32 %v709, 1.0
    %v773 = vadd.f32 %v710, 1.0
    %v774 = vadd.f32 %v711, 1.0
    %v775 = vadd.f32 %v712, 1.0
    %v776 = vadd.f32 %v713, 1.0
    %v777 = vadd.f32 %v714, 1.0
    %v778 = vadd.f32 %v715, 1.0
    %v779 = vadd.f32 %v716, 1.0
    %v780 = vadd.f32 %v717, 1.0
    %v781 = vadd.f32 %v718, 1.0
    %v782 = vadd.f32 %v719, 1.0
    %v783 = vadd.f32 %v720, 1.0
    %v784 = vadd.f32 %v721, 1.0
    %v785 = vadd.f32 %v722, 1.0
    %v786 = vadd.f32 %v723, 1.0
    %v787 = vadd.f32 %v724, 1.0
    %v788 = vadd.f32 %v725, 1.0
    %v789 = vadd.f32 %v726, 1.0
    %v790 = vadd.f32 %v727, 1.0
    %v791 = vadd.f32 %v728, 1.0
    %v792 = vadd.f32 %v729, 1.0
    %v793 = vmul.f32 %v541, %v730
    %v794 = vmul.f32 %v542, %v731
    %v795 = vmul.f32 %v543, %v732
    %v796 = vmul.f32 %v544, %v733
    %v797 = vmul.f32 %v545, %v734
    %v798 = vmul.f32 %v546, %v735
    %v799 = vmul.f32 %v547, %v736
    %v800 = vmul.f32 %v548, %v737
    %v801 = vmul.f32 %v549, %v738
    %v802 = vmul.f32 %v550, %v739
    %v803 = vmul.f32 %v551, %v740
    %v804 = vmul.f32 %v552, %v741
    %v805 = vmul.f32 %v553, %v742
    %v806 = vmul.f32 %v554, %v743
    %v807 = vmul.f32 %v555, %v744
    %v808 = vmul.f32 %v556, %v745
    %v809 = vmul.f32 %v557, %v746
    %v810 = vmul.f32 %v558, %v747
    %v811 = vmul.f32 %v559, %v748
    %v812 = vmul.f32 %v560, %v749
    %v813 = vmul.f32 %v561, %v750
    %v814 = vmul.f32 %v562, %v751
    %v815 = vmul.f32 %v563, %v752
    %v816 = vmul.f32 %v564, %v753
    %v817 = vmul.f32 %v565, %v754
    %v818 = vmul.f32 %v566, %v755
    %v819 = vmul.f32 %v567, %v756
    %v820 = vmul.f32 %v568, %v757
    %v821 = vmul.f32 %v569, %v758
    %v822 = vmul.f32 %v570, %v759
    %v823 = vmul.f32 %v571, %v760
    %v824 = vmul.f32 %v572, %v761
    %v825 = vmul.f32 %v573, %v762
    %v826 = vmul.f32 %v574, %v763
    %v827 = vmul.f32 %v575, %v764
    %v828 = vmul.f32 %v576, %v765
    %v829 = vmul.f32 %v577, %v766
    %v830 = vmul.f32 %v578, %v767
    %v831 = vmul.f32 %v579, %v768
    %v832 = vmul.f32 %v580, %v769
    %v833 = vmul.f32 %v581, %v770
    %v834 = vmul.f32 %v582, %v771
    %v835 = vmul.f32 %v583, %v772
    %v836 = vmul.f32 %v584, %v773
    %v837 = vmul.f32 %v585, %v774
    %v838 = vmul.f32 %v586, %v775
    %v839 = vmul.f32 %v587, %v776
    %v840 = vmul.f32 %v588, %v777
    %v841 = vmul.f32 %v589, %v778
    %v842 = vmul.f32 %v590, %v779
    %v843 = vmul.f32 %v591, %v780
    %v844 = vmul.f32 %v592, %v781
    %v845 = vmul.f32 %v593, %v782
    %v846 = vmul.f32 %v594, %v783
    %v847 = vmul.f32 %v595, %v784
    %v848 = vmul.f32 %v596, %v785
    %v849 = vmul.f32 %v597, %v786
    %v850 = vmul.f32 %v598, %v787
    %v851 = vmul.f32 %v599, %v788
    %v852 = vmul.f32 %v600, %v789
    %v853 = vmul.f32 %v601, %v790
    %v854 = vmul.f32 %v602, %v791
    %v855 = vmul.f32 %v603, %v792
    %v856 = vpack.c.bf16 %v794, %v793
    %v857 = vpack.c.bf16 %v796, %v795
    %v858 = vpack.c.bf16 %v798, %v797
    %v859 = vpack.c.bf16 %v800, %v799
    %v860 = vpack.c.bf16 %v802, %v801
    %v861 = vpack.c.bf16 %v804, %v803
    %v862 = vpack.c.bf16 %v806, %v805
    %v863 = vpack.c.bf16 %v808, %v807
    %v864 = vpack.c.bf16 %v810, %v809
    %v865 = vpack.c.bf16 %v812, %v811
    %v866 = vpack.c.bf16 %v814, %v813
    %v867 = vpack.c.bf16 %v816, %v815
    %v868 = vpack.c.bf16 %v818, %v817
    %v869 = vpack.c.bf16 %v820, %v819
    %v870 = vpack.c.bf16 %v822, %v821
    %v871 = vpack.c.bf16 %v824, %v823
    %v872 = vpack.c.bf16 %v826, %v825
    %v873 = vpack.c.bf16 %v828, %v827
    %v874 = vpack.c.bf16 %v830, %v829
    %v875 = vpack.c.bf16 %v832, %v831
    %v876 = vpack.c.bf16 %v834, %v833
    %v877 = vpack.c.bf16 %v836, %v835
    %v878 = vpack.c.bf16 %v838, %v837
    %v879 = vpack.c.bf16 %v840, %v839
    %v880 = vpack.c.bf16 %v842, %v841
    %v881 = vpack.c.bf16 %v844, %v843
    %v882 = vpack.c.bf16 %v846, %v845
    %v883 = vpack.c.bf16 %v848, %v847
    %v884 = vpack.c.bf16 %v850, %v849
    %v885 = vpack.c.bf16 %v852, %v851
    %v886 = vpack.c.bf16 %v854, %v853
    %v887 = vpack.c.bf16 %v855, %v855
    %v888 = vld [vmem:[%s3] sm:$0xf]
    %v889 = vld [vmem:[%s3 + $0x4] sm:$0xf]
    %v890 = vld [vmem:[%s3 + $0x8] sm:$0xf]
    %v891 = vld [vmem:[%s3 + $0xc] sm:$0xf]
    %v892 = vld [vmem:[%s3 + $0x10] sm:$0xf]
    %v893 = vld [vmem:[%s3 + $0x14] sm:$0xf]
    %v900 = vunpack.c.l.b16 %v888
    %v901 = vunpack.c.l.b16 %v889
    %v902 = vunpack.c.l.b16 %v890
    %v903 = vunpack.c.l.b16 %v891
    %v904 = vunpack.c.l.b16 %v892
    %v905 = vunpack.c.l.b16 %v893
    %v906 = vpack.c.b16 %v901, %v900
    %v907 = vpack.c.b16 %v903, %v902
    %v908 = vpack.c.b16 %v905, %v904
    %vm912 = vcmask 392192
    %v914 = vsel %vm912, %v856, 0
    %v917 = vsel %vm912, %v857, 0
    %v920 = vsel %vm912, %v858, 0
    %v923 = vsel %vm912, %v859, 0
    %v926 = vsel %vm912, %v860, 0
    %v929 = vsel %vm912, %v861, 0
    %v932 = vsel %vm912, %v862, 0
    %v935 = vsel %vm912, %v863, 0
    %v938 = vsel %vm912, %v864, 0
    %v941 = vsel %vm912, %v865, 0
    %v944 = vsel %vm912, %v866, 0
    %v947 = vsel %vm912, %v867, 0
    %v950 = vsel %vm912, %v868, 0
    %v953 = vsel %vm912, %v869, 0
    %v956 = vsel %vm912, %v870, 0
    %v959 = vsel %vm912, %v871, 0
    %v962 = vsel %vm912, %v872, 0
    %v965 = vsel %vm912, %v873, 0
    %v968 = vsel %vm912, %v874, 0
    %v971 = vsel %vm912, %v875, 0
    %v974 = vsel %vm912, %v876, 0
    %v977 = vsel %vm912, %v877, 0
    %v980 = vsel %vm912, %v878, 0
    %v983 = vsel %vm912, %v879, 0
    %v986 = vsel %vm912, %v880, 0
    %v989 = vsel %vm912, %v881, 0
    %v992 = vsel %vm912, %v882, 0
    %v995 = vsel %vm912, %v883, 0
    %v998 = vsel %vm912, %v884, 0
    %v1001 = vsel %vm912, %v885, 0
    %v1004 = vsel %vm912, %v886, 0
    %v1007 = vsel %vm912, %v887, 0
    %1009 = vmatprep.subr.bf16.mxu0 0
    %1010 = vmatpush1.bf16.msra.mxu0 0
    %1011 = vmatprep.subr.bf16.mxu0 0
    %1012 = vmatpush1.bf16.msra.mxu0 0
    %1013 = vmatprep.subr.bf16.mxu0 0
    %1014 = vmatpush1.bf16.msra.mxu0 0
    %1015 = vmatprep.subr.bf16.mxu0 0
    %1016 = vmatpush1.bf16.msra.mxu0 0
    %1017 = vmatprep.subr.bf16.mxu0 0
    %1018 = vmatpush1.bf16.msra.mxu0 0
    %1019 = vmatprep.subr.bf16.mxu0 0
    %1020 = vmatpush1.bf16.msra.mxu0 %v908
    %1021 = vmatprep.subr.bf16.mxu0 0
    %1022 = vmatpush1.bf16.msra.mxu0 %v907
    %1023 = vmatprep.subr.bf16.mxu0 0
    %1024 = vmatpush1.bf16.msra.mxu0 %v906
    %1025 = vmatprep.subr.bf16.mxu0 0
    %1026 = vmatpush2.bf16.msra.mxu0 0
    %1027 = vmatprep.subr.bf16.mxu0 0
    %1028 = vmatpush2.bf16.msra.mxu0 0
    %1029 = vmatprep.subr.bf16.mxu0 0
    %1030 = vmatpush2.bf16.msra.mxu0 0
    %1031 = vmatprep.subr.bf16.mxu0 0
    %1032 = vmatpush2.bf16.msra.mxu0 0
    %1033 = vmatprep.subr.bf16.mxu0 0
    %1034 = vmatpush2.bf16.msra.mxu0 0
    %1035 = vmatprep.subr.bf16.mxu0 0
    %1036 = vmatpush2.bf16.msra.mxu0 0
    %1037 = vmatprep.subr.bf16.mxu0 0
    %1038 = vmatpush2.bf16.msra.mxu0 0
    %1039 = vmatprep.subr.bf16.mxu0 0
    %1040 = vmatpush2.bf16.msra.mxu0 0
    %1041 = vmatprep.mubr.bf16.mxu0 0
    %1042 = vmatmul.mubr.bf16.gmra.mxu0 %v914
    %v1043 = vpop.f32.mrf.mxu0
    %v1044 = vadd.f32 0.0, %v1043
    %v1045 = vpop.f32.mrf.mxu0
    %v1046 = vpop.f32.mrf.mxu0
    %v1047 = vadd.f32 0.0, %v1046
    %v1048 = vpop.f32.mrf.mxu0
    %1049 = vmatprep.mubr.bf16.mxu0 0
    %1050 = vmatmul.mubr.bf16.gmra.mxu0 %v917
    %v1051 = vpop.f32.mrf.mxu0
    %v1052 = vadd.f32 0.0, %v1051
    %v1053 = vpop.f32.mrf.mxu0
    %v1054 = vpop.f32.mrf.mxu0
    %v1055 = vadd.f32 0.0, %v1054
    %v1056 = vpop.f32.mrf.mxu0
    %1057 = vmatprep.mubr.bf16.mxu0 0
    %1058 = vmatmul.mubr.bf16.gmra.mxu0 %v920
    %v1059 = vpop.f32.mrf.mxu0
    %v1060 = vadd.f32 0.0, %v1059
    %v1061 = vpop.f32.mrf.mxu0
    %v1062 = vpop.f32.mrf.mxu0
    %v1063 = vadd.f32 0.0, %v1062
    %v1064 = vpop.f32.mrf.mxu0
    %1065 = vmatprep.mubr.bf16.mxu0 0
    %1066 = vmatmul.mubr.bf16.gmra.mxu0 %v923
    %v1067 = vpop.f32.mrf.mxu0
    %v1068 = vadd.f32 0.0, %v1067
    %v1069 = vpop.f32.mrf.mxu0
    %v1070 = vpop.f32.mrf.mxu0
    %v1071 = vadd.f32 0.0, %v1070
    %v1072 = vpop.f32.mrf.mxu0
    %1073 = vmatprep.mubr.bf16.mxu0 0
    %1074 = vmatmul.mubr.bf16.gmra.mxu0 %v926
    %v1075 = vpop.f32.mrf.mxu0
    %v1076 = vadd.f32 0.0, %v1075
    %v1077 = vpop.f32.mrf.mxu0
    %v1078 = vpop.f32.mrf.mxu0
    %v1079 = vadd.f32 0.0, %v1078
    %v1080 = vpop.f32.mrf.mxu0
    %1081 = vmatprep.mubr.bf16.mxu0 0
    %1082 = vmatmul.mubr.bf16.gmra.mxu0 %v929
    %v1083 = vpop.f32.mrf.mxu0
    %v1084 = vadd.f32 0.0, %v1083
    %v1085 = vpop.f32.mrf.mxu0
    %v1086 = vpop.f32.mrf.mxu0
    %v1087 = vadd.f32 0.0, %v1086
    %v1088 = vpop.f32.mrf.mxu0
    %1089 = vmatprep.mubr.bf16.mxu0 0
    %1090 = vmatmul.mubr.bf16.gmra.mxu0 %v932
    %v1091 = vpop.f32.mrf.mxu0
    %v1092 = vadd.f32 0.0, %v1091
    %v1093 = vpop.f32.mrf.mxu0
    %v1094 = vpop.f32.mrf.mxu0
    %v1095 = vadd.f32 0.0, %v1094
    %v1096 = vpop.f32.mrf.mxu0
    %1097 = vmatprep.mubr.bf16.mxu0 0
    %1098 = vmatmul.mubr.bf16.gmra.mxu0 %v935
    %v1099 = vpop.f32.mrf.mxu0
    %v1100 = vadd.f32 0.0, %v1099
    %v1101 = vpop.f32.mrf.mxu0
    %v1102 = vpop.f32.mrf.mxu0
    %v1103 = vadd.f32 0.0, %v1102
    %v1104 = vpop.f32.mrf.mxu0
    %1105 = vmatprep.mubr.bf16.mxu0 0
    %1106 = vmatmul.mubr.bf16.gmra.mxu0 %v938
    %v1107 = vpop.f32.mrf.mxu0
    %v1108 = vadd.f32 0.0, %v1107
    %v1109 = vpop.f32.mrf.mxu0
    %v1110 = vpop.f32.mrf.mxu0
    %v1111 = vadd.f32 0.0, %v1110
    %v1112 = vpop.f32.mrf.mxu0
    %1113 = vmatprep.mubr.bf16.mxu0 0
    %1114 = vmatmul.mubr.bf16.gmra.mxu0 %v941
    %v1115 = vpop.f32.mrf.mxu0
    %v1116 = vadd.f32 0.0, %v1115
    %v1117 = vpop.f32.mrf.mxu0
    %v1118 = vpop.f32.mrf.mxu0
    %v1119 = vadd.f32 0.0, %v1118
    %v1120 = vpop.f32.mrf.mxu0
    %1121 = vmatprep.mubr.bf16.mxu0 0
    %1122 = vmatmul.mubr.bf16.gmra.mxu0 %v944
    %v1123 = vpop.f32.mrf.mxu0
    %v1124 = vadd.f32 0.0, %v1123
    %v1125 = vpop.f32.mrf.mxu0
    %v1126 = vpop.f32.mrf.mxu0
    %v1127 = vadd.f32 0.0, %v1126
    %v1128 = vpop.f32.mrf.mxu0
    %1129 = vmatprep.mubr.bf16.mxu0 0
    %1130 = vmatmul.mubr.bf16.gmra.mxu0 %v947
    %v1131 = vpop.f32.mrf.mxu0
    %v1132 = vadd.f32 0.0, %v1131
    %v1133 = vpop.f32.mrf.mxu0
    %v1134 = vpop.f32.mrf.mxu0
    %v1135 = vadd.f32 0.0, %v1134
    %v1136 = vpop.f32.mrf.mxu0
    %1137 = vmatprep.mubr.bf16.mxu0 0
    %1138 = vmatmul.mubr.bf16.gmra.mxu0 %v950
    %v1139 = vpop.f32.mrf.mxu0
    %v1140 = vadd.f32 0.0, %v1139
    %v1141 = vpop.f32.mrf.mxu0
    %v1142 = vpop.f32.mrf.mxu0
    %v1143 = vadd.f32 0.0, %v1142
    %v1144 = vpop.f32.mrf.mxu0
    %1145 = vmatprep.mubr.bf16.mxu0 0
    %1146 = vmatmul.mubr.bf16.gmra.mxu0 %v953
    %v1147 = vpop.f32.mrf.mxu0
    %v1148 = vadd.f32 0.0, %v1147
    %v1149 = vpop.f32.mrf.mxu0
    %v1150 = vpop.f32.mrf.mxu0
    %v1151 = vadd.f32 0.0, %v1150
    %v1152 = vpop.f32.mrf.mxu0
    %1153 = vmatprep.mubr.bf16.mxu0 0
    %1154 = vmatmul.mubr.bf16.gmra.mxu0 %v956
    %v1155 = vpop.f32.mrf.mxu0
    %v1156 = vadd.f32 0.0, %v1155
    %v1157 = vpop.f32.mrf.mxu0
    %v1158 = vpop.f32.mrf.mxu0
    %v1159 = vadd.f32 0.0, %v1158
    %v1160 = vpop.f32.mrf.mxu0
    %1161 = vmatprep.mubr.bf16.mxu0 0
    %1162 = vmatmul.mubr.bf16.gmra.mxu0 %v959
    %v1163 = vpop.f32.mrf.mxu0
    %v1164 = vadd.f32 0.0, %v1163
    %v1165 = vpop.f32.mrf.mxu0
    %v1166 = vpop.f32.mrf.mxu0
    %v1167 = vadd.f32 0.0, %v1166
    %v1168 = vpop.f32.mrf.mxu0
    %1169 = vmatprep.mubr.bf16.mxu0 0
    %1170 = vmatmul.mubr.bf16.gmra.mxu0 %v962
    %v1171 = vpop.f32.mrf.mxu0
    %v1172 = vadd.f32 0.0, %v1171
    %v1173 = vpop.f32.mrf.mxu0
    %v1174 = vpop.f32.mrf.mxu0
    %v1175 = vadd.f32 0.0, %v1174
    %v1176 = vpop.f32.mrf.mxu0
    %1177 = vmatprep.mubr.bf16.mxu0 0
    %1178 = vmatmul.mubr.bf16.gmra.mxu0 %v965
    %v1179 = vpop.f32.mrf.mxu0
    %v1180 = vadd.f32 0.0, %v1179
    %v1181 = vpop.f32.mrf.mxu0
    %v1182 = vpop.f32.mrf.mxu0
    %v1183 = vadd.f32 0.0, %v1182
    %v1184 = vpop.f32.mrf.mxu0
    %1185 = vmatprep.mubr.bf16.mxu0 0
    %1186 = vmatmul.mubr.bf16.gmra.mxu0 %v968
    %v1187 = vpop.f32.mrf.mxu0
    %v1188 = vadd.f32 0.0, %v1187
    %v1189 = vpop.f32.mrf.mxu0
    %v1190 = vpop.f32.mrf.mxu0
    %v1191 = vadd.f32 0.0, %v1190
    %v1192 = vpop.f32.mrf.mxu0
    %1193 = vmatprep.mubr.bf16.mxu0 0
    %1194 = vmatmul.mubr.bf16.gmra.mxu0 %v971
    %v1195 = vpop.f32.mrf.mxu0
    %v1196 = vadd.f32 0.0, %v1195
    %v1197 = vpop.f32.mrf.mxu0
    %v1198 = vpop.f32.mrf.mxu0
    %v1199 = vadd.f32 0.0, %v1198
    %v1200 = vpop.f32.mrf.mxu0
    %1201 = vmatprep.mubr.bf16.mxu0 0
    %1202 = vmatmul.mubr.bf16.gmra.mxu0 %v974
    %v1203 = vpop.f32.mrf.mxu0
    %v1204 = vadd.f32 0.0, %v1203
    %v1205 = vpop.f32.mrf.mxu0
    %v1206 = vpop.f32.mrf.mxu0
    %v1207 = vadd.f32 0.0, %v1206
    %v1208 = vpop.f32.mrf.mxu0
    %1209 = vmatprep.mubr.bf16.mxu0 0
    %1210 = vmatmul.mubr.bf16.gmra.mxu0 %v977
    %v1211 = vpop.f32.mrf.mxu0
    %v1212 = vadd.f32 0.0, %v1211
    %v1213 = vpop.f32.mrf.mxu0
    %v1214 = vpop.f32.mrf.mxu0
    %v1215 = vadd.f32 0.0, %v1214
    %v1216 = vpop.f32.mrf.mxu0
    %1217 = vmatprep.mubr.bf16.mxu0 0
    %1218 = vmatmul.mubr.bf16.gmra.mxu0 %v980
    %v1219 = vpop.f32.mrf.mxu0
    %v1220 = vadd.f32 0.0, %v1219
    %v1221 = vpop.f32.mrf.mxu0
    %v1222 = vpop.f32.mrf.mxu0
    %v1223 = vadd.f32 0.0, %v1222
    %v1224 = vpop.f32.mrf.mxu0
    %1225 = vmatprep.mubr.bf16.mxu0 0
    %1226 = vmatmul.mubr.bf16.gmra.mxu0 %v983
    %v1227 = vpop.f32.mrf.mxu0
    %v1228 = vadd.f32 0.0, %v1227
    %v1229 = vpop.f32.mrf.mxu0
    %v1230 = vpop.f32.mrf.mxu0
    %v1231 = vadd.f32 0.0, %v1230
    %v1232 = vpop.f32.mrf.mxu0
    %1233 = vmatprep.mubr.bf16.mxu0 0
    %1234 = vmatmul.mubr.bf16.gmra.mxu0 %v986
    %v1235 = vpop.f32.mrf.mxu0
    %v1236 = vadd.f32 0.0, %v1235
    %v1237 = vpop.f32.mrf.mxu0
    %v1238 = vpop.f32.mrf.mxu0
    %v1239 = vadd.f32 0.0, %v1238
    %v1240 = vpop.f32.mrf.mxu0
    %1241 = vmatprep.mubr.bf16.mxu0 0
    %1242 = vmatmul.mubr.bf16.gmra.mxu0 %v989
    %v1243 = vpop.f32.mrf.mxu0
    %v1244 = vadd.f32 0.0, %v1243
    %v1245 = vpop.f32.mrf.mxu0
    %v1246 = vpop.f32.mrf.mxu0
    %v1247 = vadd.f32 0.0, %v1246
    %v1248 = vpop.f32.mrf.mxu0
    %1249 = vmatprep.mubr.bf16.mxu0 0
    %1250 = vmatmul.mubr.bf16.gmra.mxu0 %v992
    %v1251 = vpop.f32.mrf.mxu0
    %v1252 = vadd.f32 0.0, %v1251
    %v1253 = vpop.f32.mrf.mxu0
    %v1254 = vpop.f32.mrf.mxu0
    %v1255 = vadd.f32 0.0, %v1254
    %v1256 = vpop.f32.mrf.mxu0
    %1257 = vmatprep.mubr.bf16.mxu0 0
    %1258 = vmatmul.mubr.bf16.gmra.mxu0 %v995
    %v1259 = vpop.f32.mrf.mxu0
    %v1260 = vadd.f32 0.0, %v1259
    %v1261 = vpop.f32.mrf.mxu0
    %v1262 = vpop.f32.mrf.mxu0
    %v1263 = vadd.f32 0.0, %v1262
    %v1264 = vpop.f32.mrf.mxu0
    %1265 = vmatprep.mubr.bf16.mxu0 0
    %1266 = vmatmul.mubr.bf16.gmra.mxu0 %v998
    %v1267 = vpop.f32.mrf.mxu0
    %v1268 = vadd.f32 0.0, %v1267
    %v1269 = vpop.f32.mrf.mxu0
    %v1270 = vpop.f32.mrf.mxu0
    %v1271 = vadd.f32 0.0, %v1270
    %v1272 = vpop.f32.mrf.mxu0
    %1273 = vmatprep.mubr.bf16.mxu0 0
    %1274 = vmatmul.mubr.bf16.gmra.mxu0 %v1001
    %v1275 = vpop.f32.mrf.mxu0
    %v1276 = vadd.f32 0.0, %v1275
    %v1277 = vpop.f32.mrf.mxu0
    %v1278 = vpop.f32.mrf.mxu0
    %v1279 = vadd.f32 0.0, %v1278
    %v1280 = vpop.f32.mrf.mxu0
    %1281 = vmatprep.mubr.bf16.mxu0 0
    %1282 = vmatmul.mubr.bf16.gmra.mxu0 %v1004
    %v1283 = vpop.f32.mrf.mxu0
    %v1284 = vadd.f32 0.0, %v1283
    %v1285 = vpop.f32.mrf.mxu0
    %v1286 = vpop.f32.mrf.mxu0
    %v1287 = vadd.f32 0.0, %v1286
    %v1288 = vpop.f32.mrf.mxu0
    %1289 = vmatprep.mubr.bf16.mxu0 0
    %1290 = vmatmul.mubr.bf16.gmra.mxu0 %v1007
    %v1291 = vpop.f32.mrf.mxu0
    %v1292 = vadd.f32 0.0, %v1291
    %v1293 = vpop.f32.mrf.mxu0
    %v1294 = vpop.f32.mrf.mxu0
    %v1295 = vpop.f32.mrf.mxu0
    %1296 = vdwg.mxu0
    %s1297 = scalar_lea.vmem %s3, 24
    %v1298 = vld [vmem:[%s1297] sm:$0xf]
    %v1299 = vld [vmem:[%s1297 + $0x4] sm:$0xf]
    %v1300 = vld [vmem:[%s1297 + $0x8] sm:$0xf]
    %v1301 = vld [vmem:[%s1297 + $0xc] sm:$0xf]
    %v1302 = vld [vmem:[%s1297 + $0x10] sm:$0xf]
    %v1303 = vld [vmem:[%s1297 + $0x14] sm:$0xf]
    %v1310 = vunpack.c.l.b16 %v1298
    %v1311 = vunpack.c.l.b16 %v1299
    %v1312 = vunpack.c.l.b16 %v1300
    %v1313 = vunpack.c.l.b16 %v1301
    %v1314 = vunpack.c.l.b16 %v1302
    %v1315 = vunpack.c.l.b16 %v1303
    %v1316 = vpack.c.b16 %v1311, %v1310
    %v1317 = vpack.c.b16 %v1313, %v1312
    %v1318 = vpack.c.b16 %v1315, %v1314
    %1322 = vmatprep.subr.bf16.mxu0 0
    %1323 = vmatpush1.bf16.msra.mxu0 0
    %1324 = vmatprep.subr.bf16.mxu0 0
    %1325 = vmatpush1.bf16.msra.mxu0 0
    %1326 = vmatprep.subr.bf16.mxu0 0
    %1327 = vmatpush1.bf16.msra.mxu0 0
    %1328 = vmatprep.subr.bf16.mxu0 0
    %1329 = vmatpush1.bf16.msra.mxu0 0
    %1330 = vmatprep.subr.bf16.mxu0 0
    %1331 = vmatpush1.bf16.msra.mxu0 0
    %1332 = vmatprep.subr.bf16.mxu0 0
    %1333 = vmatpush1.bf16.msra.mxu0 %v1318
    %1334 = vmatprep.subr.bf16.mxu0 0
    %1335 = vmatpush1.bf16.msra.mxu0 %v1317
    %1336 = vmatprep.subr.bf16.mxu0 0
    %1337 = vmatpush1.bf16.msra.mxu0 %v1316
    %1338 = vmatprep.subr.bf16.mxu0 0
    %1339 = vmatpush2.bf16.msra.mxu0 0
    %1340 = vmatprep.subr.bf16.mxu0 0
    %1341 = vmatpush2.bf16.msra.mxu0 0
    %1342 = vmatprep.subr.bf16.mxu0 0
    %1343 = vmatpush2.bf16.msra.mxu0 0
    %1344 = vmatprep.subr.bf16.mxu0 0
    %1345 = vmatpush2.bf16.msra.mxu0 0
    %1346 = vmatprep.subr.bf16.mxu0 0
    %1347 = vmatpush2.bf16.msra.mxu0 0
    %1348 = vmatprep.subr.bf16.mxu0 0
    %1349 = vmatpush2.bf16.msra.mxu0 0
    %1350 = vmatprep.subr.bf16.mxu0 0
    %1351 = vmatpush2.bf16.msra.mxu0 0
    %1352 = vmatprep.subr.bf16.mxu0 0
    %1353 = vmatpush2.bf16.msra.mxu0 0
    %1354 = vmatprep.mubr.bf16.mxu0 0
    %1355 = vmatmul.mubr.bf16.gmra.mxu0 %v914
    %v1356 = vpop.f32.mrf.mxu0
    %v1357 = vadd.f32 0.0, %v1356
    %v1358 = vpop.f32.mrf.mxu0
    %v1359 = vpop.f32.mrf.mxu0
    %v1360 = vadd.f32 0.0, %v1359
    %v1361 = vpop.f32.mrf.mxu0
    %1362 = vmatprep.mubr.bf16.mxu0 0
    %1363 = vmatmul.mubr.bf16.gmra.mxu0 %v917
    %v1364 = vpop.f32.mrf.mxu0
    %v1365 = vadd.f32 0.0, %v1364
    %v1366 = vpop.f32.mrf.mxu0
    %v1367 = vpop.f32.mrf.mxu0
    %v1368 = vadd.f32 0.0, %v1367
    %v1369 = vpop.f32.mrf.mxu0
    %1370 = vmatprep.mubr.bf16.mxu0 0
    %1371 = vmatmul.mubr.bf16.gmra.mxu0 %v920
    %v1372 = vpop.f32.mrf.mxu0
    %v1373 = vadd.f32 0.0, %v1372
    %v1374 = vpop.f32.mrf.mxu0
    %v1375 = vpop.f32.mrf.mxu0
    %v1376 = vadd.f32 0.0, %v1375
    %v1377 = vpop.f32.mrf.mxu0
    %1378 = vmatprep.mubr.bf16.mxu0 0
    %1379 = vmatmul.mubr.bf16.gmra.mxu0 %v923
    %v1380 = vpop.f32.mrf.mxu0
    %v1381 = vadd.f32 0.0, %v1380
    %v1382 = vpop.f32.mrf.mxu0
    %v1383 = vpop.f32.mrf.mxu0
    %v1384 = vadd.f32 0.0, %v1383
    %v1385 = vpop.f32.mrf.mxu0
    %1386 = vmatprep.mubr.bf16.mxu0 0
    %1387 = vmatmul.mubr.bf16.gmra.mxu0 %v926
    %v1388 = vpop.f32.mrf.mxu0
    %v1389 = vadd.f32 0.0, %v1388
    %v1390 = vpop.f32.mrf.mxu0
    %v1391 = vpop.f32.mrf.mxu0
    %v1392 = vadd.f32 0.0, %v1391
    %v1393 = vpop.f32.mrf.mxu0
    %1394 = vmatprep.mubr.bf16.mxu0 0
    %1395 = vmatmul.mubr.bf16.gmra.mxu0 %v929
    %v1396 = vpop.f32.mrf.mxu0
    %v1397 = vadd.f32 0.0, %v1396
    %v1398 = vpop.f32.mrf.mxu0
    %v1399 = vpop.f32.mrf.mxu0
    %v1400 = vadd.f32 0.0, %v1399
    %v1401 = vpop.f32.mrf.mxu0
    %1402 = vmatprep.mubr.bf16.mxu0 0
    %1403 = vmatmul.mubr.bf16.gmra.mxu0 %v932
    %v1404 = vpop.f32.mrf.mxu0
    %v1405 = vadd.f32 0.0, %v1404
    %v1406 = vpop.f32.mrf.mxu0
    %v1407 = vpop.f32.mrf.mxu0
    %v1408 = vadd.f32 0.0, %v1407
    %v1409 = vpop.f32.mrf.mxu0
    %1410 = vmatprep.mubr.bf16.mxu0 0
    %1411 = vmatmul.mubr.bf16.gmra.mxu0 %v935
    %v1412 = vpop.f32.mrf.mxu0
    %v1413 = vadd.f32 0.0, %v1412
    %v1414 = vpop.f32.mrf.mxu0
    %v1415 = vpop.f32.mrf.mxu0
    %v1416 = vadd.f32 0.0, %v1415
    %v1417 = vpop.f32.mrf.mxu0
    %1418 = vmatprep.mubr.bf16.mxu0 0
    %1419 = vmatmul.mubr.bf16.gmra.mxu0 %v938
    %v1420 = vpop.f32.mrf.mxu0
    %v1421 = vadd.f32 0.0, %v1420
    %v1422 = vpop.f32.mrf.mxu0
    %v1423 = vpop.f32.mrf.mxu0
    %v1424 = vadd.f32 0.0, %v1423
    %v1425 = vpop.f32.mrf.mxu0
    %1426 = vmatprep.mubr.bf16.mxu0 0
    %1427 = vmatmul.mubr.bf16.gmra.mxu0 %v941
    %v1428 = vpop.f32.mrf.mxu0
    %v1429 = vadd.f32 0.0, %v1428
    %v1430 = vpop.f32.mrf.mxu0
    %v1431 = vpop.f32.mrf.mxu0
    %v1432 = vadd.f32 0.0, %v1431
    %v1433 = vpop.f32.mrf.mxu0
    %1434 = vmatprep.mubr.bf16.mxu0 0
    %1435 = vmatmul.mubr.bf16.gmra.mxu0 %v944
    %v1436 = vpop.f32.mrf.mxu0
    %v1437 = vadd.f32 0.0, %v1436
    %v1438 = vpop.f32.mrf.mxu0
    %v1439 = vpop.f32.mrf.mxu0
    %v1440 = vadd.f32 0.0, %v1439
    %v1441 = vpop.f32.mrf.mxu0
    %1442 = vmatprep.mubr.bf16.mxu0 0
    %1443 = vmatmul.mubr.bf16.gmra.mxu0 %v947
    %v1444 = vpop.f32.mrf.mxu0
    %v1445 = vadd.f32 0.0, %v1444
    %v1446 = vpop.f32.mrf.mxu0
    %v1447 = vpop.f32.mrf.mxu0
    %v1448 = vadd.f32 0.0, %v1447
    %v1449 = vpop.f32.mrf.mxu0
    %1450 = vmatprep.mubr.bf16.mxu0 0
    %1451 = vmatmul.mubr.bf16.gmra.mxu0 %v950
    %v1452 = vpop.f32.mrf.mxu0
    %v1453 = vadd.f32 0.0, %v1452
    %v1454 = vpop.f32.mrf.mxu0
    %v1455 = vpop.f32.mrf.mxu0
    %v1456 = vadd.f32 0.0, %v1455
    %v1457 = vpop.f32.mrf.mxu0
    %1458 = vmatprep.mubr.bf16.mxu0 0
    %1459 = vmatmul.mubr.bf16.gmra.mxu0 %v953
    %v1460 = vpop.f32.mrf.mxu0
    %v1461 = vadd.f32 0.0, %v1460
    %v1462 = vpop.f32.mrf.mxu0
    %v1463 = vpop.f32.mrf.mxu0
    %v1464 = vadd.f32 0.0, %v1463
    %v1465 = vpop.f32.mrf.mxu0
    %1466 = vmatprep.mubr.bf16.mxu0 0
    %1467 = vmatmul.mubr.bf16.gmra.mxu0 %v956
    %v1468 = vpop.f32.mrf.mxu0
    %v1469 = vadd.f32 0.0, %v1468
    %v1470 = vpop.f32.mrf.mxu0
    %v1471 = vpop.f32.mrf.mxu0
    %v1472 = vadd.f32 0.0, %v1471
    %v1473 = vpop.f32.mrf.mxu0
    %1474 = vmatprep.mubr.bf16.mxu0 0
    %1475 = vmatmul.mubr.bf16.gmra.mxu0 %v959
    %v1476 = vpop.f32.mrf.mxu0
    %v1477 = vadd.f32 0.0, %v1476
    %v1478 = vpop.f32.mrf.mxu0
    %v1479 = vpop.f32.mrf.mxu0
    %v1480 = vadd.f32 0.0, %v1479
    %v1481 = vpop.f32.mrf.mxu0
    %1482 = vmatprep.mubr.bf16.mxu0 0
    %1483 = vmatmul.mubr.bf16.gmra.mxu0 %v962
    %v1484 = vpop.f32.mrf.mxu0
    %v1485 = vadd.f32 0.0, %v1484
    %v1486 = vpop.f32.mrf.mxu0
    %v1487 = vpop.f32.mrf.mxu0
    %v1488 = vadd.f32 0.0, %v1487
    %v1489 = vpop.f32.mrf.mxu0
    %1490 = vmatprep.mubr.bf16.mxu0 0
    %1491 = vmatmul.mubr.bf16.gmra.mxu0 %v965
    %v1492 = vpop.f32.mrf.mxu0
    %v1493 = vadd.f32 0.0, %v1492
    %v1494 = vpop.f32.mrf.mxu0
    %v1495 = vpop.f32.mrf.mxu0
    %v1496 = vadd.f32 0.0, %v1495
    %v1497 = vpop.f32.mrf.mxu0
    %1498 = vmatprep.mubr.bf16.mxu0 0
    %1499 = vmatmul.mubr.bf16.gmra.mxu0 %v968
    %v1500 = vpop.f32.mrf.mxu0
    %v1501 = vadd.f32 0.0, %v1500
    %v1502 = vpop.f32.mrf.mxu0
    %v1503 = vpop.f32.mrf.mxu0
    %v1504 = vadd.f32 0.0, %v1503
    %v1505 = vpop.f32.mrf.mxu0
    %1506 = vmatprep.mubr.bf16.mxu0 0
    %1507 = vmatmul.mubr.bf16.gmra.mxu0 %v971
    %v1508 = vpop.f32.mrf.mxu0
    %v1509 = vadd.f32 0.0, %v1508
    %v1510 = vpop.f32.mrf.mxu0
    %v1511 = vpop.f32.mrf.mxu0
    %v1512 = vadd.f32 0.0, %v1511
    %v1513 = vpop.f32.mrf.mxu0
    %1514 = vmatprep.mubr.bf16.mxu0 0
    %1515 = vmatmul.mubr.bf16.gmra.mxu0 %v974
    %v1516 = vpop.f32.mrf.mxu0
    %v1517 = vadd.f32 0.0, %v1516
    %v1518 = vpop.f32.mrf.mxu0
    %v1519 = vpop.f32.mrf.mxu0
    %v1520 = vadd.f32 0.0, %v1519
    %v1521 = vpop.f32.mrf.mxu0
    %1522 = vmatprep.mubr.bf16.mxu0 0
    %1523 = vmatmul.mubr.bf16.gmra.mxu0 %v977
    %v1524 = vpop.f32.mrf.mxu0
    %v1525 = vadd.f32 0.0, %v1524
    %v1526 = vpop.f32.mrf.mxu0
    %v1527 = vpop.f32.mrf.mxu0
    %v1528 = vadd.f32 0.0, %v1527
    %v1529 = vpop.f32.mrf.mxu0
    %1530 = vmatprep.mubr.bf16.mxu0 0
    %1531 = vmatmul.mubr.bf16.gmra.mxu0 %v980
    %v1532 = vpop.f32.mrf.mxu0
    %v1533 = vadd.f32 0.0, %v1532
    %v1534 = vpop.f32.mrf.mxu0
    %v1535 = vpop.f32.mrf.mxu0
    %v1536 = vadd.f32 0.0, %v1535
    %v1537 = vpop.f32.mrf.mxu0
    %1538 = vmatprep.mubr.bf16.mxu0 0
    %1539 = vmatmul.mubr.bf16.gmra.mxu0 %v983
    %v1540 = vpop.f32.mrf.mxu0
    %v1541 = vadd.f32 0.0, %v1540
    %v1542 = vpop.f32.mrf.mxu0
    %v1543 = vpop.f32.mrf.mxu0
    %v1544 = vadd.f32 0.0, %v1543
    %v1545 = vpop.f32.mrf.mxu0
    %1546 = vmatprep.mubr.bf16.mxu0 0
    %1547 = vmatmul.mubr.bf16.gmra.mxu0 %v986
    %v1548 = vpop.f32.mrf.mxu0
    %v1549 = vadd.f32 0.0, %v1548
    %v1550 = vpop.f32.mrf.mxu0
    %v1551 = vpop.f32.mrf.mxu0
    %v1552 = vadd.f32 0.0, %v1551
    %v1553 = vpop.f32.mrf.mxu0
    %1554 = vmatprep.mubr.bf16.mxu0 0
    %1555 = vmatmul.mubr.bf16.gmra.mxu0 %v989
    %v1556 = vpop.f32.mrf.mxu0
    %v1557 = vadd.f32 0.0, %v1556
    %v1558 = vpop.f32.mrf.mxu0
    %v1559 = vpop.f32.mrf.mxu0
    %v1560 = vadd.f32 0.0, %v1559
    %v1561 = vpop.f32.mrf.mxu0
    %1562 = vmatprep.mubr.bf16.mxu0 0
    %1563 = vmatmul.mubr.bf16.gmra.mxu0 %v992
    %v1564 = vpop.f32.mrf.mxu0
    %v1565 = vadd.f32 0.0, %v1564
    %v1566 = vpop.f32.mrf.mxu0
    %v1567 = vpop.f32.mrf.mxu0
    %v1568 = vadd.f32 0.0, %v1567
    %v1569 = vpop.f32.mrf.mxu0
    %1570 = vmatprep.mubr.bf16.mxu0 0
    %1571 = vmatmul.mubr.bf16.gmra.mxu0 %v995
    %v1572 = vpop.f32.mrf.mxu0
    %v1573 = vadd.f32 0.0, %v1572
    %v1574 = vpop.f32.mrf.mxu0
    %v1575 = vpop.f32.mrf.mxu0
    %v1576 = vadd.f32 0.0, %v1575
    %v1577 = vpop.f32.mrf.mxu0
    %1578 = vmatprep.mubr.bf16.mxu0 0
    %1579 = vmatmul.mubr.bf16.gmra.mxu0 %v998
    %v1580 = vpop.f32.mrf.mxu0
    %v1581 = vadd.f32 0.0, %v1580
    %v1582 = vpop.f32.mrf.mxu0
    %v1583 = vpop.f32.mrf.mxu0
    %v1584 = vadd.f32 0.0, %v1583
    %v1585 = vpop.f32.mrf.mxu0
    %1586 = vmatprep.mubr.bf16.mxu0 0
    %1587 = vmatmul.mubr.bf16.gmra.mxu0 %v1001
    %v1588 = vpop.f32.mrf.mxu0
    %v1589 = vadd.f32 0.0, %v1588
    %v1590 = vpop.f32.mrf.mxu0
    %v1591 = vpop.f32.mrf.mxu0
    %v1592 = vadd.f32 0.0, %v1591
    %v1593 = vpop.f32.mrf.mxu0
    %1594 = vmatprep.mubr.bf16.mxu0 0
    %1595 = vmatmul.mubr.bf16.gmra.mxu0 %v1004
    %v1596 = vpop.f32.mrf.mxu0
    %v1597 = vadd.f32 0.0, %v1596
    %v1598 = vpop.f32.mrf.mxu0
    %v1599 = vpop.f32.mrf.mxu0
    %v1600 = vadd.f32 0.0, %v1599
    %v1601 = vpop.f32.mrf.mxu0
    %1602 = vmatprep.mubr.bf16.mxu0 0
    %1603 = vmatmul.mubr.bf16.gmra.mxu0 %v1007
    %v1604 = vpop.f32.mrf.mxu0
    %v1605 = vadd.f32 0.0, %v1604
    %v1606 = vpop.f32.mrf.mxu0
    %v1607 = vpop.f32.mrf.mxu0
    %v1608 = vpop.f32.mrf.mxu0
    %1609 = vdwg.mxu0
    %v1610 = vmax.f32 %v1044, %v1357
    %v1611 = vmax.f32 %v1047, %v1360
    %v1612 = vmax.f32 %v1052, %v1365
    %v1613 = vmax.f32 %v1055, %v1368
    %v1614 = vmax.f32 %v1060, %v1373
    %v1615 = vmax.f32 %v1063, %v1376
    %v1616 = vmax.f32 %v1068, %v1381
    %v1617 = vmax.f32 %v1071, %v1384
    %v1618 = vmax.f32 %v1076, %v1389
    %v1619 = vmax.f32 %v1079, %v1392
    %v1620 = vmax.f32 %v1084, %v1397
    %v1621 = vmax.f32 %v1087, %v1400
    %v1622 = vmax.f32 %v1092, %v1405
    %v1623 = vmax.f32 %v1095, %v1408
    %v1624 = vmax.f32 %v1100, %v1413
    %v1625 = vmax.f32 %v1103, %v1416
    %v1626 = vmax.f32 %v1108, %v1421
    %v1627 = vmax.f32 %v1111, %v1424
    %v1628 = vmax.f32 %v1116, %v1429
    %v1629 = vmax.f32 %v1119, %v1432
    %v1630 = vmax.f32 %v1124, %v1437
    %v1631 = vmax.f32 %v1127, %v1440
    %v1632 = vmax.f32 %v1132, %v1445
    %v1633 = vmax.f32 %v1135, %v1448
    %v1634 = vmax.f32 %v1140, %v1453
    %v1635 = vmax.f32 %v1143, %v1456
    %v1636 = vmax.f32 %v1148, %v1461
    %v1637 = vmax.f32 %v1151, %v1464
    %v1638 = vmax.f32 %v1156, %v1469
    %v1639 = vmax.f32 %v1159, %v1472
    %v1640 = vmax.f32 %v1164, %v1477
    %v1641 = vmax.f32 %v1167, %v1480
    %v1642 = vmax.f32 %v1172, %v1485
    %v1643 = vmax.f32 %v1175, %v1488
    %v1644 = vmax.f32 %v1180, %v1493
    %v1645 = vmax.f32 %v1183, %v1496
    %v1646 = vmax.f32 %v1188, %v1501
    %v1647 = vmax.f32 %v1191, %v1504
    %v1648 = vmax.f32 %v1196, %v1509
    %v1649 = vmax.f32 %v1199, %v1512
    %v1650 = vmax.f32 %v1204, %v1517
    %v1651 = vmax.f32 %v1207, %v1520
    %v1652 = vmax.f32 %v1212, %v1525
    %v1653 = vmax.f32 %v1215, %v1528
    %v1654 = vmax.f32 %v1220, %v1533
    %v1655 = vmax.f32 %v1223, %v1536
    %v1656 = vmax.f32 %v1228, %v1541
    %v1657 = vmax.f32 %v1231, %v1544
    %v1658 = vmax.f32 %v1236, %v1549
    %v1659 = vmax.f32 %v1239, %v1552
    %v1660 = vmax.f32 %v1244, %v1557
    %v1661 = vmax.f32 %v1247, %v1560
    %v1662 = vmax.f32 %v1252, %v1565
    %v1663 = vmax.f32 %v1255, %v1568
    %v1664 = vmax.f32 %v1260, %v1573
    %v1665 = vmax.f32 %v1263, %v1576
    %v1666 = vmax.f32 %v1268, %v1581
    %v1667 = vmax.f32 %v1271, %v1584
    %v1668 = vmax.f32 %v1276, %v1589
    %v1669 = vmax.f32 %v1279, %v1592
    %v1670 = vmax.f32 %v1284, %v1597
    %v1671 = vmax.f32 %v1287, %v1600
    %v1672 = vmax.f32 %v1292, %v1605
    %s1673 = scalar_lea.vmem %s3, 48
    %v1674 = vld [vmem:[%s1673] sm:$0xf]
    %v1675 = vld [vmem:[%s1673 + $0x4] sm:$0xf]
    %v1676 = vld [vmem:[%s1673 + $0x8] sm:$0xf]
    %v1677 = vld [vmem:[%s1673 + $0xc] sm:$0xf]
    %v1678 = vld [vmem:[%s1673 + $0x10] sm:$0xf]
    %v1679 = vld [vmem:[%s1673 + $0x14] sm:$0xf]
    %v1686 = vunpack.c.l.b16 %v1674
    %v1687 = vunpack.c.l.b16 %v1675
    %v1688 = vunpack.c.l.b16 %v1676
    %v1689 = vunpack.c.l.b16 %v1677
    %v1690 = vunpack.c.l.b16 %v1678
    %v1691 = vunpack.c.l.b16 %v1679
    %v1692 = vpack.c.b16 %v1687, %v1686
    %v1693 = vpack.c.b16 %v1689, %v1688
    %v1694 = vpack.c.b16 %v1691, %v1690
    %1698 = vmatprep.subr.bf16.mxu0 0
    %1699 = vmatpush1.bf16.msra.mxu0 0
    %1700 = vmatprep.subr.bf16.mxu0 0
    %1701 = vmatpush1.bf16.msra.mxu0 0
    %1702 = vmatprep.subr.bf16.mxu0 0
    %1703 = vmatpush1.bf16.msra.mxu0 0
    %1704 = vmatprep.subr.bf16.mxu0 0
    %1705 = vmatpush1.bf16.msra.mxu0 0
    %1706 = vmatprep.subr.bf16.mxu0 0
    %1707 = vmatpush1.bf16.msra.mxu0 0
    %1708 = vmatprep.subr.bf16.mxu0 0
    %1709 = vmatpush1.bf16.msra.mxu0 %v1694
    %1710 = vmatprep.subr.bf16.mxu0 0
    %1711 = vmatpush1.bf16.msra.mxu0 %v1693
    %1712 = vmatprep.subr.bf16.mxu0 0
    %1713 = vmatpush1.bf16.msra.mxu0 %v1692
    %1714 = vmatprep.subr.bf16.mxu0 0
    %1715 = vmatpush2.bf16.msra.mxu0 0
    %1716 = vmatprep.subr.bf16.mxu0 0
    %1717 = vmatpush2.bf16.msra.mxu0 0
    %1718 = vmatprep.subr.bf16.mxu0 0
    %1719 = vmatpush2.bf16.msra.mxu0 0
    %1720 = vmatprep.subr.bf16.mxu0 0
    %1721 = vmatpush2.bf16.msra.mxu0 0
    %1722 = vmatprep.subr.bf16.mxu0 0
    %1723 = vmatpush2.bf16.msra.mxu0 0
    %1724 = vmatprep.subr.bf16.mxu0 0
    %1725 = vmatpush2.bf16.msra.mxu0 0
    %1726 = vmatprep.subr.bf16.mxu0 0
    %1727 = vmatpush2.bf16.msra.mxu0 0
    %1728 = vmatprep.subr.bf16.mxu0 0
    %1729 = vmatpush2.bf16.msra.mxu0 0
    %1730 = vmatprep.mubr.bf16.mxu0 0
    %1731 = vmatmul.mubr.bf16.gmra.mxu0 %v914
    %v1732 = vpop.f32.mrf.mxu0
    %v1733 = vadd.f32 0.0, %v1732
    %v1734 = vpop.f32.mrf.mxu0
    %v1735 = vpop.f32.mrf.mxu0
    %v1736 = vadd.f32 0.0, %v1735
    %v1737 = vpop.f32.mrf.mxu0
    %1738 = vmatprep.mubr.bf16.mxu0 0
    %1739 = vmatmul.mubr.bf16.gmra.mxu0 %v917
    %v1740 = vpop.f32.mrf.mxu0
    %v1741 = vadd.f32 0.0, %v1740
    %v1742 = vpop.f32.mrf.mxu0
    %v1743 = vpop.f32.mrf.mxu0
    %v1744 = vadd.f32 0.0, %v1743
    %v1745 = vpop.f32.mrf.mxu0
    %1746 = vmatprep.mubr.bf16.mxu0 0
    %1747 = vmatmul.mubr.bf16.gmra.mxu0 %v920
    %v1748 = vpop.f32.mrf.mxu0
    %v1749 = vadd.f32 0.0, %v1748
    %v1750 = vpop.f32.mrf.mxu0
    %v1751 = vpop.f32.mrf.mxu0
    %v1752 = vadd.f32 0.0, %v1751
    %v1753 = vpop.f32.mrf.mxu0
    %1754 = vmatprep.mubr.bf16.mxu0 0
    %1755 = vmatmul.mubr.bf16.gmra.mxu0 %v923
    %v1756 = vpop.f32.mrf.mxu0
    %v1757 = vadd.f32 0.0, %v1756
    %v1758 = vpop.f32.mrf.mxu0
    %v1759 = vpop.f32.mrf.mxu0
    %v1760 = vadd.f32 0.0, %v1759
    %v1761 = vpop.f32.mrf.mxu0
    %1762 = vmatprep.mubr.bf16.mxu0 0
    %1763 = vmatmul.mubr.bf16.gmra.mxu0 %v926
    %v1764 = vpop.f32.mrf.mxu0
    %v1765 = vadd.f32 0.0, %v1764
    %v1766 = vpop.f32.mrf.mxu0
    %v1767 = vpop.f32.mrf.mxu0
    %v1768 = vadd.f32 0.0, %v1767
    %v1769 = vpop.f32.mrf.mxu0
    %1770 = vmatprep.mubr.bf16.mxu0 0
    %1771 = vmatmul.mubr.bf16.gmra.mxu0 %v929
    %v1772 = vpop.f32.mrf.mxu0
    %v1773 = vadd.f32 0.0, %v1772
    %v1774 = vpop.f32.mrf.mxu0
    %v1775 = vpop.f32.mrf.mxu0
    %v1776 = vadd.f32 0.0, %v1775
    %v1777 = vpop.f32.mrf.mxu0
    %1778 = vmatprep.mubr.bf16.mxu0 0
    %1779 = vmatmul.mubr.bf16.gmra.mxu0 %v932
    %v1780 = vpop.f32.mrf.mxu0
    %v1781 = vadd.f32 0.0, %v1780
    %v1782 = vpop.f32.mrf.mxu0
    %v1783 = vpop.f32.mrf.mxu0
    %v1784 = vadd.f32 0.0, %v1783
    %v1785 = vpop.f32.mrf.mxu0
    %1786 = vmatprep.mubr.bf16.mxu0 0
    %1787 = vmatmul.mubr.bf16.gmra.mxu0 %v935
    %v1788 = vpop.f32.mrf.mxu0
    %v1789 = vadd.f32 0.0, %v1788
    %v1790 = vpop.f32.mrf.mxu0
    %v1791 = vpop.f32.mrf.mxu0
    %v1792 = vadd.f32 0.0, %v1791
    %v1793 = vpop.f32.mrf.mxu0
    %1794 = vmatprep.mubr.bf16.mxu0 0
    %1795 = vmatmul.mubr.bf16.gmra.mxu0 %v938
    %v1796 = vpop.f32.mrf.mxu0
    %v1797 = vadd.f32 0.0, %v1796
    %v1798 = vpop.f32.mrf.mxu0
    %v1799 = vpop.f32.mrf.mxu0
    %v1800 = vadd.f32 0.0, %v1799
    %v1801 = vpop.f32.mrf.mxu0
    %1802 = vmatprep.mubr.bf16.mxu0 0
    %1803 = vmatmul.mubr.bf16.gmra.mxu0 %v941
    %v1804 = vpop.f32.mrf.mxu0
    %v1805 = vadd.f32 0.0, %v1804
    %v1806 = vpop.f32.mrf.mxu0
    %v1807 = vpop.f32.mrf.mxu0
    %v1808 = vadd.f32 0.0, %v1807
    %v1809 = vpop.f32.mrf.mxu0
    %1810 = vmatprep.mubr.bf16.mxu0 0
    %1811 = vmatmul.mubr.bf16.gmra.mxu0 %v944
    %v1812 = vpop.f32.mrf.mxu0
    %v1813 = vadd.f32 0.0, %v1812
    %v1814 = vpop.f32.mrf.mxu0
    %v1815 = vpop.f32.mrf.mxu0
    %v1816 = vadd.f32 0.0, %v1815
    %v1817 = vpop.f32.mrf.mxu0
    %1818 = vmatprep.mubr.bf16.mxu0 0
    %1819 = vmatmul.mubr.bf16.gmra.mxu0 %v947
    %v1820 = vpop.f32.mrf.mxu0
    %v1821 = vadd.f32 0.0, %v1820
    %v1822 = vpop.f32.mrf.mxu0
    %v1823 = vpop.f32.mrf.mxu0
    %v1824 = vadd.f32 0.0, %v1823
    %v1825 = vpop.f32.mrf.mxu0
    %1826 = vmatprep.mubr.bf16.mxu0 0
    %1827 = vmatmul.mubr.bf16.gmra.mxu0 %v950
    %v1828 = vpop.f32.mrf.mxu0
    %v1829 = vadd.f32 0.0, %v1828
    %v1830 = vpop.f32.mrf.mxu0
    %v1831 = vpop.f32.mrf.mxu0
    %v1832 = vadd.f32 0.0, %v1831
    %v1833 = vpop.f32.mrf.mxu0
    %1834 = vmatprep.mubr.bf16.mxu0 0
    %1835 = vmatmul.mubr.bf16.gmra.mxu0 %v953
    %v1836 = vpop.f32.mrf.mxu0
    %v1837 = vadd.f32 0.0, %v1836
    %v1838 = vpop.f32.mrf.mxu0
    %v1839 = vpop.f32.mrf.mxu0
    %v1840 = vadd.f32 0.0, %v1839
    %v1841 = vpop.f32.mrf.mxu0
    %1842 = vmatprep.mubr.bf16.mxu0 0
    %1843 = vmatmul.mubr.bf16.gmra.mxu0 %v956
    %v1844 = vpop.f32.mrf.mxu0
    %v1845 = vadd.f32 0.0, %v1844
    %v1846 = vpop.f32.mrf.mxu0
    %v1847 = vpop.f32.mrf.mxu0
    %v1848 = vadd.f32 0.0, %v1847
    %v1849 = vpop.f32.mrf.mxu0
    %1850 = vmatprep.mubr.bf16.mxu0 0
    %1851 = vmatmul.mubr.bf16.gmra.mxu0 %v959
    %v1852 = vpop.f32.mrf.mxu0
    %v1853 = vadd.f32 0.0, %v1852
    %v1854 = vpop.f32.mrf.mxu0
    %v1855 = vpop.f32.mrf.mxu0
    %v1856 = vadd.f32 0.0, %v1855
    %v1857 = vpop.f32.mrf.mxu0
    %1858 = vmatprep.mubr.bf16.mxu0 0
    %1859 = vmatmul.mubr.bf16.gmra.mxu0 %v962
    %v1860 = vpop.f32.mrf.mxu0
    %v1861 = vadd.f32 0.0, %v1860
    %v1862 = vpop.f32.mrf.mxu0
    %v1863 = vpop.f32.mrf.mxu0
    %v1864 = vadd.f32 0.0, %v1863
    %v1865 = vpop.f32.mrf.mxu0
    %1866 = vmatprep.mubr.bf16.mxu0 0
    %1867 = vmatmul.mubr.bf16.gmra.mxu0 %v965
    %v1868 = vpop.f32.mrf.mxu0
    %v1869 = vadd.f32 0.0, %v1868
    %v1870 = vpop.f32.mrf.mxu0
    %v1871 = vpop.f32.mrf.mxu0
    %v1872 = vadd.f32 0.0, %v1871
    %v1873 = vpop.f32.mrf.mxu0
    %1874 = vmatprep.mubr.bf16.mxu0 0
    %1875 = vmatmul.mubr.bf16.gmra.mxu0 %v968
    %v1876 = vpop.f32.mrf.mxu0
    %v1877 = vadd.f32 0.0, %v1876
    %v1878 = vpop.f32.mrf.mxu0
    %v1879 = vpop.f32.mrf.mxu0
    %v1880 = vadd.f32 0.0, %v1879
    %v1881 = vpop.f32.mrf.mxu0
    %1882 = vmatprep.mubr.bf16.mxu0 0
    %1883 = vmatmul.mubr.bf16.gmra.mxu0 %v971
    %v1884 = vpop.f32.mrf.mxu0
    %v1885 = vadd.f32 0.0, %v1884
    %v1886 = vpop.f32.mrf.mxu0
    %v1887 = vpop.f32.mrf.mxu0
    %v1888 = vadd.f32 0.0, %v1887
    %v1889 = vpop.f32.mrf.mxu0
    %1890 = vmatprep.mubr.bf16.mxu0 0
    %1891 = vmatmul.mubr.bf16.gmra.mxu0 %v974
    %v1892 = vpop.f32.mrf.mxu0
    %v1893 = vadd.f32 0.0, %v1892
    %v1894 = vpop.f32.mrf.mxu0
    %v1895 = vpop.f32.mrf.mxu0
    %v1896 = vadd.f32 0.0, %v1895
    %v1897 = vpop.f32.mrf.mxu0
    %1898 = vmatprep.mubr.bf16.mxu0 0
    %1899 = vmatmul.mubr.bf16.gmra.mxu0 %v977
    %v1900 = vpop.f32.mrf.mxu0
    %v1901 = vadd.f32 0.0, %v1900
    %v1902 = vpop.f32.mrf.mxu0
    %v1903 = vpop.f32.mrf.mxu0
    %v1904 = vadd.f32 0.0, %v1903
    %v1905 = vpop.f32.mrf.mxu0
    %1906 = vmatprep.mubr.bf16.mxu0 0
    %1907 = vmatmul.mubr.bf16.gmra.mxu0 %v980
    %v1908 = vpop.f32.mrf.mxu0
    %v1909 = vadd.f32 0.0, %v1908
    %v1910 = vpop.f32.mrf.mxu0
    %v1911 = vpop.f32.mrf.mxu0
    %v1912 = vadd.f32 0.0, %v1911
    %v1913 = vpop.f32.mrf.mxu0
    %1914 = vmatprep.mubr.bf16.mxu0 0
    %1915 = vmatmul.mubr.bf16.gmra.mxu0 %v983
    %v1916 = vpop.f32.mrf.mxu0
    %v1917 = vadd.f32 0.0, %v1916
    %v1918 = vpop.f32.mrf.mxu0
    %v1919 = vpop.f32.mrf.mxu0
    %v1920 = vadd.f32 0.0, %v1919
    %v1921 = vpop.f32.mrf.mxu0
    %1922 = vmatprep.mubr.bf16.mxu0 0
    %1923 = vmatmul.mubr.bf16.gmra.mxu0 %v986
    %v1924 = vpop.f32.mrf.mxu0
    %v1925 = vadd.f32 0.0, %v1924
    %v1926 = vpop.f32.mrf.mxu0
    %v1927 = vpop.f32.mrf.mxu0
    %v1928 = vadd.f32 0.0, %v1927
    %v1929 = vpop.f32.mrf.mxu0
    %1930 = vmatprep.mubr.bf16.mxu0 0
    %1931 = vmatmul.mubr.bf16.gmra.mxu0 %v989
    %v1932 = vpop.f32.mrf.mxu0
    %v1933 = vadd.f32 0.0, %v1932
    %v1934 = vpop.f32.mrf.mxu0
    %v1935 = vpop.f32.mrf.mxu0
    %v1936 = vadd.f32 0.0, %v1935
    %v1937 = vpop.f32.mrf.mxu0
    %1938 = vmatprep.mubr.bf16.mxu0 0
    %1939 = vmatmul.mubr.bf16.gmra.mxu0 %v992
    %v1940 = vpop.f32.mrf.mxu0
    %v1941 = vadd.f32 0.0, %v1940
    %v1942 = vpop.f32.mrf.mxu0
    %v1943 = vpop.f32.mrf.mxu0
    %v1944 = vadd.f32 0.0, %v1943
    %v1945 = vpop.f32.mrf.mxu0
    %1946 = vmatprep.mubr.bf16.mxu0 0
    %1947 = vmatmul.mubr.bf16.gmra.mxu0 %v995
    %v1948 = vpop.f32.mrf.mxu0
    %v1949 = vadd.f32 0.0, %v1948
    %v1950 = vpop.f32.mrf.mxu0
    %v1951 = vpop.f32.mrf.mxu0
    %v1952 = vadd.f32 0.0, %v1951
    %v1953 = vpop.f32.mrf.mxu0
    %1954 = vmatprep.mubr.bf16.mxu0 0
    %1955 = vmatmul.mubr.bf16.gmra.mxu0 %v998
    %v1956 = vpop.f32.mrf.mxu0
    %v1957 = vadd.f32 0.0, %v1956
    %v1958 = vpop.f32.mrf.mxu0
    %v1959 = vpop.f32.mrf.mxu0
    %v1960 = vadd.f32 0.0, %v1959
    %v1961 = vpop.f32.mrf.mxu0
    %1962 = vmatprep.mubr.bf16.mxu0 0
    %1963 = vmatmul.mubr.bf16.gmra.mxu0 %v1001
    %v1964 = vpop.f32.mrf.mxu0
    %v1965 = vadd.f32 0.0, %v1964
    %v1966 = vpop.f32.mrf.mxu0
    %v1967 = vpop.f32.mrf.mxu0
    %v1968 = vadd.f32 0.0, %v1967
    %v1969 = vpop.f32.mrf.mxu0
    %1970 = vmatprep.mubr.bf16.mxu0 0
    %1971 = vmatmul.mubr.bf16.gmra.mxu0 %v1004
    %v1972 = vpop.f32.mrf.mxu0
    %v1973 = vadd.f32 0.0, %v1972
    %v1974 = vpop.f32.mrf.mxu0
    %v1975 = vpop.f32.mrf.mxu0
    %v1976 = vadd.f32 0.0, %v1975
    %v1977 = vpop.f32.mrf.mxu0
    %1978 = vmatprep.mubr.bf16.mxu0 0
    %1979 = vmatmul.mubr.bf16.gmra.mxu0 %v1007
    %v1980 = vpop.f32.mrf.mxu0
    %v1981 = vadd.f32 0.0, %v1980
    %v1982 = vpop.f32.mrf.mxu0
    %v1983 = vpop.f32.mrf.mxu0
    %v1984 = vpop.f32.mrf.mxu0
    %1985 = vdwg.mxu0
    %v1986 = vmax.f32 %v1610, %v1733
    %v1987 = vmax.f32 %v1611, %v1736
    %v1988 = vmax.f32 %v1612, %v1741
    %v1989 = vmax.f32 %v1613, %v1744
    %v1990 = vmax.f32 %v1614, %v1749
    %v1991 = vmax.f32 %v1615, %v1752
    %v1992 = vmax.f32 %v1616, %v1757
    %v1993 = vmax.f32 %v1617, %v1760
    %v1994 = vmax.f32 %v1618, %v1765
    %v1995 = vmax.f32 %v1619, %v1768
    %v1996 = vmax.f32 %v1620, %v1773
    %v1997 = vmax.f32 %v1621, %v1776
    %v1998 = vmax.f32 %v1622, %v1781
    %v1999 = vmax.f32 %v1623, %v1784
    %v2000 = vmax.f32 %v1624, %v1789
    %v2001 = vmax.f32 %v1625, %v1792
    %v2002 = vmax.f32 %v1626, %v1797
    %v2003 = vmax.f32 %v1627, %v1800
    %v2004 = vmax.f32 %v1628, %v1805
    %v2005 = vmax.f32 %v1629, %v1808
    %v2006 = vmax.f32 %v1630, %v1813
    %v2007 = vmax.f32 %v1631, %v1816
    %v2008 = vmax.f32 %v1632, %v1821
    %v2009 = vmax.f32 %v1633, %v1824
    %v2010 = vmax.f32 %v1634, %v1829
    %v2011 = vmax.f32 %v1635, %v1832
    %v2012 = vmax.f32 %v1636, %v1837
    %v2013 = vmax.f32 %v1637, %v1840
    %v2014 = vmax.f32 %v1638, %v1845
    %v2015 = vmax.f32 %v1639, %v1848
    %v2016 = vmax.f32 %v1640, %v1853
    %v2017 = vmax.f32 %v1641, %v1856
    %v2018 = vmax.f32 %v1642, %v1861
    %v2019 = vmax.f32 %v1643, %v1864
    %v2020 = vmax.f32 %v1644, %v1869
    %v2021 = vmax.f32 %v1645, %v1872
    %v2022 = vmax.f32 %v1646, %v1877
    %v2023 = vmax.f32 %v1647, %v1880
    %v2024 = vmax.f32 %v1648, %v1885
    %v2025 = vmax.f32 %v1649, %v1888
    %v2026 = vmax.f32 %v1650, %v1893
    %v2027 = vmax.f32 %v1651, %v1896
    %v2028 = vmax.f32 %v1652, %v1901
    %v2029 = vmax.f32 %v1653, %v1904
    %v2030 = vmax.f32 %v1654, %v1909
    %v2031 = vmax.f32 %v1655, %v1912
    %v2032 = vmax.f32 %v1656, %v1917
    %v2033 = vmax.f32 %v1657, %v1920
    %v2034 = vmax.f32 %v1658, %v1925
    %v2035 = vmax.f32 %v1659, %v1928
    %v2036 = vmax.f32 %v1660, %v1933
    %v2037 = vmax.f32 %v1661, %v1936
    %v2038 = vmax.f32 %v1662, %v1941
    %v2039 = vmax.f32 %v1663, %v1944
    %v2040 = vmax.f32 %v1664, %v1949
    %v2041 = vmax.f32 %v1665, %v1952
    %v2042 = vmax.f32 %v1666, %v1957
    %v2043 = vmax.f32 %v1667, %v1960
    %v2044 = vmax.f32 %v1668, %v1965
    %v2045 = vmax.f32 %v1669, %v1968
    %v2046 = vmax.f32 %v1670, %v1973
    %v2047 = vmax.f32 %v1671, %v1976
    %v2048 = vmax.f32 %v1672, %v1981
    %v2049 = vpack.c.bf16 %v1987, %v1986
    %v2050 = vpack.c.bf16 %v1989, %v1988
    %v2051 = vpack.c.bf16 %v1991, %v1990
    %v2052 = vpack.c.bf16 %v1993, %v1992
    %v2053 = vpack.c.bf16 %v1995, %v1994
    %v2054 = vpack.c.bf16 %v1997, %v1996
    %v2055 = vpack.c.bf16 %v1999, %v1998
    %v2056 = vpack.c.bf16 %v2001, %v2000
    %v2057 = vpack.c.bf16 %v2003, %v2002
    %v2058 = vpack.c.bf16 %v2005, %v2004
    %v2059 = vpack.c.bf16 %v2007, %v2006
    %v2060 = vpack.c.bf16 %v2009, %v2008
    %v2061 = vpack.c.bf16 %v2011, %v2010
    %v2062 = vpack.c.bf16 %v2013, %v2012
    %v2063 = vpack.c.bf16 %v2015, %v2014
    %v2064 = vpack.c.bf16 %v2017, %v2016
    %v2065 = vpack.c.bf16 %v2019, %v2018
    %v2066 = vpack.c.bf16 %v2021, %v2020
    %v2067 = vpack.c.bf16 %v2023, %v2022
    %v2068 = vpack.c.bf16 %v2025, %v2024
    %v2069 = vpack.c.bf16 %v2027, %v2026
    %v2070 = vpack.c.bf16 %v2029, %v2028
    %v2071 = vpack.c.bf16 %v2031, %v2030
    %v2072 = vpack.c.bf16 %v2033, %v2032
    %v2073 = vpack.c.bf16 %v2035, %v2034
    %v2074 = vpack.c.bf16 %v2037, %v2036
    %v2075 = vpack.c.bf16 %v2039, %v2038
    %v2076 = vpack.c.bf16 %v2041, %v2040
    %v2077 = vpack.c.bf16 %v2043, %v2042
    %v2078 = vpack.c.bf16 %v2045, %v2044
    %v2079 = vpack.c.bf16 %v2047, %v2046
    %v2080 = vpack.c.bf16 %v2048, %v2048
    %v2081 = vld [vmem:[%s4] sm:$0xf]
    %v2082 = vld [vmem:[%s4 + $0x4] sm:$0xf]
    %s2083 = scalar_lea.vmem %s4, 8
    %v2084 = vld [vmem:[%s2083] sm:$0xf]
    %v2085 = vld [vmem:[%s2083 + $0x4] sm:$0xf]
    %vm2086 = vsmask.f32 7424
    %v2088 = vshrl.u32 %v2049, 16
    %v2090 = vshll.u32 %v2049, 16
    %v2092 = vrot.slane %v2090, 1
    %v2093 = vor.u32 %v2088, %v2092
    %v2095 = vshll.u32 %v2050, 16
    %v2097 = vrot.slane %v2095, 1
    %v2098 = vsel %vm2086, %v2093, %v2097
    %v2099 = vshrl.u32 %v2050, 16
    %v2101 = vor.u32 %v2099, %v2097
    %v2103 = vshll.u32 %v2051, 16
    %v2105 = vrot.slane %v2103, 1
    %v2106 = vsel %vm2086, %v2101, %v2105
    %v2107 = vshrl.u32 %v2051, 16
    %v2109 = vor.u32 %v2107, %v2105
    %v2111 = vshll.u32 %v2052, 16
    %v2113 = vrot.slane %v2111, 1
    %v2114 = vsel %vm2086, %v2109, %v2113
    %v2115 = vshrl.u32 %v2052, 16
    %v2117 = vor.u32 %v2115, %v2113
    %v2119 = vshll.u32 %v2053, 16
    %v2121 = vrot.slane %v2119, 1
    %v2122 = vsel %vm2086, %v2117, %v2121
    %v2123 = vshrl.u32 %v2053, 16
    %v2125 = vor.u32 %v2123, %v2121
    %v2127 = vshll.u32 %v2054, 16
    %v2129 = vrot.slane %v2127, 1
    %v2130 = vsel %vm2086, %v2125, %v2129
    %v2131 = vshrl.u32 %v2054, 16
    %v2133 = vor.u32 %v2131, %v2129
    %v2135 = vshll.u32 %v2055, 16
    %v2137 = vrot.slane %v2135, 1
    %v2138 = vsel %vm2086, %v2133, %v2137
    %v2139 = vshrl.u32 %v2055, 16
    %v2141 = vor.u32 %v2139, %v2137
    %v2143 = vshll.u32 %v2056, 16
    %v2145 = vrot.slane %v2143, 1
    %v2146 = vsel %vm2086, %v2141, %v2145
    %v2147 = vshrl.u32 %v2056, 16
    %v2149 = vor.u32 %v2147, %v2145
    %v2151 = vshll.u32 %v2057, 16
    %v2153 = vrot.slane %v2151, 1
    %v2154 = vsel %vm2086, %v2149, %v2153
    %v2155 = vshrl.u32 %v2057, 16
    %v2157 = vor.u32 %v2155, %v2153
    %v2159 = vshll.u32 %v2058, 16
    %v2161 = vrot.slane %v2159, 1
    %v2162 = vsel %vm2086, %v2157, %v2161
    %v2163 = vshrl.u32 %v2058, 16
    %v2165 = vor.u32 %v2163, %v2161
    %v2167 = vshll.u32 %v2059, 16
    %v2169 = vrot.slane %v2167, 1
    %v2170 = vsel %vm2086, %v2165, %v2169
    %v2171 = vshrl.u32 %v2059, 16
    %v2173 = vor.u32 %v2171, %v2169
    %v2175 = vshll.u32 %v2060, 16
    %v2177 = vrot.slane %v2175, 1
    %v2178 = vsel %vm2086, %v2173, %v2177
    %v2179 = vshrl.u32 %v2060, 16
    %v2181 = vor.u32 %v2179, %v2177
    %v2183 = vshll.u32 %v2061, 16
    %v2185 = vrot.slane %v2183, 1
    %v2186 = vsel %vm2086, %v2181, %v2185
    %v2187 = vshrl.u32 %v2061, 16
    %v2189 = vor.u32 %v2187, %v2185
    %v2191 = vshll.u32 %v2062, 16
    %v2193 = vrot.slane %v2191, 1
    %v2194 = vsel %vm2086, %v2189, %v2193
    %v2195 = vshrl.u32 %v2062, 16
    %v2197 = vor.u32 %v2195, %v2193
    %v2199 = vshll.u32 %v2063, 16
    %v2201 = vrot.slane %v2199, 1
    %v2202 = vsel %vm2086, %v2197, %v2201
    %v2203 = vshrl.u32 %v2063, 16
    %v2205 = vor.u32 %v2203, %v2201
    %v2207 = vshll.u32 %v2064, 16
    %v2209 = vrot.slane %v2207, 1
    %v2210 = vsel %vm2086, %v2205, %v2209
    %v2211 = vshrl.u32 %v2064, 16
    %v2213 = vor.u32 %v2211, %v2209
    %v2215 = vshll.u32 %v2065, 16
    %v2217 = vrot.slane %v2215, 1
    %v2218 = vsel %vm2086, %v2213, %v2217
    %v2219 = vshrl.u32 %v2065, 16
    %v2221 = vor.u32 %v2219, %v2217
    %v2223 = vshll.u32 %v2066, 16
    %v2225 = vrot.slane %v2223, 1
    %v2226 = vsel %vm2086, %v2221, %v2225
    %v2227 = vshrl.u32 %v2066, 16
    %v2229 = vor.u32 %v2227, %v2225
    %v2231 = vshll.u32 %v2067, 16
    %v2233 = vrot.slane %v2231, 1
    %v2234 = vsel %vm2086, %v2229, %v2233
    %v2235 = vshrl.u32 %v2067, 16
    %v2237 = vor.u32 %v2235, %v2233
    %v2239 = vshll.u32 %v2068, 16
    %v2241 = vrot.slane %v2239, 1
    %v2242 = vsel %vm2086, %v2237, %v2241
    %v2243 = vshrl.u32 %v2068, 16
    %v2245 = vor.u32 %v2243, %v2241
    %v2247 = vshll.u32 %v2069, 16
    %v2249 = vrot.slane %v2247, 1
    %v2250 = vsel %vm2086, %v2245, %v2249
    %v2251 = vshrl.u32 %v2069, 16
    %v2253 = vor.u32 %v2251, %v2249
    %v2255 = vshll.u32 %v2070, 16
    %v2257 = vrot.slane %v2255, 1
    %v2258 = vsel %vm2086, %v2253, %v2257
    %v2259 = vshrl.u32 %v2070, 16
    %v2261 = vor.u32 %v2259, %v2257
    %v2263 = vshll.u32 %v2071, 16
    %v2265 = vrot.slane %v2263, 1
    %v2266 = vsel %vm2086, %v2261, %v2265
    %v2267 = vshrl.u32 %v2071, 16
    %v2269 = vor.u32 %v2267, %v2265
    %v2271 = vshll.u32 %v2072, 16
    %v2273 = vrot.slane %v2271, 1
    %v2274 = vsel %vm2086, %v2269, %v2273
    %v2275 = vshrl.u32 %v2072, 16
    %v2277 = vor.u32 %v2275, %v2273
    %v2279 = vshll.u32 %v2073, 16
    %v2281 = vrot.slane %v2279, 1
    %v2282 = vsel %vm2086, %v2277, %v2281
    %v2283 = vshrl.u32 %v2073, 16
    %v2285 = vor.u32 %v2283, %v2281
    %v2287 = vshll.u32 %v2074, 16
    %v2289 = vrot.slane %v2287, 1
    %v2290 = vsel %vm2086, %v2285, %v2289
    %v2291 = vshrl.u32 %v2074, 16
    %v2293 = vor.u32 %v2291, %v2289
    %v2295 = vshll.u32 %v2075, 16
    %v2297 = vrot.slane %v2295, 1
    %v2298 = vsel %vm2086, %v2293, %v2297
    %v2299 = vshrl.u32 %v2075, 16
    %v2301 = vor.u32 %v2299, %v2297
    %v2303 = vshll.u32 %v2076, 16
    %v2305 = vrot.slane %v2303, 1
    %v2306 = vsel %vm2086, %v2301, %v2305
    %v2307 = vshrl.u32 %v2076, 16
    %v2309 = vor.u32 %v2307, %v2305
    %v2311 = vshll.u32 %v2077, 16
    %v2313 = vrot.slane %v2311, 1
    %v2314 = vsel %vm2086, %v2309, %v2313
    %v2315 = vshrl.u32 %v2077, 16
    %v2317 = vor.u32 %v2315, %v2313
    %v2319 = vshll.u32 %v2078, 16
    %v2321 = vrot.slane %v2319, 1
    %v2322 = vsel %vm2086, %v2317, %v2321
    %v2323 = vshrl.u32 %v2078, 16
    %v2325 = vor.u32 %v2323, %v2321
    %v2327 = vshll.u32 %v2079, 16
    %v2329 = vrot.slane %v2327, 1
    %v2330 = vsel %vm2086, %v2325, %v2329
    %v2331 = vshrl.u32 %v2079, 16
    %v2333 = vor.u32 %v2331, %v2329
    %v2335 = vshll.u32 %v2080, 16
    %v2337 = vrot.slane %v2335, 1
    %v2338 = vsel %vm2086, %v2333, %v2337
    %v2339 = vshrl.u32 %v2080, 16
    %v2341 = vor.u32 %v2339, %v2337
    %v2344 = vunpack.c.l.b16 %v2084
    %v2345 = vunpack.c.l.b16 %v2085
    %v2346 = vpack.c.b16 %v2345, %v2344
    %vm2348 = vcmask 130048
    %v2350 = vsel %vm2348, %v2098, 0
    %v2353 = vsel %vm2348, %v2106, 0
    %v2356 = vsel %vm2348, %v2114, 0
    %v2359 = vsel %vm2348, %v2122, 0
    %v2362 = vsel %vm2348, %v2130, 0
    %v2365 = vsel %vm2348, %v2138, 0
    %v2368 = vsel %vm2348, %v2146, 0
    %v2371 = vsel %vm2348, %v2154, 0
    %v2374 = vsel %vm2348, %v2162, 0
    %v2377 = vsel %vm2348, %v2170, 0
    %v2380 = vsel %vm2348, %v2178, 0
    %v2383 = vsel %vm2348, %v2186, 0
    %v2386 = vsel %vm2348, %v2194, 0
    %v2389 = vsel %vm2348, %v2202, 0
    %v2392 = vsel %vm2348, %v2210, 0
    %v2395 = vsel %vm2348, %v2218, 0
    %v2398 = vsel %vm2348, %v2226, 0
    %v2401 = vsel %vm2348, %v2234, 0
    %v2404 = vsel %vm2348, %v2242, 0
    %v2407 = vsel %vm2348, %v2250, 0
    %v2410 = vsel %vm2348, %v2258, 0
    %v2413 = vsel %vm2348, %v2266, 0
    %v2416 = vsel %vm2348, %v2274, 0
    %v2419 = vsel %vm2348, %v2282, 0
    %v2422 = vsel %vm2348, %v2290, 0
    %v2425 = vsel %vm2348, %v2298, 0
    %v2428 = vsel %vm2348, %v2306, 0
    %v2431 = vsel %vm2348, %v2314, 0
    %v2434 = vsel %vm2348, %v2322, 0
    %v2437 = vsel %vm2348, %v2330, 0
    %v2440 = vsel %vm2348, %v2338, 0
    %v2443 = vsel %vm2348, %v2341, 0
    %2445 = vmatprep.subr.bf16.mxu0 0
    %2446 = vmatpush1.bf16.msra.mxu0 0
    %2447 = vmatprep.subr.bf16.mxu0 0
    %2448 = vmatpush1.bf16.msra.mxu0 0
    %2449 = vmatprep.subr.bf16.mxu0 0
    %2450 = vmatpush1.bf16.msra.mxu0 0
    %2451 = vmatprep.subr.bf16.mxu0 0
    %2452 = vmatpush1.bf16.msra.mxu0 0
    %2453 = vmatprep.subr.bf16.mxu0 0
    %2454 = vmatpush1.bf16.msra.mxu0 0
    %2455 = vmatprep.subr.bf16.mxu0 0
    %2456 = vmatpush1.bf16.msra.mxu0 0
    %2457 = vmatprep.subr.bf16.mxu0 0
    %2458 = vmatpush1.bf16.msra.mxu0 0
    %2459 = vmatprep.subr.bf16.mxu0 0
    %2460 = vmatpush1.bf16.msra.mxu0 %v2346
    %2461 = vmatprep.subr.bf16.mxu0 0
    %2462 = vmatpush2.bf16.msra.mxu0 0
    %2463 = vmatprep.subr.bf16.mxu0 0
    %2464 = vmatpush2.bf16.msra.mxu0 0
    %2465 = vmatprep.subr.bf16.mxu0 0
    %2466 = vmatpush2.bf16.msra.mxu0 0
    %2467 = vmatprep.subr.bf16.mxu0 0
    %2468 = vmatpush2.bf16.msra.mxu0 0
    %2469 = vmatprep.subr.bf16.mxu0 0
    %2470 = vmatpush2.bf16.msra.mxu0 0
    %2471 = vmatprep.subr.bf16.mxu0 0
    %2472 = vmatpush2.bf16.msra.mxu0 0
    %2473 = vmatprep.subr.bf16.mxu0 0
    %2474 = vmatpush2.bf16.msra.mxu0 0
    %2475 = vmatprep.subr.bf16.mxu0 0
    %2476 = vmatpush2.bf16.msra.mxu0 0
    %2477 = vmatprep.mubr.bf16.mxu0 0
    %2478 = vmatmul.mubr.bf16.gmra.mxu0 %v2350
    %v2479 = vpop.f32.mrf.mxu0
    %v2480 = vadd.f32 0.0, %v2479
    %v2481 = vpop.f32.mrf.mxu0
    %v2482 = vpop.f32.mrf.mxu0
    %v2483 = vadd.f32 0.0, %v2482
    %v2484 = vpop.f32.mrf.mxu0
    %2485 = vmatprep.mubr.bf16.mxu0 0
    %2486 = vmatmul.mubr.bf16.gmra.mxu0 %v2353
    %v2487 = vpop.f32.mrf.mxu0
    %v2488 = vadd.f32 0.0, %v2487
    %v2489 = vpop.f32.mrf.mxu0
    %v2490 = vpop.f32.mrf.mxu0
    %v2491 = vadd.f32 0.0, %v2490
    %v2492 = vpop.f32.mrf.mxu0
    %2493 = vmatprep.mubr.bf16.mxu0 0
    %2494 = vmatmul.mubr.bf16.gmra.mxu0 %v2356
    %v2495 = vpop.f32.mrf.mxu0
    %v2496 = vadd.f32 0.0, %v2495
    %v2497 = vpop.f32.mrf.mxu0
    %v2498 = vpop.f32.mrf.mxu0
    %v2499 = vadd.f32 0.0, %v2498
    %v2500 = vpop.f32.mrf.mxu0
    %2501 = vmatprep.mubr.bf16.mxu0 0
    %2502 = vmatmul.mubr.bf16.gmra.mxu0 %v2359
    %v2503 = vpop.f32.mrf.mxu0
    %v2504 = vadd.f32 0.0, %v2503
    %v2505 = vpop.f32.mrf.mxu0
    %v2506 = vpop.f32.mrf.mxu0
    %v2507 = vadd.f32 0.0, %v2506
    %v2508 = vpop.f32.mrf.mxu0
    %2509 = vmatprep.mubr.bf16.mxu0 0
    %2510 = vmatmul.mubr.bf16.gmra.mxu0 %v2362
    %v2511 = vpop.f32.mrf.mxu0
    %v2512 = vadd.f32 0.0, %v2511
    %v2513 = vpop.f32.mrf.mxu0
    %v2514 = vpop.f32.mrf.mxu0
    %v2515 = vadd.f32 0.0, %v2514
    %v2516 = vpop.f32.mrf.mxu0
    %2517 = vmatprep.mubr.bf16.mxu0 0
    %2518 = vmatmul.mubr.bf16.gmra.mxu0 %v2365
    %v2519 = vpop.f32.mrf.mxu0
    %v2520 = vadd.f32 0.0, %v2519
    %v2521 = vpop.f32.mrf.mxu0
    %v2522 = vpop.f32.mrf.mxu0
    %v2523 = vadd.f32 0.0, %v2522
    %v2524 = vpop.f32.mrf.mxu0
    %2525 = vmatprep.mubr.bf16.mxu0 0
    %2526 = vmatmul.mubr.bf16.gmra.mxu0 %v2368
    %v2527 = vpop.f32.mrf.mxu0
    %v2528 = vadd.f32 0.0, %v2527
    %v2529 = vpop.f32.mrf.mxu0
    %v2530 = vpop.f32.mrf.mxu0
    %v2531 = vadd.f32 0.0, %v2530
    %v2532 = vpop.f32.mrf.mxu0
    %2533 = vmatprep.mubr.bf16.mxu0 0
    %2534 = vmatmul.mubr.bf16.gmra.mxu0 %v2371
    %v2535 = vpop.f32.mrf.mxu0
    %v2536 = vadd.f32 0.0, %v2535
    %v2537 = vpop.f32.mrf.mxu0
    %v2538 = vpop.f32.mrf.mxu0
    %v2539 = vadd.f32 0.0, %v2538
    %v2540 = vpop.f32.mrf.mxu0
    %2541 = vmatprep.mubr.bf16.mxu0 0
    %2542 = vmatmul.mubr.bf16.gmra.mxu0 %v2374
    %v2543 = vpop.f32.mrf.mxu0
    %v2544 = vadd.f32 0.0, %v2543
    %v2545 = vpop.f32.mrf.mxu0
    %v2546 = vpop.f32.mrf.mxu0
    %v2547 = vadd.f32 0.0, %v2546
    %v2548 = vpop.f32.mrf.mxu0
    %2549 = vmatprep.mubr.bf16.mxu0 0
    %2550 = vmatmul.mubr.bf16.gmra.mxu0 %v2377
    %v2551 = vpop.f32.mrf.mxu0
    %v2552 = vadd.f32 0.0, %v2551
    %v2553 = vpop.f32.mrf.mxu0
    %v2554 = vpop.f32.mrf.mxu0
    %v2555 = vadd.f32 0.0, %v2554
    %v2556 = vpop.f32.mrf.mxu0
    %2557 = vmatprep.mubr.bf16.mxu0 0
    %2558 = vmatmul.mubr.bf16.gmra.mxu0 %v2380
    %v2559 = vpop.f32.mrf.mxu0
    %v2560 = vadd.f32 0.0, %v2559
    %v2561 = vpop.f32.mrf.mxu0
    %v2562 = vpop.f32.mrf.mxu0
    %v2563 = vadd.f32 0.0, %v2562
    %v2564 = vpop.f32.mrf.mxu0
    %2565 = vmatprep.mubr.bf16.mxu0 0
    %2566 = vmatmul.mubr.bf16.gmra.mxu0 %v2383
    %v2567 = vpop.f32.mrf.mxu0
    %v2568 = vadd.f32 0.0, %v2567
    %v2569 = vpop.f32.mrf.mxu0
    %v2570 = vpop.f32.mrf.mxu0
    %v2571 = vadd.f32 0.0, %v2570
    %v2572 = vpop.f32.mrf.mxu0
    %2573 = vmatprep.mubr.bf16.mxu0 0
    %2574 = vmatmul.mubr.bf16.gmra.mxu0 %v2386
    %v2575 = vpop.f32.mrf.mxu0
    %v2576 = vadd.f32 0.0, %v2575
    %v2577 = vpop.f32.mrf.mxu0
    %v2578 = vpop.f32.mrf.mxu0
    %v2579 = vadd.f32 0.0, %v2578
    %v2580 = vpop.f32.mrf.mxu0
    %2581 = vmatprep.mubr.bf16.mxu0 0
    %2582 = vmatmul.mubr.bf16.gmra.mxu0 %v2389
    %v2583 = vpop.f32.mrf.mxu0
    %v2584 = vadd.f32 0.0, %v2583
    %v2585 = vpop.f32.mrf.mxu0
    %v2586 = vpop.f32.mrf.mxu0
    %v2587 = vadd.f32 0.0, %v2586
    %v2588 = vpop.f32.mrf.mxu0
    %2589 = vmatprep.mubr.bf16.mxu0 0
    %2590 = vmatmul.mubr.bf16.gmra.mxu0 %v2392
    %v2591 = vpop.f32.mrf.mxu0
    %v2592 = vadd.f32 0.0, %v2591
    %v2593 = vpop.f32.mrf.mxu0
    %v2594 = vpop.f32.mrf.mxu0
    %v2595 = vadd.f32 0.0, %v2594
    %v2596 = vpop.f32.mrf.mxu0
    %2597 = vmatprep.mubr.bf16.mxu0 0
    %2598 = vmatmul.mubr.bf16.gmra.mxu0 %v2395
    %v2599 = vpop.f32.mrf.mxu0
    %v2600 = vadd.f32 0.0, %v2599
    %v2601 = vpop.f32.mrf.mxu0
    %v2602 = vpop.f32.mrf.mxu0
    %v2603 = vadd.f32 0.0, %v2602
    %v2604 = vpop.f32.mrf.mxu0
    %2605 = vmatprep.mubr.bf16.mxu0 0
    %2606 = vmatmul.mubr.bf16.gmra.mxu0 %v2398
    %v2607 = vpop.f32.mrf.mxu0
    %v2608 = vadd.f32 0.0, %v2607
    %v2609 = vpop.f32.mrf.mxu0
    %v2610 = vpop.f32.mrf.mxu0
    %v2611 = vadd.f32 0.0, %v2610
    %v2612 = vpop.f32.mrf.mxu0
    %2613 = vmatprep.mubr.bf16.mxu0 0
    %2614 = vmatmul.mubr.bf16.gmra.mxu0 %v2401
    %v2615 = vpop.f32.mrf.mxu0
    %v2616 = vadd.f32 0.0, %v2615
    %v2617 = vpop.f32.mrf.mxu0
    %v2618 = vpop.f32.mrf.mxu0
    %v2619 = vadd.f32 0.0, %v2618
    %v2620 = vpop.f32.mrf.mxu0
    %2621 = vmatprep.mubr.bf16.mxu0 0
    %2622 = vmatmul.mubr.bf16.gmra.mxu0 %v2404
    %v2623 = vpop.f32.mrf.mxu0
    %v2624 = vadd.f32 0.0, %v2623
    %v2625 = vpop.f32.mrf.mxu0
    %v2626 = vpop.f32.mrf.mxu0
    %v2627 = vadd.f32 0.0, %v2626
    %v2628 = vpop.f32.mrf.mxu0
    %2629 = vmatprep.mubr.bf16.mxu0 0
    %2630 = vmatmul.mubr.bf16.gmra.mxu0 %v2407
    %v2631 = vpop.f32.mrf.mxu0
    %v2632 = vadd.f32 0.0, %v2631
    %v2633 = vpop.f32.mrf.mxu0
    %v2634 = vpop.f32.mrf.mxu0
    %v2635 = vadd.f32 0.0, %v2634
    %v2636 = vpop.f32.mrf.mxu0
    %2637 = vmatprep.mubr.bf16.mxu0 0
    %2638 = vmatmul.mubr.bf16.gmra.mxu0 %v2410
    %v2639 = vpop.f32.mrf.mxu0
    %v2640 = vadd.f32 0.0, %v2639
    %v2641 = vpop.f32.mrf.mxu0
    %v2642 = vpop.f32.mrf.mxu0
    %v2643 = vadd.f32 0.0, %v2642
    %v2644 = vpop.f32.mrf.mxu0
    %2645 = vmatprep.mubr.bf16.mxu0 0
    %2646 = vmatmul.mubr.bf16.gmra.mxu0 %v2413
    %v2647 = vpop.f32.mrf.mxu0
    %v2648 = vadd.f32 0.0, %v2647
    %v2649 = vpop.f32.mrf.mxu0
    %v2650 = vpop.f32.mrf.mxu0
    %v2651 = vadd.f32 0.0, %v2650
    %v2652 = vpop.f32.mrf.mxu0
    %2653 = vmatprep.mubr.bf16.mxu0 0
    %2654 = vmatmul.mubr.bf16.gmra.mxu0 %v2416
    %v2655 = vpop.f32.mrf.mxu0
    %v2656 = vadd.f32 0.0, %v2655
    %v2657 = vpop.f32.mrf.mxu0
    %v2658 = vpop.f32.mrf.mxu0
    %v2659 = vadd.f32 0.0, %v2658
    %v2660 = vpop.f32.mrf.mxu0
    %2661 = vmatprep.mubr.bf16.mxu0 0
    %2662 = vmatmul.mubr.bf16.gmra.mxu0 %v2419
    %v2663 = vpop.f32.mrf.mxu0
    %v2664 = vadd.f32 0.0, %v2663
    %v2665 = vpop.f32.mrf.mxu0
    %v2666 = vpop.f32.mrf.mxu0
    %v2667 = vadd.f32 0.0, %v2666
    %v2668 = vpop.f32.mrf.mxu0
    %2669 = vmatprep.mubr.bf16.mxu0 0
    %2670 = vmatmul.mubr.bf16.gmra.mxu0 %v2422
    %v2671 = vpop.f32.mrf.mxu0
    %v2672 = vadd.f32 0.0, %v2671
    %v2673 = vpop.f32.mrf.mxu0
    %v2674 = vpop.f32.mrf.mxu0
    %v2675 = vadd.f32 0.0, %v2674
    %v2676 = vpop.f32.mrf.mxu0
    %2677 = vmatprep.mubr.bf16.mxu0 0
    %2678 = vmatmul.mubr.bf16.gmra.mxu0 %v2425
    %v2679 = vpop.f32.mrf.mxu0
    %v2680 = vadd.f32 0.0, %v2679
    %v2681 = vpop.f32.mrf.mxu0
    %v2682 = vpop.f32.mrf.mxu0
    %v2683 = vadd.f32 0.0, %v2682
    %v2684 = vpop.f32.mrf.mxu0
    %2685 = vmatprep.mubr.bf16.mxu0 0
    %2686 = vmatmul.mubr.bf16.gmra.mxu0 %v2428
    %v2687 = vpop.f32.mrf.mxu0
    %v2688 = vadd.f32 0.0, %v2687
    %v2689 = vpop.f32.mrf.mxu0
    %v2690 = vpop.f32.mrf.mxu0
    %v2691 = vadd.f32 0.0, %v2690
    %v2692 = vpop.f32.mrf.mxu0
    %2693 = vmatprep.mubr.bf16.mxu0 0
    %2694 = vmatmul.mubr.bf16.gmra.mxu0 %v2431
    %v2695 = vpop.f32.mrf.mxu0
    %v2696 = vadd.f32 0.0, %v2695
    %v2697 = vpop.f32.mrf.mxu0
    %v2698 = vpop.f32.mrf.mxu0
    %v2699 = vadd.f32 0.0, %v2698
    %v2700 = vpop.f32.mrf.mxu0
    %2701 = vmatprep.mubr.bf16.mxu0 0
    %2702 = vmatmul.mubr.bf16.gmra.mxu0 %v2434
    %v2703 = vpop.f32.mrf.mxu0
    %v2704 = vadd.f32 0.0, %v2703
    %v2705 = vpop.f32.mrf.mxu0
    %v2706 = vpop.f32.mrf.mxu0
    %v2707 = vadd.f32 0.0, %v2706
    %v2708 = vpop.f32.mrf.mxu0
    %2709 = vmatprep.mubr.bf16.mxu0 0
    %2710 = vmatmul.mubr.bf16.gmra.mxu0 %v2437
    %v2711 = vpop.f32.mrf.mxu0
    %v2712 = vadd.f32 0.0, %v2711
    %v2713 = vpop.f32.mrf.mxu0
    %v2714 = vpop.f32.mrf.mxu0
    %v2715 = vadd.f32 0.0, %v2714
    %v2716 = vpop.f32.mrf.mxu0
    %2717 = vmatprep.mubr.bf16.mxu0 0
    %2718 = vmatmul.mubr.bf16.gmra.mxu0 %v2440
    %v2719 = vpop.f32.mrf.mxu0
    %v2720 = vadd.f32 0.0, %v2719
    %v2721 = vpop.f32.mrf.mxu0
    %v2722 = vpop.f32.mrf.mxu0
    %v2723 = vadd.f32 0.0, %v2722
    %v2724 = vpop.f32.mrf.mxu0
    %2725 = vmatprep.mubr.bf16.mxu0 0
    %2726 = vmatmul.mubr.bf16.gmra.mxu0 %v2443
    %v2727 = vpop.f32.mrf.mxu0
    %v2728 = vadd.f32 0.0, %v2727
    %v2729 = vpop.f32.mrf.mxu0
    %v2730 = vpop.f32.mrf.mxu0
    %v2731 = vpop.f32.mrf.mxu0
    %2732 = vdwg.mxu0
    %v2735 = vunpack.c.l.b16 %v2081
    %v2736 = vunpack.c.l.b16 %v2082
    %v2737 = vpack.c.b16 %v2736, %v2735
    %v2739 = vsel %vm2348, %v2049, 0
    %v2741 = vsel %vm2348, %v2050, 0
    %v2743 = vsel %vm2348, %v2051, 0
    %v2745 = vsel %vm2348, %v2052, 0
    %v2747 = vsel %vm2348, %v2053, 0
    %v2749 = vsel %vm2348, %v2054, 0
    %v2751 = vsel %vm2348, %v2055, 0
    %v2753 = vsel %vm2348, %v2056, 0
    %v2755 = vsel %vm2348, %v2057, 0
    %v2757 = vsel %vm2348, %v2058, 0
    %v2759 = vsel %vm2348, %v2059, 0
    %v2761 = vsel %vm2348, %v2060, 0
    %v2763 = vsel %vm2348, %v2061, 0
    %v2765 = vsel %vm2348, %v2062, 0
    %v2767 = vsel %vm2348, %v2063, 0
    %v2769 = vsel %vm2348, %v2064, 0
    %v2771 = vsel %vm2348, %v2065, 0
    %v2773 = vsel %vm2348, %v2066, 0
    %v2775 = vsel %vm2348, %v2067, 0
    %v2777 = vsel %vm2348, %v2068, 0
    %v2779 = vsel %vm2348, %v2069, 0
    %v2781 = vsel %vm2348, %v2070, 0
    %v2783 = vsel %vm2348, %v2071, 0
    %v2785 = vsel %vm2348, %v2072, 0
    %v2787 = vsel %vm2348, %v2073, 0
    %v2789 = vsel %vm2348, %v2074, 0
    %v2791 = vsel %vm2348, %v2075, 0
    %v2793 = vsel %vm2348, %v2076, 0
    %v2795 = vsel %vm2348, %v2077, 0
    %v2797 = vsel %vm2348, %v2078, 0
    %v2799 = vsel %vm2348, %v2079, 0
    %v2801 = vsel %vm2348, %v2080, 0
    %2803 = vmatprep.subr.bf16.mxu0 0
    %2804 = vmatpush1.bf16.msra.mxu0 0
    %2805 = vmatprep.subr.bf16.mxu0 0
    %2806 = vmatpush1.bf16.msra.mxu0 0
    %2807 = vmatprep.subr.bf16.mxu0 0
    %2808 = vmatpush1.bf16.msra.mxu0 0
    %2809 = vmatprep.subr.bf16.mxu0 0
    %2810 = vmatpush1.bf16.msra.mxu0 0
    %2811 = vmatprep.subr.bf16.mxu0 0
    %2812 = vmatpush1.bf16.msra.mxu0 0
    %2813 = vmatprep.subr.bf16.mxu0 0
    %2814 = vmatpush1.bf16.msra.mxu0 0
    %2815 = vmatprep.subr.bf16.mxu0 0
    %2816 = vmatpush1.bf16.msra.mxu0 0
    %2817 = vmatprep.subr.bf16.mxu0 0
    %2818 = vmatpush1.bf16.msra.mxu0 %v2737
    %2819 = vmatprep.subr.bf16.mxu0 0
    %2820 = vmatpush2.bf16.msra.mxu0 0
    %2821 = vmatprep.subr.bf16.mxu0 0
    %2822 = vmatpush2.bf16.msra.mxu0 0
    %2823 = vmatprep.subr.bf16.mxu0 0
    %2824 = vmatpush2.bf16.msra.mxu0 0
    %2825 = vmatprep.subr.bf16.mxu0 0
    %2826 = vmatpush2.bf16.msra.mxu0 0
    %2827 = vmatprep.subr.bf16.mxu0 0
    %2828 = vmatpush2.bf16.msra.mxu0 0
    %2829 = vmatprep.subr.bf16.mxu0 0
    %2830 = vmatpush2.bf16.msra.mxu0 0
    %2831 = vmatprep.subr.bf16.mxu0 0
    %2832 = vmatpush2.bf16.msra.mxu0 0
    %2833 = vmatprep.subr.bf16.mxu0 0
    %2834 = vmatpush2.bf16.msra.mxu0 0
    %2835 = vmatprep.mubr.bf16.mxu0 0
    %2836 = vmatmul.mubr.bf16.gmra.mxu0 %v2739
    %v2837 = vpop.f32.mrf.mxu0
    %v2838 = vadd.f32 %v2480, %v2837
    %v2839 = vpop.f32.mrf.mxu0
    %v2840 = vpop.f32.mrf.mxu0
    %v2841 = vadd.f32 %v2483, %v2840
    %v2842 = vpop.f32.mrf.mxu0
    %2843 = vmatprep.mubr.bf16.mxu0 0
    %2844 = vmatmul.mubr.bf16.gmra.mxu0 %v2741
    %v2845 = vpop.f32.mrf.mxu0
    %v2846 = vadd.f32 %v2488, %v2845
    %v2847 = vpop.f32.mrf.mxu0
    %v2848 = vpop.f32.mrf.mxu0
    %v2849 = vadd.f32 %v2491, %v2848
    %v2850 = vpop.f32.mrf.mxu0
    %2851 = vmatprep.mubr.bf16.mxu0 0
    %2852 = vmatmul.mubr.bf16.gmra.mxu0 %v2743
    %v2853 = vpop.f32.mrf.mxu0
    %v2854 = vadd.f32 %v2496, %v2853
    %v2855 = vpop.f32.mrf.mxu0
    %v2856 = vpop.f32.mrf.mxu0
    %v2857 = vadd.f32 %v2499, %v2856
    %v2858 = vpop.f32.mrf.mxu0
    %2859 = vmatprep.mubr.bf16.mxu0 0
    %2860 = vmatmul.mubr.bf16.gmra.mxu0 %v2745
    %v2861 = vpop.f32.mrf.mxu0
    %v2862 = vadd.f32 %v2504, %v2861
    %v2863 = vpop.f32.mrf.mxu0
    %v2864 = vpop.f32.mrf.mxu0
    %v2865 = vadd.f32 %v2507, %v2864
    %v2866 = vpop.f32.mrf.mxu0
    %2867 = vmatprep.mubr.bf16.mxu0 0
    %2868 = vmatmul.mubr.bf16.gmra.mxu0 %v2747
    %v2869 = vpop.f32.mrf.mxu0
    %v2870 = vadd.f32 %v2512, %v2869
    %v2871 = vpop.f32.mrf.mxu0
    %v2872 = vpop.f32.mrf.mxu0
    %v2873 = vadd.f32 %v2515, %v2872
    %v2874 = vpop.f32.mrf.mxu0
    %2875 = vmatprep.mubr.bf16.mxu0 0
    %2876 = vmatmul.mubr.bf16.gmra.mxu0 %v2749
    %v2877 = vpop.f32.mrf.mxu0
    %v2878 = vadd.f32 %v2520, %v2877
    %v2879 = vpop.f32.mrf.mxu0
    %v2880 = vpop.f32.mrf.mxu0
    %v2881 = vadd.f32 %v2523, %v2880
    %v2882 = vpop.f32.mrf.mxu0
    %2883 = vmatprep.mubr.bf16.mxu0 0
    %2884 = vmatmul.mubr.bf16.gmra.mxu0 %v2751
    %v2885 = vpop.f32.mrf.mxu0
    %v2886 = vadd.f32 %v2528, %v2885
    %v2887 = vpop.f32.mrf.mxu0
    %v2888 = vpop.f32.mrf.mxu0
    %v2889 = vadd.f32 %v2531, %v2888
    %v2890 = vpop.f32.mrf.mxu0
    %2891 = vmatprep.mubr.bf16.mxu0 0
    %2892 = vmatmul.mubr.bf16.gmra.mxu0 %v2753
    %v2893 = vpop.f32.mrf.mxu0
    %v2894 = vadd.f32 %v2536, %v2893
    %v2895 = vpop.f32.mrf.mxu0
    %v2896 = vpop.f32.mrf.mxu0
    %v2897 = vadd.f32 %v2539, %v2896
    %v2898 = vpop.f32.mrf.mxu0
    %2899 = vmatprep.mubr.bf16.mxu0 0
    %2900 = vmatmul.mubr.bf16.gmra.mxu0 %v2755
    %v2901 = vpop.f32.mrf.mxu0
    %v2902 = vadd.f32 %v2544, %v2901
    %v2903 = vpop.f32.mrf.mxu0
    %v2904 = vpop.f32.mrf.mxu0
    %v2905 = vadd.f32 %v2547, %v2904
    %v2906 = vpop.f32.mrf.mxu0
    %2907 = vmatprep.mubr.bf16.mxu0 0
    %2908 = vmatmul.mubr.bf16.gmra.mxu0 %v2757
    %v2909 = vpop.f32.mrf.mxu0
    %v2910 = vadd.f32 %v2552, %v2909
    %v2911 = vpop.f32.mrf.mxu0
    %v2912 = vpop.f32.mrf.mxu0
    %v2913 = vadd.f32 %v2555, %v2912
    %v2914 = vpop.f32.mrf.mxu0
    %2915 = vmatprep.mubr.bf16.mxu0 0
    %2916 = vmatmul.mubr.bf16.gmra.mxu0 %v2759
    %v2917 = vpop.f32.mrf.mxu0
    %v2918 = vadd.f32 %v2560, %v2917
    %v2919 = vpop.f32.mrf.mxu0
    %v2920 = vpop.f32.mrf.mxu0
    %v2921 = vadd.f32 %v2563, %v2920
    %v2922 = vpop.f32.mrf.mxu0
    %2923 = vmatprep.mubr.bf16.mxu0 0
    %2924 = vmatmul.mubr.bf16.gmra.mxu0 %v2761
    %v2925 = vpop.f32.mrf.mxu0
    %v2926 = vadd.f32 %v2568, %v2925
    %v2927 = vpop.f32.mrf.mxu0
    %v2928 = vpop.f32.mrf.mxu0
    %v2929 = vadd.f32 %v2571, %v2928
    %v2930 = vpop.f32.mrf.mxu0
    %2931 = vmatprep.mubr.bf16.mxu0 0
    %2932 = vmatmul.mubr.bf16.gmra.mxu0 %v2763
    %v2933 = vpop.f32.mrf.mxu0
    %v2934 = vadd.f32 %v2576, %v2933
    %v2935 = vpop.f32.mrf.mxu0
    %v2936 = vpop.f32.mrf.mxu0
    %v2937 = vadd.f32 %v2579, %v2936
    %v2938 = vpop.f32.mrf.mxu0
    %2939 = vmatprep.mubr.bf16.mxu0 0
    %2940 = vmatmul.mubr.bf16.gmra.mxu0 %v2765
    %v2941 = vpop.f32.mrf.mxu0
    %v2942 = vadd.f32 %v2584, %v2941
    %v2943 = vpop.f32.mrf.mxu0
    %v2944 = vpop.f32.mrf.mxu0
    %v2945 = vadd.f32 %v2587, %v2944
    %v2946 = vpop.f32.mrf.mxu0
    %2947 = vmatprep.mubr.bf16.mxu0 0
    %2948 = vmatmul.mubr.bf16.gmra.mxu0 %v2767
    %v2949 = vpop.f32.mrf.mxu0
    %v2950 = vadd.f32 %v2592, %v2949
    %v2951 = vpop.f32.mrf.mxu0
    %v2952 = vpop.f32.mrf.mxu0
    %v2953 = vadd.f32 %v2595, %v2952
    %v2954 = vpop.f32.mrf.mxu0
    %2955 = vmatprep.mubr.bf16.mxu0 0
    %2956 = vmatmul.mubr.bf16.gmra.mxu0 %v2769
    %v2957 = vpop.f32.mrf.mxu0
    %v2958 = vadd.f32 %v2600, %v2957
    %v2959 = vpop.f32.mrf.mxu0
    %v2960 = vpop.f32.mrf.mxu0
    %v2961 = vadd.f32 %v2603, %v2960
    %v2962 = vpop.f32.mrf.mxu0
    %2963 = vmatprep.mubr.bf16.mxu0 0
    %2964 = vmatmul.mubr.bf16.gmra.mxu0 %v2771
    %v2965 = vpop.f32.mrf.mxu0
    %v2966 = vadd.f32 %v2608, %v2965
    %v2967 = vpop.f32.mrf.mxu0
    %v2968 = vpop.f32.mrf.mxu0
    %v2969 = vadd.f32 %v2611, %v2968
    %v2970 = vpop.f32.mrf.mxu0
    %2971 = vmatprep.mubr.bf16.mxu0 0
    %2972 = vmatmul.mubr.bf16.gmra.mxu0 %v2773
    %v2973 = vpop.f32.mrf.mxu0
    %v2974 = vadd.f32 %v2616, %v2973
    %v2975 = vpop.f32.mrf.mxu0
    %v2976 = vpop.f32.mrf.mxu0
    %v2977 = vadd.f32 %v2619, %v2976
    %v2978 = vpop.f32.mrf.mxu0
    %2979 = vmatprep.mubr.bf16.mxu0 0
    %2980 = vmatmul.mubr.bf16.gmra.mxu0 %v2775
    %v2981 = vpop.f32.mrf.mxu0
    %v2982 = vadd.f32 %v2624, %v2981
    %v2983 = vpop.f32.mrf.mxu0
    %v2984 = vpop.f32.mrf.mxu0
    %v2985 = vadd.f32 %v2627, %v2984
    %v2986 = vpop.f32.mrf.mxu0
    %2987 = vmatprep.mubr.bf16.mxu0 0
    %2988 = vmatmul.mubr.bf16.gmra.mxu0 %v2777
    %v2989 = vpop.f32.mrf.mxu0
    %v2990 = vadd.f32 %v2632, %v2989
    %v2991 = vpop.f32.mrf.mxu0
    %v2992 = vpop.f32.mrf.mxu0
    %v2993 = vadd.f32 %v2635, %v2992
    %v2994 = vpop.f32.mrf.mxu0
    %2995 = vmatprep.mubr.bf16.mxu0 0
    %2996 = vmatmul.mubr.bf16.gmra.mxu0 %v2779
    %v2997 = vpop.f32.mrf.mxu0
    %v2998 = vadd.f32 %v2640, %v2997
    %v2999 = vpop.f32.mrf.mxu0
    %v3000 = vpop.f32.mrf.mxu0
    %v3001 = vadd.f32 %v2643, %v3000
    %v3002 = vpop.f32.mrf.mxu0
    %3003 = vmatprep.mubr.bf16.mxu0 0
    %3004 = vmatmul.mubr.bf16.gmra.mxu0 %v2781
    %v3005 = vpop.f32.mrf.mxu0
    %v3006 = vadd.f32 %v2648, %v3005
    %v3007 = vpop.f32.mrf.mxu0
    %v3008 = vpop.f32.mrf.mxu0
    %v3009 = vadd.f32 %v2651, %v3008
    %v3010 = vpop.f32.mrf.mxu0
    %3011 = vmatprep.mubr.bf16.mxu0 0
    %3012 = vmatmul.mubr.bf16.gmra.mxu0 %v2783
    %v3013 = vpop.f32.mrf.mxu0
    %v3014 = vadd.f32 %v2656, %v3013
    %v3015 = vpop.f32.mrf.mxu0
    %v3016 = vpop.f32.mrf.mxu0
    %v3017 = vadd.f32 %v2659, %v3016
    %v3018 = vpop.f32.mrf.mxu0
    %3019 = vmatprep.mubr.bf16.mxu0 0
    %3020 = vmatmul.mubr.bf16.gmra.mxu0 %v2785
    %v3021 = vpop.f32.mrf.mxu0
    %v3022 = vadd.f32 %v2664, %v3021
    %v3023 = vpop.f32.mrf.mxu0
    %v3024 = vpop.f32.mrf.mxu0
    %v3025 = vadd.f32 %v2667, %v3024
    %v3026 = vpop.f32.mrf.mxu0
    %3027 = vmatprep.mubr.bf16.mxu0 0
    %3028 = vmatmul.mubr.bf16.gmra.mxu0 %v2787
    %v3029 = vpop.f32.mrf.mxu0
    %v3030 = vadd.f32 %v2672, %v3029
    %v3031 = vpop.f32.mrf.mxu0
    %v3032 = vpop.f32.mrf.mxu0
    %v3033 = vadd.f32 %v2675, %v3032
    %v3034 = vpop.f32.mrf.mxu0
    %3035 = vmatprep.mubr.bf16.mxu0 0
    %3036 = vmatmul.mubr.bf16.gmra.mxu0 %v2789
    %v3037 = vpop.f32.mrf.mxu0
    %v3038 = vadd.f32 %v2680, %v3037
    %v3039 = vpop.f32.mrf.mxu0
    %v3040 = vpop.f32.mrf.mxu0
    %v3041 = vadd.f32 %v2683, %v3040
    %v3042 = vpop.f32.mrf.mxu0
    %3043 = vmatprep.mubr.bf16.mxu0 0
    %3044 = vmatmul.mubr.bf16.gmra.mxu0 %v2791
    %v3045 = vpop.f32.mrf.mxu0
    %v3046 = vadd.f32 %v2688, %v3045
    %v3047 = vpop.f32.mrf.mxu0
    %v3048 = vpop.f32.mrf.mxu0
    %v3049 = vadd.f32 %v2691, %v3048
    %v3050 = vpop.f32.mrf.mxu0
    %3051 = vmatprep.mubr.bf16.mxu0 0
    %3052 = vmatmul.mubr.bf16.gmra.mxu0 %v2793
    %v3053 = vpop.f32.mrf.mxu0
    %v3054 = vadd.f32 %v2696, %v3053
    %v3055 = vpop.f32.mrf.mxu0
    %v3056 = vpop.f32.mrf.mxu0
    %v3057 = vadd.f32 %v2699, %v3056
    %v3058 = vpop.f32.mrf.mxu0
    %3059 = vmatprep.mubr.bf16.mxu0 0
    %3060 = vmatmul.mubr.bf16.gmra.mxu0 %v2795
    %v3061 = vpop.f32.mrf.mxu0
    %v3062 = vadd.f32 %v2704, %v3061
    %v3063 = vpop.f32.mrf.mxu0
    %v3064 = vpop.f32.mrf.mxu0
    %v3065 = vadd.f32 %v2707, %v3064
    %v3066 = vpop.f32.mrf.mxu0
    %3067 = vmatprep.mubr.bf16.mxu0 0
    %3068 = vmatmul.mubr.bf16.gmra.mxu0 %v2797
    %v3069 = vpop.f32.mrf.mxu0
    %v3070 = vadd.f32 %v2712, %v3069
    %v3071 = vpop.f32.mrf.mxu0
    %v3072 = vpop.f32.mrf.mxu0
    %v3073 = vadd.f32 %v2715, %v3072
    %v3074 = vpop.f32.mrf.mxu0
    %3075 = vmatprep.mubr.bf16.mxu0 0
    %3076 = vmatmul.mubr.bf16.gmra.mxu0 %v2799
    %v3077 = vpop.f32.mrf.mxu0
    %v3078 = vadd.f32 %v2720, %v3077
    %v3079 = vpop.f32.mrf.mxu0
    %v3080 = vpop.f32.mrf.mxu0
    %v3081 = vadd.f32 %v2723, %v3080
    %v3082 = vpop.f32.mrf.mxu0
    %3083 = vmatprep.mubr.bf16.mxu0 0
    %3084 = vmatmul.mubr.bf16.gmra.mxu0 %v2801
    %v3085 = vpop.f32.mrf.mxu0
    %v3086 = vadd.f32 %v2728, %v3085
    %v3087 = vpop.f32.mrf.mxu0
    %v3088 = vpop.f32.mrf.mxu0
    %v3089 = vpop.f32.mrf.mxu0
    %3090 = vdwg.mxu0
    %s3091 = scalar_lea.vmem %s4, 16
    %v3092 = vld [vmem:[%s3091] sm:$0xf]
    %v3093 = vld [vmem:[%s3091 + $0x4] sm:$0xf]
    %vm3126 = vcmask 1046528
    %v3127 = vrot.slane %v2049, 1
    %v3128 = vrot.slane %v2050, 1
    %v3129 = vsel %vm3126, %v3127, %v3128
    %v3130 = vrot.slane %v2051, 1
    %v3131 = vsel %vm3126, %v3128, %v3130
    %v3132 = vrot.slane %v2052, 1
    %v3133 = vsel %vm3126, %v3130, %v3132
    %v3134 = vrot.slane %v2053, 1
    %v3135 = vsel %vm3126, %v3132, %v3134
    %v3136 = vrot.slane %v2054, 1
    %v3137 = vsel %vm3126, %v3134, %v3136
    %v3138 = vrot.slane %v2055, 1
    %v3139 = vsel %vm3126, %v3136, %v3138
    %v3140 = vrot.slane %v2056, 1
    %v3141 = vsel %vm3126, %v3138, %v3140
    %v3142 = vrot.slane %v2057, 1
    %v3143 = vsel %vm3126, %v3140, %v3142
    %v3144 = vrot.slane %v2058, 1
    %v3145 = vsel %vm3126, %v3142, %v3144
    %v3146 = vrot.slane %v2059, 1
    %v3147 = vsel %vm3126, %v3144, %v3146
    %v3148 = vrot.slane %v2060, 1
    %v3149 = vsel %vm3126, %v3146, %v3148
    %v3150 = vrot.slane %v2061, 1
    %v3151 = vsel %vm3126, %v3148, %v3150
    %v3152 = vrot.slane %v2062, 1
    %v3153 = vsel %vm3126, %v3150, %v3152
    %v3154 = vrot.slane %v2063, 1
    %v3155 = vsel %vm3126, %v3152, %v3154
    %v3156 = vrot.slane %v2064, 1
    %v3157 = vsel %vm3126, %v3154, %v3156
    %v3158 = vrot.slane %v2065, 1
    %v3159 = vsel %vm3126, %v3156, %v3158
    %v3160 = vrot.slane %v2066, 1
    %v3161 = vsel %vm3126, %v3158, %v3160
    %v3162 = vrot.slane %v2067, 1
    %v3163 = vsel %vm3126, %v3160, %v3162
    %v3164 = vrot.slane %v2068, 1
    %v3165 = vsel %vm3126, %v3162, %v3164
    %v3166 = vrot.slane %v2069, 1
    %v3167 = vsel %vm3126, %v3164, %v3166
    %v3168 = vrot.slane %v2070, 1
    %v3169 = vsel %vm3126, %v3166, %v3168
    %v3170 = vrot.slane %v2071, 1
    %v3171 = vsel %vm3126, %v3168, %v3170
    %v3172 = vrot.slane %v2072, 1
    %v3173 = vsel %vm3126, %v3170, %v3172
    %v3174 = vrot.slane %v2073, 1
    %v3175 = vsel %vm3126, %v3172, %v3174
    %v3176 = vrot.slane %v2074, 1
    %v3177 = vsel %vm3126, %v3174, %v3176
    %v3178 = vrot.slane %v2075, 1
    %v3179 = vsel %vm3126, %v3176, %v3178
    %v3180 = vrot.slane %v2076, 1
    %v3181 = vsel %vm3126, %v3178, %v3180
    %v3182 = vrot.slane %v2077, 1
    %v3183 = vsel %vm3126, %v3180, %v3182
    %v3184 = vrot.slane %v2078, 1
    %v3185 = vsel %vm3126, %v3182, %v3184
    %v3186 = vrot.slane %v2079, 1
    %v3187 = vsel %vm3126, %v3184, %v3186
    %v3188 = vrot.slane %v2080, 1
    %v3189 = vsel %vm3126, %v3186, %v3188
    %v3192 = vunpack.c.l.b16 %v3092
    %v3193 = vunpack.c.l.b16 %v3093
    %v3194 = vpack.c.b16 %v3193, %v3192
    %v3197 = vsel %vm2348, %v3129, 0
    %v3200 = vsel %vm2348, %v3131, 0
    %v3203 = vsel %vm2348, %v3133, 0
    %v3206 = vsel %vm2348, %v3135, 0
    %v3209 = vsel %vm2348, %v3137, 0
    %v3212 = vsel %vm2348, %v3139, 0
    %v3215 = vsel %vm2348, %v3141, 0
    %v3218 = vsel %vm2348, %v3143, 0
    %v3221 = vsel %vm2348, %v3145, 0
    %v3224 = vsel %vm2348, %v3147, 0
    %v3227 = vsel %vm2348, %v3149, 0
    %v3230 = vsel %vm2348, %v3151, 0
    %v3233 = vsel %vm2348, %v3153, 0
    %v3236 = vsel %vm2348, %v3155, 0
    %v3239 = vsel %vm2348, %v3157, 0
    %v3242 = vsel %vm2348, %v3159, 0
    %v3245 = vsel %vm2348, %v3161, 0
    %v3248 = vsel %vm2348, %v3163, 0
    %v3251 = vsel %vm2348, %v3165, 0
    %v3254 = vsel %vm2348, %v3167, 0
    %v3257 = vsel %vm2348, %v3169, 0
    %v3260 = vsel %vm2348, %v3171, 0
    %v3263 = vsel %vm2348, %v3173, 0
    %v3266 = vsel %vm2348, %v3175, 0
    %v3269 = vsel %vm2348, %v3177, 0
    %v3272 = vsel %vm2348, %v3179, 0
    %v3275 = vsel %vm2348, %v3181, 0
    %v3278 = vsel %vm2348, %v3183, 0
    %v3281 = vsel %vm2348, %v3185, 0
    %v3284 = vsel %vm2348, %v3187, 0
    %v3287 = vsel %vm2348, %v3189, 0
    %v3290 = vsel %vm2348, %v3188, 0
    %3292 = vmatprep.subr.bf16.mxu0 0
    %3293 = vmatpush1.bf16.msra.mxu0 0
    %3294 = vmatprep.subr.bf16.mxu0 0
    %3295 = vmatpush1.bf16.msra.mxu0 0
    %3296 = vmatprep.subr.bf16.mxu0 0
    %3297 = vmatpush1.bf16.msra.mxu0 0
    %3298 = vmatprep.subr.bf16.mxu0 0
    %3299 = vmatpush1.bf16.msra.mxu0 0
    %3300 = vmatprep.subr.bf16.mxu0 0
    %3301 = vmatpush1.bf16.msra.mxu0 0
    %3302 = vmatprep.subr.bf16.mxu0 0
    %3303 = vmatpush1.bf16.msra.mxu0 0
    %3304 = vmatprep.subr.bf16.mxu0 0
    %3305 = vmatpush1.bf16.msra.mxu0 0
    %3306 = vmatprep.subr.bf16.mxu0 0
    %3307 = vmatpush1.bf16.msra.mxu0 %v3194
    %3308 = vmatprep.subr.bf16.mxu0 0
    %3309 = vmatpush2.bf16.msra.mxu0 0
    %3310 = vmatprep.subr.bf16.mxu0 0
    %3311 = vmatpush2.bf16.msra.mxu0 0
    %3312 = vmatprep.subr.bf16.mxu0 0
    %3313 = vmatpush2.bf16.msra.mxu0 0
    %3314 = vmatprep.subr.bf16.mxu0 0
    %3315 = vmatpush2.bf16.msra.mxu0 0
    %3316 = vmatprep.subr.bf16.mxu0 0
    %3317 = vmatpush2.bf16.msra.mxu0 0
    %3318 = vmatprep.subr.bf16.mxu0 0
    %3319 = vmatpush2.bf16.msra.mxu0 0
    %3320 = vmatprep.subr.bf16.mxu0 0
    %3321 = vmatpush2.bf16.msra.mxu0 0
    %3322 = vmatprep.subr.bf16.mxu0 0
    %3323 = vmatpush2.bf16.msra.mxu0 0
    %3324 = vmatprep.mubr.bf16.mxu0 0
    %3325 = vmatmul.mubr.bf16.gmra.mxu0 %v3197
    %v3326 = vpop.f32.mrf.mxu0
    %v3327 = vadd.f32 0.0, %v3326
    %v3328 = vpop.f32.mrf.mxu0
    %v3329 = vpop.f32.mrf.mxu0
    %v3330 = vadd.f32 0.0, %v3329
    %v3331 = vpop.f32.mrf.mxu0
    %3332 = vmatprep.mubr.bf16.mxu0 0
    %3333 = vmatmul.mubr.bf16.gmra.mxu0 %v3200
    %v3334 = vpop.f32.mrf.mxu0
    %v3335 = vadd.f32 0.0, %v3334
    %v3336 = vpop.f32.mrf.mxu0
    %v3337 = vpop.f32.mrf.mxu0
    %v3338 = vadd.f32 0.0, %v3337
    %v3339 = vpop.f32.mrf.mxu0
    %3340 = vmatprep.mubr.bf16.mxu0 0
    %3341 = vmatmul.mubr.bf16.gmra.mxu0 %v3203
    %v3342 = vpop.f32.mrf.mxu0
    %v3343 = vadd.f32 0.0, %v3342
    %v3344 = vpop.f32.mrf.mxu0
    %v3345 = vpop.f32.mrf.mxu0
    %v3346 = vadd.f32 0.0, %v3345
    %v3347 = vpop.f32.mrf.mxu0
    %3348 = vmatprep.mubr.bf16.mxu0 0
    %3349 = vmatmul.mubr.bf16.gmra.mxu0 %v3206
    %v3350 = vpop.f32.mrf.mxu0
    %v3351 = vadd.f32 0.0, %v3350
    %v3352 = vpop.f32.mrf.mxu0
    %v3353 = vpop.f32.mrf.mxu0
    %v3354 = vadd.f32 0.0, %v3353
    %v3355 = vpop.f32.mrf.mxu0
    %3356 = vmatprep.mubr.bf16.mxu0 0
    %3357 = vmatmul.mubr.bf16.gmra.mxu0 %v3209
    %v3358 = vpop.f32.mrf.mxu0
    %v3359 = vadd.f32 0.0, %v3358
    %v3360 = vpop.f32.mrf.mxu0
    %v3361 = vpop.f32.mrf.mxu0
    %v3362 = vadd.f32 0.0, %v3361
    %v3363 = vpop.f32.mrf.mxu0
    %3364 = vmatprep.mubr.bf16.mxu0 0
    %3365 = vmatmul.mubr.bf16.gmra.mxu0 %v3212
    %v3366 = vpop.f32.mrf.mxu0
    %v3367 = vadd.f32 0.0, %v3366
    %v3368 = vpop.f32.mrf.mxu0
    %v3369 = vpop.f32.mrf.mxu0
    %v3370 = vadd.f32 0.0, %v3369
    %v3371 = vpop.f32.mrf.mxu0
    %3372 = vmatprep.mubr.bf16.mxu0 0
    %3373 = vmatmul.mubr.bf16.gmra.mxu0 %v3215
    %v3374 = vpop.f32.mrf.mxu0
    %v3375 = vadd.f32 0.0, %v3374
    %v3376 = vpop.f32.mrf.mxu0
    %v3377 = vpop.f32.mrf.mxu0
    %v3378 = vadd.f32 0.0, %v3377
    %v3379 = vpop.f32.mrf.mxu0
    %3380 = vmatprep.mubr.bf16.mxu0 0
    %3381 = vmatmul.mubr.bf16.gmra.mxu0 %v3218
    %v3382 = vpop.f32.mrf.mxu0
    %v3383 = vadd.f32 0.0, %v3382
    %v3384 = vpop.f32.mrf.mxu0
    %v3385 = vpop.f32.mrf.mxu0
    %v3386 = vadd.f32 0.0, %v3385
    %v3387 = vpop.f32.mrf.mxu0
    %3388 = vmatprep.mubr.bf16.mxu0 0
    %3389 = vmatmul.mubr.bf16.gmra.mxu0 %v3221
    %v3390 = vpop.f32.mrf.mxu0
    %v3391 = vadd.f32 0.0, %v3390
    %v3392 = vpop.f32.mrf.mxu0
    %v3393 = vpop.f32.mrf.mxu0
    %v3394 = vadd.f32 0.0, %v3393
    %v3395 = vpop.f32.mrf.mxu0
    %3396 = vmatprep.mubr.bf16.mxu0 0
    %3397 = vmatmul.mubr.bf16.gmra.mxu0 %v3224
    %v3398 = vpop.f32.mrf.mxu0
    %v3399 = vadd.f32 0.0, %v3398
    %v3400 = vpop.f32.mrf.mxu0
    %v3401 = vpop.f32.mrf.mxu0
    %v3402 = vadd.f32 0.0, %v3401
    %v3403 = vpop.f32.mrf.mxu0
    %3404 = vmatprep.mubr.bf16.mxu0 0
    %3405 = vmatmul.mubr.bf16.gmra.mxu0 %v3227
    %v3406 = vpop.f32.mrf.mxu0
    %v3407 = vadd.f32 0.0, %v3406
    %v3408 = vpop.f32.mrf.mxu0
    %v3409 = vpop.f32.mrf.mxu0
    %v3410 = vadd.f32 0.0, %v3409
    %v3411 = vpop.f32.mrf.mxu0
    %3412 = vmatprep.mubr.bf16.mxu0 0
    %3413 = vmatmul.mubr.bf16.gmra.mxu0 %v3230
    %v3414 = vpop.f32.mrf.mxu0
    %v3415 = vadd.f32 0.0, %v3414
    %v3416 = vpop.f32.mrf.mxu0
    %v3417 = vpop.f32.mrf.mxu0
    %v3418 = vadd.f32 0.0, %v3417
    %v3419 = vpop.f32.mrf.mxu0
    %3420 = vmatprep.mubr.bf16.mxu0 0
    %3421 = vmatmul.mubr.bf16.gmra.mxu0 %v3233
    %v3422 = vpop.f32.mrf.mxu0
    %v3423 = vadd.f32 0.0, %v3422
    %v3424 = vpop.f32.mrf.mxu0
    %v3425 = vpop.f32.mrf.mxu0
    %v3426 = vadd.f32 0.0, %v3425
    %v3427 = vpop.f32.mrf.mxu0
    %3428 = vmatprep.mubr.bf16.mxu0 0
    %3429 = vmatmul.mubr.bf16.gmra.mxu0 %v3236
    %v3430 = vpop.f32.mrf.mxu0
    %v3431 = vadd.f32 0.0, %v3430
    %v3432 = vpop.f32.mrf.mxu0
    %v3433 = vpop.f32.mrf.mxu0
    %v3434 = vadd.f32 0.0, %v3433
    %v3435 = vpop.f32.mrf.mxu0
    %3436 = vmatprep.mubr.bf16.mxu0 0
    %3437 = vmatmul.mubr.bf16.gmra.mxu0 %v3239
    %v3438 = vpop.f32.mrf.mxu0
    %v3439 = vadd.f32 0.0, %v3438
    %v3440 = vpop.f32.mrf.mxu0
    %v3441 = vpop.f32.mrf.mxu0
    %v3442 = vadd.f32 0.0, %v3441
    %v3443 = vpop.f32.mrf.mxu0
    %3444 = vmatprep.mubr.bf16.mxu0 0
    %3445 = vmatmul.mubr.bf16.gmra.mxu0 %v3242
    %v3446 = vpop.f32.mrf.mxu0
    %v3447 = vadd.f32 0.0, %v3446
    %v3448 = vpop.f32.mrf.mxu0
    %v3449 = vpop.f32.mrf.mxu0
    %v3450 = vadd.f32 0.0, %v3449
    %v3451 = vpop.f32.mrf.mxu0
    %3452 = vmatprep.mubr.bf16.mxu0 0
    %3453 = vmatmul.mubr.bf16.gmra.mxu0 %v3245
    %v3454 = vpop.f32.mrf.mxu0
    %v3455 = vadd.f32 0.0, %v3454
    %v3456 = vpop.f32.mrf.mxu0
    %v3457 = vpop.f32.mrf.mxu0
    %v3458 = vadd.f32 0.0, %v3457
    %v3459 = vpop.f32.mrf.mxu0
    %3460 = vmatprep.mubr.bf16.mxu0 0
    %3461 = vmatmul.mubr.bf16.gmra.mxu0 %v3248
    %v3462 = vpop.f32.mrf.mxu0
    %v3463 = vadd.f32 0.0, %v3462
    %v3464 = vpop.f32.mrf.mxu0
    %v3465 = vpop.f32.mrf.mxu0
    %v3466 = vadd.f32 0.0, %v3465
    %v3467 = vpop.f32.mrf.mxu0
    %3468 = vmatprep.mubr.bf16.mxu0 0
    %3469 = vmatmul.mubr.bf16.gmra.mxu0 %v3251
    %v3470 = vpop.f32.mrf.mxu0
    %v3471 = vadd.f32 0.0, %v3470
    %v3472 = vpop.f32.mrf.mxu0
    %v3473 = vpop.f32.mrf.mxu0
    %v3474 = vadd.f32 0.0, %v3473
    %v3475 = vpop.f32.mrf.mxu0
    %3476 = vmatprep.mubr.bf16.mxu0 0
    %3477 = vmatmul.mubr.bf16.gmra.mxu0 %v3254
    %v3478 = vpop.f32.mrf.mxu0
    %v3479 = vadd.f32 0.0, %v3478
    %v3480 = vpop.f32.mrf.mxu0
    %v3481 = vpop.f32.mrf.mxu0
    %v3482 = vadd.f32 0.0, %v3481
    %v3483 = vpop.f32.mrf.mxu0
    %3484 = vmatprep.mubr.bf16.mxu0 0
    %3485 = vmatmul.mubr.bf16.gmra.mxu0 %v3257
    %v3486 = vpop.f32.mrf.mxu0
    %v3487 = vadd.f32 0.0, %v3486
    %v3488 = vpop.f32.mrf.mxu0
    %v3489 = vpop.f32.mrf.mxu0
    %v3490 = vadd.f32 0.0, %v3489
    %v3491 = vpop.f32.mrf.mxu0
    %3492 = vmatprep.mubr.bf16.mxu0 0
    %3493 = vmatmul.mubr.bf16.gmra.mxu0 %v3260
    %v3494 = vpop.f32.mrf.mxu0
    %v3495 = vadd.f32 0.0, %v3494
    %v3496 = vpop.f32.mrf.mxu0
    %v3497 = vpop.f32.mrf.mxu0
    %v3498 = vadd.f32 0.0, %v3497
    %v3499 = vpop.f32.mrf.mxu0
    %3500 = vmatprep.mubr.bf16.mxu0 0
    %3501 = vmatmul.mubr.bf16.gmra.mxu0 %v3263
    %v3502 = vpop.f32.mrf.mxu0
    %v3503 = vadd.f32 0.0, %v3502
    %v3504 = vpop.f32.mrf.mxu0
    %v3505 = vpop.f32.mrf.mxu0
    %v3506 = vadd.f32 0.0, %v3505
    %v3507 = vpop.f32.mrf.mxu0
    %3508 = vmatprep.mubr.bf16.mxu0 0
    %3509 = vmatmul.mubr.bf16.gmra.mxu0 %v3266
    %v3510 = vpop.f32.mrf.mxu0
    %v3511 = vadd.f32 0.0, %v3510
    %v3512 = vpop.f32.mrf.mxu0
    %v3513 = vpop.f32.mrf.mxu0
    %v3514 = vadd.f32 0.0, %v3513
    %v3515 = vpop.f32.mrf.mxu0
    %3516 = vmatprep.mubr.bf16.mxu0 0
    %3517 = vmatmul.mubr.bf16.gmra.mxu0 %v3269
    %v3518 = vpop.f32.mrf.mxu0
    %v3519 = vadd.f32 0.0, %v3518
    %v3520 = vpop.f32.mrf.mxu0
    %v3521 = vpop.f32.mrf.mxu0
    %v3522 = vadd.f32 0.0, %v3521
    %v3523 = vpop.f32.mrf.mxu0
    %3524 = vmatprep.mubr.bf16.mxu0 0
    %3525 = vmatmul.mubr.bf16.gmra.mxu0 %v3272
    %v3526 = vpop.f32.mrf.mxu0
    %v3527 = vadd.f32 0.0, %v3526
    %v3528 = vpop.f32.mrf.mxu0
    %v3529 = vpop.f32.mrf.mxu0
    %v3530 = vadd.f32 0.0, %v3529
    %v3531 = vpop.f32.mrf.mxu0
    %3532 = vmatprep.mubr.bf16.mxu0 0
    %3533 = vmatmul.mubr.bf16.gmra.mxu0 %v3275
    %v3534 = vpop.f32.mrf.mxu0
    %v3535 = vadd.f32 0.0, %v3534
    %v3536 = vpop.f32.mrf.mxu0
    %v3537 = vpop.f32.mrf.mxu0
    %v3538 = vadd.f32 0.0, %v3537
    %v3539 = vpop.f32.mrf.mxu0
    %3540 = vmatprep.mubr.bf16.mxu0 0
    %3541 = vmatmul.mubr.bf16.gmra.mxu0 %v3278
    %v3542 = vpop.f32.mrf.mxu0
    %v3543 = vadd.f32 0.0, %v3542
    %v3544 = vpop.f32.mrf.mxu0
    %v3545 = vpop.f32.mrf.mxu0
    %v3546 = vadd.f32 0.0, %v3545
    %v3547 = vpop.f32.mrf.mxu0
    %3548 = vmatprep.mubr.bf16.mxu0 0
    %3549 = vmatmul.mubr.bf16.gmra.mxu0 %v3281
    %v3550 = vpop.f32.mrf.mxu0
    %v3551 = vadd.f32 0.0, %v3550
    %v3552 = vpop.f32.mrf.mxu0
    %v3553 = vpop.f32.mrf.mxu0
    %v3554 = vadd.f32 0.0, %v3553
    %v3555 = vpop.f32.mrf.mxu0
    %3556 = vmatprep.mubr.bf16.mxu0 0
    %3557 = vmatmul.mubr.bf16.gmra.mxu0 %v3284
    %v3558 = vpop.f32.mrf.mxu0
    %v3559 = vadd.f32 0.0, %v3558
    %v3560 = vpop.f32.mrf.mxu0
    %v3561 = vpop.f32.mrf.mxu0
    %v3562 = vadd.f32 0.0, %v3561
    %v3563 = vpop.f32.mrf.mxu0
    %3564 = vmatprep.mubr.bf16.mxu0 0
    %3565 = vmatmul.mubr.bf16.gmra.mxu0 %v3287
    %v3566 = vpop.f32.mrf.mxu0
    %v3567 = vadd.f32 0.0, %v3566
    %v3568 = vpop.f32.mrf.mxu0
    %v3569 = vpop.f32.mrf.mxu0
    %v3570 = vadd.f32 0.0, %v3569
    %v3571 = vpop.f32.mrf.mxu0
    %3572 = vmatprep.mubr.bf16.mxu0 0
    %3573 = vmatmul.mubr.bf16.gmra.mxu0 %v3290
    %v3574 = vpop.f32.mrf.mxu0
    %v3575 = vadd.f32 0.0, %v3574
    %v3576 = vpop.f32.mrf.mxu0
    %v3577 = vpop.f32.mrf.mxu0
    %v3578 = vpop.f32.mrf.mxu0
    %3579 = vdwg.mxu0
    %v3580 = vadd.f32 %v2838, %v3327
    %v3581 = vadd.f32 %v2841, %v3330
    %v3582 = vadd.f32 %v2846, %v3335
    %v3583 = vadd.f32 %v2849, %v3338
    %v3584 = vadd.f32 %v2854, %v3343
    %v3585 = vadd.f32 %v2857, %v3346
    %v3586 = vadd.f32 %v2862, %v3351
    %v3587 = vadd.f32 %v2865, %v3354
    %v3588 = vadd.f32 %v2870, %v3359
    %v3589 = vadd.f32 %v2873, %v3362
    %v3590 = vadd.f32 %v2878, %v3367
    %v3591 = vadd.f32 %v2881, %v3370
    %v3592 = vadd.f32 %v2886, %v3375
    %v3593 = vadd.f32 %v2889, %v3378
    %v3594 = vadd.f32 %v2894, %v3383
    %v3595 = vadd.f32 %v2897, %v3386
    %v3596 = vadd.f32 %v2902, %v3391
    %v3597 = vadd.f32 %v2905, %v3394
    %v3598 = vadd.f32 %v2910, %v3399
    %v3599 = vadd.f32 %v2913, %v3402
    %v3600 = vadd.f32 %v2918, %v3407
    %v3601 = vadd.f32 %v2921, %v3410
    %v3602 = vadd.f32 %v2926, %v3415
    %v3603 = vadd.f32 %v2929, %v3418
    %v3604 = vadd.f32 %v2934, %v3423
    %v3605 = vadd.f32 %v2937, %v3426
    %v3606 = vadd.f32 %v2942, %v3431
    %v3607 = vadd.f32 %v2945, %v3434
    %v3608 = vadd.f32 %v2950, %v3439
    %v3609 = vadd.f32 %v2953, %v3442
    %v3610 = vadd.f32 %v2958, %v3447
    %v3611 = vadd.f32 %v2961, %v3450
    %v3612 = vadd.f32 %v2966, %v3455
    %v3613 = vadd.f32 %v2969, %v3458
    %v3614 = vadd.f32 %v2974, %v3463
    %v3615 = vadd.f32 %v2977, %v3466
    %v3616 = vadd.f32 %v2982, %v3471
    %v3617 = vadd.f32 %v2985, %v3474
    %v3618 = vadd.f32 %v2990, %v3479
    %v3619 = vadd.f32 %v2993, %v3482
    %v3620 = vadd.f32 %v2998, %v3487
    %v3621 = vadd.f32 %v3001, %v3490
    %v3622 = vadd.f32 %v3006, %v3495
    %v3623 = vadd.f32 %v3009, %v3498
    %v3624 = vadd.f32 %v3014, %v3503
    %v3625 = vadd.f32 %v3017, %v3506
    %v3626 = vadd.f32 %v3022, %v3511
    %v3627 = vadd.f32 %v3025, %v3514
    %v3628 = vadd.f32 %v3030, %v3519
    %v3629 = vadd.f32 %v3033, %v3522
    %v3630 = vadd.f32 %v3038, %v3527
    %v3631 = vadd.f32 %v3041, %v3530
    %v3632 = vadd.f32 %v3046, %v3535
    %v3633 = vadd.f32 %v3049, %v3538
    %v3634 = vadd.f32 %v3054, %v3543
    %v3635 = vadd.f32 %v3057, %v3546
    %v3636 = vadd.f32 %v3062, %v3551
    %v3637 = vadd.f32 %v3065, %v3554
    %v3638 = vadd.f32 %v3070, %v3559
    %v3639 = vadd.f32 %v3073, %v3562
    %v3640 = vadd.f32 %v3078, %v3567
    %v3641 = vadd.f32 %v3081, %v3570
    %v3642 = vadd.f32 %v3086, %v3575
    %v3643 = vld [vmem:[%s5] sm:$0x1]
    %v3645 = vlaneseq
    %v3646 = vshrl.u32 %v3645, 7
    %v3647 = vsub.s32 0, %v3646
    %v3648 = vrot.slane %v3643, %v3647
    %v3650 = vadd.f32 %v3580, %v3648
    %v3651 = vadd.f32 %v3581, %v3648
    %v3652 = vadd.f32 %v3582, %v3648
    %v3653 = vadd.f32 %v3583, %v3648
    %v3654 = vadd.f32 %v3584, %v3648
    %v3655 = vadd.f32 %v3585, %v3648
    %v3656 = vadd.f32 %v3586, %v3648
    %v3657 = vadd.f32 %v3587, %v3648
    %v3658 = vadd.f32 %v3588, %v3648
    %v3659 = vadd.f32 %v3589, %v3648
    %v3660 = vadd.f32 %v3590, %v3648
    %v3661 = vadd.f32 %v3591, %v3648
    %v3662 = vadd.f32 %v3592, %v3648
    %v3663 = vadd.f32 %v3593, %v3648
    %v3664 = vadd.f32 %v3594, %v3648
    %v3665 = vadd.f32 %v3595, %v3648
    %v3666 = vadd.f32 %v3596, %v3648
    %v3667 = vadd.f32 %v3597, %v3648
    %v3668 = vadd.f32 %v3598, %v3648
    %v3669 = vadd.f32 %v3599, %v3648
    %v3670 = vadd.f32 %v3600, %v3648
    %v3671 = vadd.f32 %v3601, %v3648
    %v3672 = vadd.f32 %v3602, %v3648
    %v3673 = vadd.f32 %v3603, %v3648
    %v3674 = vadd.f32 %v3604, %v3648
    %v3675 = vadd.f32 %v3605, %v3648
    %v3676 = vadd.f32 %v3606, %v3648
    %v3677 = vadd.f32 %v3607, %v3648
    %v3678 = vadd.f32 %v3608, %v3648
    %v3679 = vadd.f32 %v3609, %v3648
    %v3680 = vadd.f32 %v3610, %v3648
    %v3681 = vadd.f32 %v3611, %v3648
    %v3682 = vadd.f32 %v3612, %v3648
    %v3683 = vadd.f32 %v3613, %v3648
    %v3684 = vadd.f32 %v3614, %v3648
    %v3685 = vadd.f32 %v3615, %v3648
    %v3686 = vadd.f32 %v3616, %v3648
    %v3687 = vadd.f32 %v3617, %v3648
    %v3688 = vadd.f32 %v3618, %v3648
    %v3689 = vadd.f32 %v3619, %v3648
    %v3690 = vadd.f32 %v3620, %v3648
    %v3691 = vadd.f32 %v3621, %v3648
    %v3692 = vadd.f32 %v3622, %v3648
    %v3693 = vadd.f32 %v3623, %v3648
    %v3694 = vadd.f32 %v3624, %v3648
    %v3695 = vadd.f32 %v3625, %v3648
    %v3696 = vadd.f32 %v3626, %v3648
    %v3697 = vadd.f32 %v3627, %v3648
    %v3698 = vadd.f32 %v3628, %v3648
    %v3699 = vadd.f32 %v3629, %v3648
    %v3700 = vadd.f32 %v3630, %v3648
    %v3701 = vadd.f32 %v3631, %v3648
    %v3702 = vadd.f32 %v3632, %v3648
    %v3703 = vadd.f32 %v3633, %v3648
    %v3704 = vadd.f32 %v3634, %v3648
    %v3705 = vadd.f32 %v3635, %v3648
    %v3706 = vadd.f32 %v3636, %v3648
    %v3707 = vadd.f32 %v3637, %v3648
    %v3708 = vadd.f32 %v3638, %v3648
    %v3709 = vadd.f32 %v3639, %v3648
    %v3710 = vadd.f32 %v3640, %v3648
    %v3711 = vadd.f32 %v3641, %v3648
    %v3712 = vadd.f32 %v3642, %v3648
    %v3713 = vmul.f32 %v3650, 0.5
    %v3714 = vmul.f32 %v3651, 0.5
    %v3715 = vmul.f32 %v3652, 0.5
    %v3716 = vmul.f32 %v3653, 0.5
    %v3717 = vmul.f32 %v3654, 0.5
    %v3718 = vmul.f32 %v3655, 0.5
    %v3719 = vmul.f32 %v3656, 0.5
    %v3720 = vmul.f32 %v3657, 0.5
    %v3721 = vmul.f32 %v3658, 0.5
    %v3722 = vmul.f32 %v3659, 0.5
    %v3723 = vmul.f32 %v3660, 0.5
    %v3724 = vmul.f32 %v3661, 0.5
    %v3725 = vmul.f32 %v3662, 0.5
    %v3726 = vmul.f32 %v3663, 0.5
    %v3727 = vmul.f32 %v3664, 0.5
    %v3728 = vmul.f32 %v3665, 0.5
    %v3729 = vmul.f32 %v3666, 0.5
    %v3730 = vmul.f32 %v3667, 0.5
    %v3731 = vmul.f32 %v3668, 0.5
    %v3732 = vmul.f32 %v3669, 0.5
    %v3733 = vmul.f32 %v3670, 0.5
    %v3734 = vmul.f32 %v3671, 0.5
    %v3735 = vmul.f32 %v3672, 0.5
    %v3736 = vmul.f32 %v3673, 0.5
    %v3737 = vmul.f32 %v3674, 0.5
    %v3738 = vmul.f32 %v3675, 0.5
    %v3739 = vmul.f32 %v3676, 0.5
    %v3740 = vmul.f32 %v3677, 0.5
    %v3741 = vmul.f32 %v3678, 0.5
    %v3742 = vmul.f32 %v3679, 0.5
    %v3743 = vmul.f32 %v3680, 0.5
    %v3744 = vmul.f32 %v3681, 0.5
    %v3745 = vmul.f32 %v3682, 0.5
    %v3746 = vmul.f32 %v3683, 0.5
    %v3747 = vmul.f32 %v3684, 0.5
    %v3748 = vmul.f32 %v3685, 0.5
    %v3749 = vmul.f32 %v3686, 0.5
    %v3750 = vmul.f32 %v3687, 0.5
    %v3751 = vmul.f32 %v3688, 0.5
    %v3752 = vmul.f32 %v3689, 0.5
    %v3753 = vmul.f32 %v3690, 0.5
    %v3754 = vmul.f32 %v3691, 0.5
    %v3755 = vmul.f32 %v3692, 0.5
    %v3756 = vmul.f32 %v3693, 0.5
    %v3757 = vmul.f32 %v3694, 0.5
    %v3758 = vmul.f32 %v3695, 0.5
    %v3759 = vmul.f32 %v3696, 0.5
    %v3760 = vmul.f32 %v3697, 0.5
    %v3761 = vmul.f32 %v3698, 0.5
    %v3762 = vmul.f32 %v3699, 0.5
    %v3763 = vmul.f32 %v3700, 0.5
    %v3764 = vmul.f32 %v3701, 0.5
    %v3765 = vmul.f32 %v3702, 0.5
    %v3766 = vmul.f32 %v3703, 0.5
    %v3767 = vmul.f32 %v3704, 0.5
    %v3768 = vmul.f32 %v3705, 0.5
    %v3769 = vmul.f32 %v3706, 0.5
    %v3770 = vmul.f32 %v3707, 0.5
    %v3771 = vmul.f32 %v3708, 0.5
    %v3772 = vmul.f32 %v3709, 0.5
    %v3773 = vmul.f32 %v3710, 0.5
    %v3774 = vmul.f32 %v3711, 0.5
    %v3775 = vmul.f32 %v3712, 0.5
    %v3776 = vmul.f32 %v3650, 0.70710677
    %v3777 = vmul.f32 %v3651, 0.70710677
    %v3778 = vmul.f32 %v3652, 0.70710677
    %v3779 = vmul.f32 %v3653, 0.70710677
    %v3780 = vmul.f32 %v3654, 0.70710677
    %v3781 = vmul.f32 %v3655, 0.70710677
    %v3782 = vmul.f32 %v3656, 0.70710677
    %v3783 = vmul.f32 %v3657, 0.70710677
    %v3784 = vmul.f32 %v3658, 0.70710677
    %v3785 = vmul.f32 %v3659, 0.70710677
    %v3786 = vmul.f32 %v3660, 0.70710677
    %v3787 = vmul.f32 %v3661, 0.70710677
    %v3788 = vmul.f32 %v3662, 0.70710677
    %v3789 = vmul.f32 %v3663, 0.70710677
    %v3790 = vmul.f32 %v3664, 0.70710677
    %v3791 = vmul.f32 %v3665, 0.70710677
    %v3792 = vmul.f32 %v3666, 0.70710677
    %v3793 = vmul.f32 %v3667, 0.70710677
    %v3794 = vmul.f32 %v3668, 0.70710677
    %v3795 = vmul.f32 %v3669, 0.70710677
    %v3796 = vmul.f32 %v3670, 0.70710677
    %v3797 = vmul.f32 %v3671, 0.70710677
    %v3798 = vmul.f32 %v3672, 0.70710677
    %v3799 = vmul.f32 %v3673, 0.70710677
    %v3800 = vmul.f32 %v3674, 0.70710677
    %v3801 = vmul.f32 %v3675, 0.70710677
    %v3802 = vmul.f32 %v3676, 0.70710677
    %v3803 = vmul.f32 %v3677, 0.70710677
    %v3804 = vmul.f32 %v3678, 0.70710677
    %v3805 = vmul.f32 %v3679, 0.70710677
    %v3806 = vmul.f32 %v3680, 0.70710677
    %v3807 = vmul.f32 %v3681, 0.70710677
    %v3808 = vmul.f32 %v3682, 0.70710677
    %v3809 = vmul.f32 %v3683, 0.70710677
    %v3810 = vmul.f32 %v3684, 0.70710677
    %v3811 = vmul.f32 %v3685, 0.70710677
    %v3812 = vmul.f32 %v3686, 0.70710677
    %v3813 = vmul.f32 %v3687, 0.70710677
    %v3814 = vmul.f32 %v3688, 0.70710677
    %v3815 = vmul.f32 %v3689, 0.70710677
    %v3816 = vmul.f32 %v3690, 0.70710677
    %v3817 = vmul.f32 %v3691, 0.70710677
    %v3818 = vmul.f32 %v3692, 0.70710677
    %v3819 = vmul.f32 %v3693, 0.70710677
    %v3820 = vmul.f32 %v3694, 0.70710677
    %v3821 = vmul.f32 %v3695, 0.70710677
    %v3822 = vmul.f32 %v3696, 0.70710677
    %v3823 = vmul.f32 %v3697, 0.70710677
    %v3824 = vmul.f32 %v3698, 0.70710677
    %v3825 = vmul.f32 %v3699, 0.70710677
    %v3826 = vmul.f32 %v3700, 0.70710677
    %v3827 = vmul.f32 %v3701, 0.70710677
    %v3828 = vmul.f32 %v3702, 0.70710677
    %v3829 = vmul.f32 %v3703, 0.70710677
    %v3830 = vmul.f32 %v3704, 0.70710677
    %v3831 = vmul.f32 %v3705, 0.70710677
    %v3832 = vmul.f32 %v3706, 0.70710677
    %v3833 = vmul.f32 %v3707, 0.70710677
    %v3834 = vmul.f32 %v3708, 0.70710677
    %v3835 = vmul.f32 %v3709, 0.70710677
    %v3836 = vmul.f32 %v3710, 0.70710677
    %v3837 = vmul.f32 %v3711, 0.70710677
    %v3838 = vmul.f32 %v3712, 0.70710677
    %v3839 = verf.f32.pop %v3776
    %v3840 = verf.f32.pop %v3777
    %v3841 = verf.f32.pop %v3778
    %v3842 = verf.f32.pop %v3779
    %v3843 = verf.f32.pop %v3780
    %v3844 = verf.f32.pop %v3781
    %v3845 = verf.f32.pop %v3782
    %v3846 = verf.f32.pop %v3783
    %v3847 = verf.f32.pop %v3784
    %v3848 = verf.f32.pop %v3785
    %v3849 = verf.f32.pop %v3786
    %v3850 = verf.f32.pop %v3787
    %v3851 = verf.f32.pop %v3788
    %v3852 = verf.f32.pop %v3789
    %v3853 = verf.f32.pop %v3790
    %v3854 = verf.f32.pop %v3791
    %v3855 = verf.f32.pop %v3792
    %v3856 = verf.f32.pop %v3793
    %v3857 = verf.f32.pop %v3794
    %v3858 = verf.f32.pop %v3795
    %v3859 = verf.f32.pop %v3796
    %v3860 = verf.f32.pop %v3797
    %v3861 = verf.f32.pop %v3798
    %v3862 = verf.f32.pop %v3799
    %v3863 = verf.f32.pop %v3800
    %v3864 = verf.f32.pop %v3801
    %v3865 = verf.f32.pop %v3802
    %v3866 = verf.f32.pop %v3803
    %v3867 = verf.f32.pop %v3804
    %v3868 = verf.f32.pop %v3805
    %v3869 = verf.f32.pop %v3806
    %v3870 = verf.f32.pop %v3807
    %v3871 = verf.f32.pop %v3808
    %v3872 = verf.f32.pop %v3809
    %v3873 = verf.f32.pop %v3810
    %v3874 = verf.f32.pop %v3811
    %v3875 = verf.f32.pop %v3812
    %v3876 = verf.f32.pop %v3813
    %v3877 = verf.f32.pop %v3814
    %v3878 = verf.f32.pop %v3815
    %v3879 = verf.f32.pop %v3816
    %v3880 = verf.f32.pop %v3817
    %v3881 = verf.f32.pop %v3818
    %v3882 = verf.f32.pop %v3819
    %v3883 = verf.f32.pop %v3820
    %v3884 = verf.f32.pop %v3821
    %v3885 = verf.f32.pop %v3822
    %v3886 = verf.f32.pop %v3823
    %v3887 = verf.f32.pop %v3824
    %v3888 = verf.f32.pop %v3825
    %v3889 = verf.f32.pop %v3826
    %v3890 = verf.f32.pop %v3827
    %v3891 = verf.f32.pop %v3828
    %v3892 = verf.f32.pop %v3829
    %v3893 = verf.f32.pop %v3830
    %v3894 = verf.f32.pop %v3831
    %v3895 = verf.f32.pop %v3832
    %v3896 = verf.f32.pop %v3833
    %v3897 = verf.f32.pop %v3834
    %v3898 = verf.f32.pop %v3835
    %v3899 = verf.f32.pop %v3836
    %v3900 = verf.f32.pop %v3837
    %v3901 = verf.f32.pop %v3838
    %v3902 = vadd.f32 %v3839, 1.0
    %v3903 = vadd.f32 %v3840, 1.0
    %v3904 = vadd.f32 %v3841, 1.0
    %v3905 = vadd.f32 %v3842, 1.0
    %v3906 = vadd.f32 %v3843, 1.0
    %v3907 = vadd.f32 %v3844, 1.0
    %v3908 = vadd.f32 %v3845, 1.0
    %v3909 = vadd.f32 %v3846, 1.0
    %v3910 = vadd.f32 %v3847, 1.0
    %v3911 = vadd.f32 %v3848, 1.0
    %v3912 = vadd.f32 %v3849, 1.0
    %v3913 = vadd.f32 %v3850, 1.0
    %v3914 = vadd.f32 %v3851, 1.0
    %v3915 = vadd.f32 %v3852, 1.0
    %v3916 = vadd.f32 %v3853, 1.0
    %v3917 = vadd.f32 %v3854, 1.0
    %v3918 = vadd.f32 %v3855, 1.0
    %v3919 = vadd.f32 %v3856, 1.0
    %v3920 = vadd.f32 %v3857, 1.0
    %v3921 = vadd.f32 %v3858, 1.0
    %v3922 = vadd.f32 %v3859, 1.0
    %v3923 = vadd.f32 %v3860, 1.0
    %v3924 = vadd.f32 %v3861, 1.0
    %v3925 = vadd.f32 %v3862, 1.0
    %v3926 = vadd.f32 %v3863, 1.0
    %v3927 = vadd.f32 %v3864, 1.0
    %v3928 = vadd.f32 %v3865, 1.0
    %v3929 = vadd.f32 %v3866, 1.0
    %v3930 = vadd.f32 %v3867, 1.0
    %v3931 = vadd.f32 %v3868, 1.0
    %v3932 = vadd.f32 %v3869, 1.0
    %v3933 = vadd.f32 %v3870, 1.0
    %v3934 = vadd.f32 %v3871, 1.0
    %v3935 = vadd.f32 %v3872, 1.0
    %v3936 = vadd.f32 %v3873, 1.0
    %v3937 = vadd.f32 %v3874, 1.0
    %v3938 = vadd.f32 %v3875, 1.0
    %v3939 = vadd.f32 %v3876, 1.0
    %v3940 = vadd.f32 %v3877, 1.0
    %v3941 = vadd.f32 %v3878, 1.0
    %v3942 = vadd.f32 %v3879, 1.0
    %v3943 = vadd.f32 %v3880, 1.0
    %v3944 = vadd.f32 %v3881, 1.0
    %v3945 = vadd.f32 %v3882, 1.0
    %v3946 = vadd.f32 %v3883, 1.0
    %v3947 = vadd.f32 %v3884, 1.0
    %v3948 = vadd.f32 %v3885, 1.0
    %v3949 = vadd.f32 %v3886, 1.0
    %v3950 = vadd.f32 %v3887, 1.0
    %v3951 = vadd.f32 %v3888, 1.0
    %v3952 = vadd.f32 %v3889, 1.0
    %v3953 = vadd.f32 %v3890, 1.0
    %v3954 = vadd.f32 %v3891, 1.0
    %v3955 = vadd.f32 %v3892, 1.0
    %v3956 = vadd.f32 %v3893, 1.0
    %v3957 = vadd.f32 %v3894, 1.0
    %v3958 = vadd.f32 %v3895, 1.0
    %v3959 = vadd.f32 %v3896, 1.0
    %v3960 = vadd.f32 %v3897, 1.0
    %v3961 = vadd.f32 %v3898, 1.0
    %v3962 = vadd.f32 %v3899, 1.0
    %v3963 = vadd.f32 %v3900, 1.0
    %v3964 = vadd.f32 %v3901, 1.0
    %v3965 = vmul.f32 %v3713, %v3902
    %v3966 = vmul.f32 %v3714, %v3903
    %v3967 = vmul.f32 %v3715, %v3904
    %v3968 = vmul.f32 %v3716, %v3905
    %v3969 = vmul.f32 %v3717, %v3906
    %v3970 = vmul.f32 %v3718, %v3907
    %v3971 = vmul.f32 %v3719, %v3908
    %v3972 = vmul.f32 %v3720, %v3909
    %v3973 = vmul.f32 %v3721, %v3910
    %v3974 = vmul.f32 %v3722, %v3911
    %v3975 = vmul.f32 %v3723, %v3912
    %v3976 = vmul.f32 %v3724, %v3913
    %v3977 = vmul.f32 %v3725, %v3914
    %v3978 = vmul.f32 %v3726, %v3915
    %v3979 = vmul.f32 %v3727, %v3916
    %v3980 = vmul.f32 %v3728, %v3917
    %v3981 = vmul.f32 %v3729, %v3918
    %v3982 = vmul.f32 %v3730, %v3919
    %v3983 = vmul.f32 %v3731, %v3920
    %v3984 = vmul.f32 %v3732, %v3921
    %v3985 = vmul.f32 %v3733, %v3922
    %v3986 = vmul.f32 %v3734, %v3923
    %v3987 = vmul.f32 %v3735, %v3924
    %v3988 = vmul.f32 %v3736, %v3925
    %v3989 = vmul.f32 %v3737, %v3926
    %v3990 = vmul.f32 %v3738, %v3927
    %v3991 = vmul.f32 %v3739, %v3928
    %v3992 = vmul.f32 %v3740, %v3929
    %v3993 = vmul.f32 %v3741, %v3930
    %v3994 = vmul.f32 %v3742, %v3931
    %v3995 = vmul.f32 %v3743, %v3932
    %v3996 = vmul.f32 %v3744, %v3933
    %v3997 = vmul.f32 %v3745, %v3934
    %v3998 = vmul.f32 %v3746, %v3935
    %v3999 = vmul.f32 %v3747, %v3936
    %v4000 = vmul.f32 %v3748, %v3937
    %v4001 = vmul.f32 %v3749, %v3938
    %v4002 = vmul.f32 %v3750, %v3939
    %v4003 = vmul.f32 %v3751, %v3940
    %v4004 = vmul.f32 %v3752, %v3941
    %v4005 = vmul.f32 %v3753, %v3942
    %v4006 = vmul.f32 %v3754, %v3943
    %v4007 = vmul.f32 %v3755, %v3944
    %v4008 = vmul.f32 %v3756, %v3945
    %v4009 = vmul.f32 %v3757, %v3946
    %v4010 = vmul.f32 %v3758, %v3947
    %v4011 = vmul.f32 %v3759, %v3948
    %v4012 = vmul.f32 %v3760, %v3949
    %v4013 = vmul.f32 %v3761, %v3950
    %v4014 = vmul.f32 %v3762, %v3951
    %v4015 = vmul.f32 %v3763, %v3952
    %v4016 = vmul.f32 %v3764, %v3953
    %v4017 = vmul.f32 %v3765, %v3954
    %v4018 = vmul.f32 %v3766, %v3955
    %v4019 = vmul.f32 %v3767, %v3956
    %v4020 = vmul.f32 %v3768, %v3957
    %v4021 = vmul.f32 %v3769, %v3958
    %v4022 = vmul.f32 %v3770, %v3959
    %v4023 = vmul.f32 %v3771, %v3960
    %v4024 = vmul.f32 %v3772, %v3961
    %v4025 = vmul.f32 %v3773, %v3962
    %v4026 = vmul.f32 %v3774, %v3963
    %v4027 = vmul.f32 %v3775, %v3964
    %vm4028 = vcmask 261120
    %4029 = vst.msk [vmem:[#allocation2] sm:$0xff] %vm4028, %v3965
    %4030 = vst.msk [vmem:[#allocation2 + $0x8] sm:$0xff] %vm4028, %v3966
    %4031 = vst.msk [vmem:[#allocation2 + $0x10] sm:$0xff] %vm4028, %v3967
    %4032 = vst.msk [vmem:[#allocation2 + $0x18] sm:$0xff] %vm4028, %v3968
    %4033 = vst.msk [vmem:[#allocation2 + $0x20] sm:$0xff] %vm4028, %v3969
    %4034 = vst.msk [vmem:[#allocation2 + $0x28] sm:$0xff] %vm4028, %v3970
    %4035 = vst.msk [vmem:[#allocation2 + $0x30] sm:$0xff] %vm4028, %v3971
    %4036 = vst.msk [vmem:[#allocation2 + $0x38] sm:$0xff] %vm4028, %v3972
    %4037 = vst.msk [vmem:[#allocation2 + $0x40] sm:$0xff] %vm4028, %v3973
    %4038 = vst.msk [vmem:[#allocation2 + $0x48] sm:$0xff] %vm4028, %v3974
    %4039 = vst.msk [vmem:[#allocation2 + $0x50] sm:$0xff] %vm4028, %v3975
    %4040 = vst.msk [vmem:[#allocation2 + $0x58] sm:$0xff] %vm4028, %v3976
    %4041 = vst.msk [vmem:[#allocation2 + $0x60] sm:$0xff] %vm4028, %v3977
    %4042 = vst.msk [vmem:[#allocation2 + $0x68] sm:$0xff] %vm4028, %v3978
    %4043 = vst.msk [vmem:[#allocation2 + $0x70] sm:$0xff] %vm4028, %v3979
    %4044 = vst.msk [vmem:[#allocation2 + $0x78] sm:$0xff] %vm4028, %v3980
    %4045 = vst.msk [vmem:[#allocation2 + $0x80] sm:$0xff] %vm4028, %v3981
    %4046 = vst.msk [vmem:[#allocation2 + $0x88] sm:$0xff] %vm4028, %v3982
    %4047 = vst.msk [vmem:[#allocation2 + $0x90] sm:$0xff] %vm4028, %v3983
    %4048 = vst.msk [vmem:[#allocation2 + $0x98] sm:$0xff] %vm4028, %v3984
    %4049 = vst.msk [vmem:[#allocation2 + $0xa0] sm:$0xff] %vm4028, %v3985
    %4050 = vst.msk [vmem:[#allocation2 + $0xa8] sm:$0xff] %vm4028, %v3986
    %4051 = vst.msk [vmem:[#allocation2 + $0xb0] sm:$0xff] %vm4028, %v3987
    %4052 = vst.msk [vmem:[#allocation2 + $0xb8] sm:$0xff] %vm4028, %v3988
    %4053 = vst.msk [vmem:[#allocation2 + $0xc0] sm:$0xff] %vm4028, %v3989
    %4054 = vst.msk [vmem:[#allocation2 + $0xc8] sm:$0xff] %vm4028, %v3990
    %4055 = vst.msk [vmem:[#allocation2 + $0xd0] sm:$0xff] %vm4028, %v3991
    %4056 = vst.msk [vmem:[#allocation2 + $0xd8] sm:$0xff] %vm4028, %v3992
    %4057 = vst.msk [vmem:[#allocation2 + $0xe0] sm:$0xff] %vm4028, %v3993
    %4058 = vst.msk [vmem:[#allocation2 + $0xe8] sm:$0xff] %vm4028, %v3994
    %4059 = vst.msk [vmem:[#allocation2 + $0xf0] sm:$0xff] %vm4028, %v3995
    %4060 = vst.msk [vmem:[#allocation2 + $0xf8] sm:$0xff] %vm4028, %v3996
    %4061 = vst.msk [vmem:[#allocation2 + $0x100] sm:$0xff] %vm4028, %v3997
    %4062 = vst.msk [vmem:[#allocation2 + $0x108] sm:$0xff] %vm4028, %v3998
    %4063 = vst.msk [vmem:[#allocation2 + $0x110] sm:$0xff] %vm4028, %v3999
    %4064 = vst.msk [vmem:[#allocation2 + $0x118] sm:$0xff] %vm4028, %v4000
    %4065 = vst.msk [vmem:[#allocation2 + $0x120] sm:$0xff] %vm4028, %v4001
    %4066 = vst.msk [vmem:[#allocation2 + $0x128] sm:$0xff] %vm4028, %v4002
    %4067 = vst.msk [vmem:[#allocation2 + $0x130] sm:$0xff] %vm4028, %v4003
    %4068 = vst.msk [vmem:[#allocation2 + $0x138] sm:$0xff] %vm4028, %v4004
    %4069 = vst.msk [vmem:[#allocation2 + $0x140] sm:$0xff] %vm4028, %v4005
    %4070 = vst.msk [vmem:[#allocation2 + $0x148] sm:$0xff] %vm4028, %v4006
    %4071 = vst.msk [vmem:[#allocation2 + $0x150] sm:$0xff] %vm4028, %v4007
    %4072 = vst.msk [vmem:[#allocation2 + $0x158] sm:$0xff] %vm4028, %v4008
    %4073 = vst.msk [vmem:[#allocation2 + $0x160] sm:$0xff] %vm4028, %v4009
    %4074 = vst.msk [vmem:[#allocation2 + $0x168] sm:$0xff] %vm4028, %v4010
    %4075 = vst.msk [vmem:[#allocation2 + $0x170] sm:$0xff] %vm4028, %v4011
    %4076 = vst.msk [vmem:[#allocation2 + $0x178] sm:$0xff] %vm4028, %v4012
    %4077 = vst.msk [vmem:[#allocation2 + $0x180] sm:$0xff] %vm4028, %v4013
    %4078 = vst.msk [vmem:[#allocation2 + $0x188] sm:$0xff] %vm4028, %v4014
    %4079 = vst.msk [vmem:[#allocation2 + $0x190] sm:$0xff] %vm4028, %v4015
    %4080 = vst.msk [vmem:[#allocation2 + $0x198] sm:$0xff] %vm4028, %v4016
    %4081 = vst.msk [vmem:[#allocation2 + $0x1a0] sm:$0xff] %vm4028, %v4017
    %4082 = vst.msk [vmem:[#allocation2 + $0x1a8] sm:$0xff] %vm4028, %v4018
    %4083 = vst.msk [vmem:[#allocation2 + $0x1b0] sm:$0xff] %vm4028, %v4019
    %4084 = vst.msk [vmem:[#allocation2 + $0x1b8] sm:$0xff] %vm4028, %v4020
    %4085 = vst.msk [vmem:[#allocation2 + $0x1c0] sm:$0xff] %vm4028, %v4021
    %4086 = vst.msk [vmem:[#allocation2 + $0x1c8] sm:$0xff] %vm4028, %v4022
    %4087 = vst.msk [vmem:[#allocation2 + $0x1d0] sm:$0xff] %vm4028, %v4023
    %4088 = vst.msk [vmem:[#allocation2 + $0x1d8] sm:$0xff] %vm4028, %v4024
    %4089 = vst.msk [vmem:[#allocation2 + $0x1e0] sm:$0xff] %vm4028, %v4025
    %4090 = vst.msk [vmem:[#allocation2 + $0x1e8] sm:$0xff] %vm4028, %v4026
    %vm4091 = vcmask 259072
    %4092 = vst.msk [vmem:[#allocation2 + $0x1f0] sm:$0x3f] %vm4091, %v4027
    %vm4093 = vcmask 254976
    %4094 = vst.msk [vmem:[#allocation2 + $0x1f6] sm:$0x3] %vm4093, 0.0
    %v4095 = vld [vmem:[#allocation2] ss:$3 sm:$0xff]
    %s4096 = scalar_lea.vmem [#allocation2], 24
    %v4097 = vld [vmem:[%s4096] ss:$3 sm:$0xff]
    %s4098 = scalar_lea.vmem [#allocation2], 48
    %v4099 = vld [vmem:[%s4098] ss:$3 sm:$0xff]
    %s4100 = scalar_lea.vmem [#allocation2], 72
    %v4101 = vld [vmem:[%s4100] ss:$3 sm:$0xff]
    %s4102 = scalar_lea.vmem [#allocation2], 96
    %v4103 = vld [vmem:[%s4102] ss:$3 sm:$0xff]
    %s4104 = scalar_lea.vmem [#allocation2], 120
    %v4105 = vld [vmem:[%s4104] ss:$3 sm:$0xff]
    %s4106 = scalar_lea.vmem [#allocation2], 144
    %v4107 = vld [vmem:[%s4106] ss:$3 sm:$0xff]
    %s4108 = scalar_lea.vmem [#allocation2], 168
    %v4109 = vld [vmem:[%s4108] ss:$3 sm:$0xff]
    %s4110 = scalar_lea.vmem [#allocation2], 192
    %v4111 = vld [vmem:[%s4110] ss:$3 sm:$0xff]
    %s4112 = scalar_lea.vmem [#allocation2], 216
    %v4113 = vld [vmem:[%s4112] ss:$3 sm:$0xff]
    %s4114 = scalar_lea.vmem [#allocation2], 240
    %v4115 = vld [vmem:[%s4114] ss:$3 sm:$0xff]
    %s4116 = scalar_lea.vmem [#allocation2], 264
    %v4117 = vld [vmem:[%s4116] ss:$3 sm:$0xff]
    %s4118 = scalar_lea.vmem [#allocation2], 288
    %v4119 = vld [vmem:[%s4118] ss:$3 sm:$0xff]
    %s4120 = scalar_lea.vmem [#allocation2], 312
    %v4121 = vld [vmem:[%s4120] ss:$3 sm:$0xff]
    %s4122 = scalar_lea.vmem [#allocation2], 336
    %v4123 = vld [vmem:[%s4122] ss:$3 sm:$0xff]
    %s4124 = scalar_lea.vmem [#allocation2], 360
    %v4125 = vld [vmem:[%s4124] ss:$3 sm:$0xff]
    %s4126 = scalar_lea.vmem [#allocation2], 384
    %v4127 = vld [vmem:[%s4126] ss:$3 sm:$0xff]
    %s4128 = scalar_lea.vmem [#allocation2], 408
    %v4129 = vld [vmem:[%s4128] ss:$3 sm:$0xff]
    %s4130 = scalar_lea.vmem [#allocation2], 432
    %v4131 = vld [vmem:[%s4130] ss:$3 sm:$0xff]
    %s4132 = scalar_lea.vmem [#allocation2], 456
    %v4133 = vld [vmem:[%s4132] ss:$3 sm:$0xff]
    %s4134 = scalar_lea.vmem [#allocation2], 480
    %v4135 = vld [vmem:[%s4134] ss:$3 sm:$0xff]
    %s4136 = scalar_lea.vmem [#allocation2], 1
    %v4137 = vld [vmem:[%s4136] ss:$3 sm:$0xff]
    %s4138 = scalar_lea.vmem [#allocation2], 25
    %v4139 = vld [vmem:[%s4138] ss:$3 sm:$0xff]
    %s4140 = scalar_lea.vmem [#allocation2], 49
    %v4141 = vld [vmem:[%s4140] ss:$3 sm:$0xff]
    %s4142 = scalar_lea.vmem [#allocation2], 73
    %v4143 = vld [vmem:[%s4142] ss:$3 sm:$0xff]
    %s4144 = scalar_lea.vmem [#allocation2], 97
    %v4145 = vld [vmem:[%s4144] ss:$3 sm:$0xff]
    %s4146 = scalar_lea.vmem [#allocation2], 121
    %v4147 = vld [vmem:[%s4146] ss:$3 sm:$0xff]
    %s4148 = scalar_lea.vmem [#allocation2], 145
    %v4149 = vld [vmem:[%s4148] ss:$3 sm:$0xff]
    %s4150 = scalar_lea.vmem [#allocation2], 169
    %v4151 = vld [vmem:[%s4150] ss:$3 sm:$0xff]
    %s4152 = scalar_lea.vmem [#allocation2], 193
    %v4153 = vld [vmem:[%s4152] ss:$3 sm:$0xff]
    %s4154 = scalar_lea.vmem [#allocation2], 217
    %v4155 = vld [vmem:[%s4154] ss:$3 sm:$0xff]
    %s4156 = scalar_lea.vmem [#allocation2], 241
    %v4157 = vld [vmem:[%s4156] ss:$3 sm:$0xff]
    %s4158 = scalar_lea.vmem [#allocation2], 265
    %v4159 = vld [vmem:[%s4158] ss:$3 sm:$0xff]
    %s4160 = scalar_lea.vmem [#allocation2], 289
    %v4161 = vld [vmem:[%s4160] ss:$3 sm:$0xff]
    %s4162 = scalar_lea.vmem [#allocation2], 313
    %v4163 = vld [vmem:[%s4162] ss:$3 sm:$0xff]
    %s4164 = scalar_lea.vmem [#allocation2], 337
    %v4165 = vld [vmem:[%s4164] ss:$3 sm:$0xff]
    %s4166 = scalar_lea.vmem [#allocation2], 361
    %v4167 = vld [vmem:[%s4166] ss:$3 sm:$0xff]
    %s4168 = scalar_lea.vmem [#allocation2], 385
    %v4169 = vld [vmem:[%s4168] ss:$3 sm:$0xff]
    %s4170 = scalar_lea.vmem [#allocation2], 409
    %v4171 = vld [vmem:[%s4170] ss:$3 sm:$0xff]
    %s4172 = scalar_lea.vmem [#allocation2], 433
    %v4173 = vld [vmem:[%s4172] ss:$3 sm:$0xff]
    %s4174 = scalar_lea.vmem [#allocation2], 457
    %v4175 = vld [vmem:[%s4174] ss:$3 sm:$0xff]
    %s4176 = scalar_lea.vmem [#allocation2], 481
    %v4177 = vld [vmem:[%s4176] ss:$3 sm:$0xff]
    %v4178 = vmax.f32 %v4095, %v4137
    %v4179 = vmax.f32 %v4097, %v4139
    %v4180 = vmax.f32 %v4099, %v4141
    %v4181 = vmax.f32 %v4101, %v4143
    %v4182 = vmax.f32 %v4103, %v4145
    %v4183 = vmax.f32 %v4105, %v4147
    %v4184 = vmax.f32 %v4107, %v4149
    %v4185 = vmax.f32 %v4109, %v4151
    %v4186 = vmax.f32 %v4111, %v4153
    %v4187 = vmax.f32 %v4113, %v4155
    %v4188 = vmax.f32 %v4115, %v4157
    %v4189 = vmax.f32 %v4117, %v4159
    %v4190 = vmax.f32 %v4119, %v4161
    %v4191 = vmax.f32 %v4121, %v4163
    %v4192 = vmax.f32 %v4123, %v4165
    %v4193 = vmax.f32 %v4125, %v4167
    %v4194 = vmax.f32 %v4127, %v4169
    %v4195 = vmax.f32 %v4129, %v4171
    %v4196 = vmax.f32 %v4131, %v4173
    %v4197 = vmax.f32 %v4133, %v4175
    %v4198 = vmax.f32 %v4135, %v4177
    %s4199 = scalar_lea.vmem [#allocation2], 2
    %v4200 = vld [vmem:[%s4199] ss:$3 sm:$0xff]
    %s4201 = scalar_lea.vmem [#allocation2], 26
    %v4202 = vld [vmem:[%s4201] ss:$3 sm:$0xff]
    %s4203 = scalar_lea.vmem [#allocation2], 50
    %v4204 = vld [vmem:[%s4203] ss:$3 sm:$0xff]
    %s4205 = scalar_lea.vmem [#allocation2], 74
    %v4206 = vld [vmem:[%s4205] ss:$3 sm:$0xff]
    %s4207 = scalar_lea.vmem [#allocation2], 98
    %v4208 = vld [vmem:[%s4207] ss:$3 sm:$0xff]
    %s4209 = scalar_lea.vmem [#allocation2], 122
    %v4210 = vld [vmem:[%s4209] ss:$3 sm:$0xff]
    %s4211 = scalar_lea.vmem [#allocation2], 146
    %v4212 = vld [vmem:[%s4211] ss:$3 sm:$0xff]
    %s4213 = scalar_lea.vmem [#allocation2], 170
    %v4214 = vld [vmem:[%s4213] ss:$3 sm:$0xff]
    %s4215 = scalar_lea.vmem [#allocation2], 194
    %v4216 = vld [vmem:[%s4215] ss:$3 sm:$0xff]
    %s4217 = scalar_lea.vmem [#allocation2], 218
    %v4218 = vld [vmem:[%s4217] ss:$3 sm:$0xff]
    %s4219 = scalar_lea.vmem [#allocation2], 242
    %v4220 = vld [vmem:[%s4219] ss:$3 sm:$0xff]
    %s4221 = scalar_lea.vmem [#allocation2], 266
    %v4222 = vld [vmem:[%s4221] ss:$3 sm:$0xff]
    %s4223 = scalar_lea.vmem [#allocation2], 290
    %v4224 = vld [vmem:[%s4223] ss:$3 sm:$0xff]
    %s4225 = scalar_lea.vmem [#allocation2], 314
    %v4226 = vld [vmem:[%s4225] ss:$3 sm:$0xff]
    %s4227 = scalar_lea.vmem [#allocation2], 338
    %v4228 = vld [vmem:[%s4227] ss:$3 sm:$0xff]
    %s4229 = scalar_lea.vmem [#allocation2], 362
    %v4230 = vld [vmem:[%s4229] ss:$3 sm:$0xff]
    %s4231 = scalar_lea.vmem [#allocation2], 386
    %v4232 = vld [vmem:[%s4231] ss:$3 sm:$0xff]
    %s4233 = scalar_lea.vmem [#allocation2], 410
    %v4234 = vld [vmem:[%s4233] ss:$3 sm:$0xff]
    %s4235 = scalar_lea.vmem [#allocation2], 434
    %v4236 = vld [vmem:[%s4235] ss:$3 sm:$0xff]
    %s4237 = scalar_lea.vmem [#allocation2], 458
    %v4238 = vld [vmem:[%s4237] ss:$3 sm:$0xff]
    %s4239 = scalar_lea.vmem [#allocation2], 482
    %v4240 = vld [vmem:[%s4239] ss:$3 sm:$0xff]
    %v4241 = vmax.f32 %v4178, %v4200
    %v4242 = vmax.f32 %v4179, %v4202
    %v4243 = vmax.f32 %v4180, %v4204
    %v4244 = vmax.f32 %v4181, %v4206
    %v4245 = vmax.f32 %v4182, %v4208
    %v4246 = vmax.f32 %v4183, %v4210
    %v4247 = vmax.f32 %v4184, %v4212
    %v4248 = vmax.f32 %v4185, %v4214
    %v4249 = vmax.f32 %v4186, %v4216
    %v4250 = vmax.f32 %v4187, %v4218
    %v4251 = vmax.f32 %v4188, %v4220
    %v4252 = vmax.f32 %v4189, %v4222
    %v4253 = vmax.f32 %v4190, %v4224
    %v4254 = vmax.f32 %v4191, %v4226
    %v4255 = vmax.f32 %v4192, %v4228
    %v4256 = vmax.f32 %v4193, %v4230
    %v4257 = vmax.f32 %v4194, %v4232
    %v4258 = vmax.f32 %v4195, %v4234
    %v4259 = vmax.f32 %v4196, %v4236
    %v4260 = vmax.f32 %v4197, %v4238
    %v4261 = vmax.f32 %v4198, %v4240
    %v4262 = vpack.c.bf16 %v4242, %v4241
    %v4263 = vpack.c.bf16 %v4244, %v4243
    %v4264 = vpack.c.bf16 %v4246, %v4245
    %v4265 = vpack.c.bf16 %v4248, %v4247
    %v4266 = vpack.c.bf16 %v4250, %v4249
    %v4267 = vpack.c.bf16 %v4252, %v4251
    %v4268 = vpack.c.bf16 %v4254, %v4253
    %v4269 = vpack.c.bf16 %v4256, %v4255
    %v4270 = vpack.c.bf16 %v4258, %v4257
    %v4271 = vpack.c.bf16 %v4260, %v4259
    %v4272 = vpack.c.bf16 %v4261, %v4261
    %v4273 = vld [vmem:[%s6] sm:$0xf]
    %v4274 = vld [vmem:[%s6 + $0x4] sm:$0xf]
    %v4275 = vld [vmem:[%s6 + $0x8] sm:$0xf]
    %v4276 = vld [vmem:[%s6 + $0xc] sm:$0xf]
    %s4277 = scalar_lea.vmem %s6, 16
    %v4278 = vld [vmem:[%s4277] sm:$0xf]
    %v4279 = vld [vmem:[%s4277 + $0x4] sm:$0xf]
    %v4280 = vld [vmem:[%s4277 + $0x8] sm:$0xf]
    %v4281 = vld [vmem:[%s4277 + $0xc] sm:$0xf]
    %v4283 = vshrl.u32 %v4262, 16
    %v4285 = vshll.u32 %v4262, 16
    %v4287 = vrot.slane %v4285, 1
    %v4288 = vor.u32 %v4283, %v4287
    %v4290 = vshll.u32 %v4263, 16
    %v4292 = vrot.slane %v4290, 1
    %v4293 = vsel %vm2086, %v4288, %v4292
    %v4294 = vshrl.u32 %v4263, 16
    %v4296 = vor.u32 %v4294, %v4292
    %v4298 = vshll.u32 %v4264, 16
    %v4300 = vrot.slane %v4298, 1
    %v4301 = vsel %vm2086, %v4296, %v4300
    %v4302 = vshrl.u32 %v4264, 16
    %v4304 = vor.u32 %v4302, %v4300
    %v4306 = vshll.u32 %v4265, 16
    %v4308 = vrot.slane %v4306, 1
    %v4309 = vsel %vm2086, %v4304, %v4308
    %v4310 = vshrl.u32 %v4265, 16
    %v4312 = vor.u32 %v4310, %v4308
    %v4314 = vshll.u32 %v4266, 16
    %v4316 = vrot.slane %v4314, 1
    %v4317 = vsel %vm2086, %v4312, %v4316
    %v4318 = vshrl.u32 %v4266, 16
    %v4320 = vor.u32 %v4318, %v4316
    %v4322 = vshll.u32 %v4267, 16
    %v4324 = vrot.slane %v4322, 1
    %v4325 = vsel %vm2086, %v4320, %v4324
    %v4326 = vshrl.u32 %v4267, 16
    %v4328 = vor.u32 %v4326, %v4324
    %v4330 = vshll.u32 %v4268, 16
    %v4332 = vrot.slane %v4330, 1
    %v4333 = vsel %vm2086, %v4328, %v4332
    %v4334 = vshrl.u32 %v4268, 16
    %v4336 = vor.u32 %v4334, %v4332
    %v4338 = vshll.u32 %v4269, 16
    %v4340 = vrot.slane %v4338, 1
    %v4341 = vsel %vm2086, %v4336, %v4340
    %v4342 = vshrl.u32 %v4269, 16
    %v4344 = vor.u32 %v4342, %v4340
    %v4346 = vshll.u32 %v4270, 16
    %v4348 = vrot.slane %v4346, 1
    %v4349 = vsel %vm2086, %v4344, %v4348
    %v4350 = vshrl.u32 %v4270, 16
    %v4352 = vor.u32 %v4350, %v4348
    %v4354 = vshll.u32 %v4271, 16
    %v4356 = vrot.slane %v4354, 1
    %v4357 = vsel %vm2086, %v4352, %v4356
    %v4358 = vshrl.u32 %v4271, 16
    %v4360 = vor.u32 %v4358, %v4356
    %v4362 = vshll.u32 %v4272, 16
    %v4364 = vrot.slane %v4362, 1
    %v4365 = vsel %vm2086, %v4360, %v4364
    %v4366 = vshrl.u32 %v4272, 16
    %v4368 = vor.u32 %v4366, %v4364
    %v4373 = vunpack.c.l.b16 %v4278
    %v4374 = vunpack.c.l.b16 %v4279
    %v4375 = vunpack.c.l.b16 %v4280
    %v4376 = vunpack.c.l.b16 %v4281
    %v4377 = vpack.c.b16 %v4374, %v4373
    %v4378 = vpack.c.b16 %v4376, %v4375
    %v4382 = vsel %vm4028, %v4293, 0
    %v4385 = vsel %vm4028, %v4301, 0
    %v4388 = vsel %vm4028, %v4309, 0
    %v4391 = vsel %vm4028, %v4317, 0
    %v4394 = vsel %vm4028, %v4325, 0
    %v4397 = vsel %vm4028, %v4333, 0
    %v4400 = vsel %vm4028, %v4341, 0
    %v4403 = vsel %vm4028, %v4349, 0
    %v4406 = vsel %vm4028, %v4357, 0
    %v4409 = vsel %vm4028, %v4365, 0
    %v4412 = vsel %vm4028, %v4368, 0
    %4414 = vmatprep.subr.bf16.mxu0 0
    %4415 = vmatpush1.bf16.msra.mxu0 0
    %4416 = vmatprep.subr.bf16.mxu0 0
    %4417 = vmatpush1.bf16.msra.mxu0 0
    %4418 = vmatprep.subr.bf16.mxu0 0
    %4419 = vmatpush1.bf16.msra.mxu0 0
    %4420 = vmatprep.subr.bf16.mxu0 0
    %4421 = vmatpush1.bf16.msra.mxu0 0
    %4422 = vmatprep.subr.bf16.mxu0 0
    %4423 = vmatpush1.bf16.msra.mxu0 0
    %4424 = vmatprep.subr.bf16.mxu0 0
    %4425 = vmatpush1.bf16.msra.mxu0 0
    %4426 = vmatprep.subr.bf16.mxu0 0
    %4427 = vmatpush1.bf16.msra.mxu0 %v4378
    %4428 = vmatprep.subr.bf16.mxu0 0
    %4429 = vmatpush1.bf16.msra.mxu0 %v4377
    %4430 = vmatprep.subr.bf16.mxu0 0
    %4431 = vmatpush2.bf16.msra.mxu0 0
    %4432 = vmatprep.subr.bf16.mxu0 0
    %4433 = vmatpush2.bf16.msra.mxu0 0
    %4434 = vmatprep.subr.bf16.mxu0 0
    %4435 = vmatpush2.bf16.msra.mxu0 0
    %4436 = vmatprep.subr.bf16.mxu0 0
    %4437 = vmatpush2.bf16.msra.mxu0 0
    %4438 = vmatprep.subr.bf16.mxu0 0
    %4439 = vmatpush2.bf16.msra.mxu0 0
    %4440 = vmatprep.subr.bf16.mxu0 0
    %4441 = vmatpush2.bf16.msra.mxu0 0
    %4442 = vmatprep.subr.bf16.mxu0 0
    %4443 = vmatpush2.bf16.msra.mxu0 0
    %4444 = vmatprep.subr.bf16.mxu0 0
    %4445 = vmatpush2.bf16.msra.mxu0 0
    %4446 = vmatprep.mubr.bf16.mxu0 0
    %4447 = vmatmul.mubr.bf16.gmra.mxu0 %v4382
    %v4448 = vpop.f32.mrf.mxu0
    %v4449 = vadd.f32 0.0, %v4448
    %v4450 = vpop.f32.mrf.mxu0
    %v4451 = vpop.f32.mrf.mxu0
    %v4452 = vadd.f32 0.0, %v4451
    %v4453 = vpop.f32.mrf.mxu0
    %4454 = vmatprep.mubr.bf16.mxu0 0
    %4455 = vmatmul.mubr.bf16.gmra.mxu0 %v4385
    %v4456 = vpop.f32.mrf.mxu0
    %v4457 = vadd.f32 0.0, %v4456
    %v4458 = vpop.f32.mrf.mxu0
    %v4459 = vpop.f32.mrf.mxu0
    %v4460 = vadd.f32 0.0, %v4459
    %v4461 = vpop.f32.mrf.mxu0
    %4462 = vmatprep.mubr.bf16.mxu0 0
    %4463 = vmatmul.mubr.bf16.gmra.mxu0 %v4388
    %v4464 = vpop.f32.mrf.mxu0
    %v4465 = vadd.f32 0.0, %v4464
    %v4466 = vpop.f32.mrf.mxu0
    %v4467 = vpop.f32.mrf.mxu0
    %v4468 = vadd.f32 0.0, %v4467
    %v4469 = vpop.f32.mrf.mxu0
    %4470 = vmatprep.mubr.bf16.mxu0 0
    %4471 = vmatmul.mubr.bf16.gmra.mxu0 %v4391
    %v4472 = vpop.f32.mrf.mxu0
    %v4473 = vadd.f32 0.0, %v4472
    %v4474 = vpop.f32.mrf.mxu0
    %v4475 = vpop.f32.mrf.mxu0
    %v4476 = vadd.f32 0.0, %v4475
    %v4477 = vpop.f32.mrf.mxu0
    %4478 = vmatprep.mubr.bf16.mxu0 0
    %4479 = vmatmul.mubr.bf16.gmra.mxu0 %v4394
    %v4480 = vpop.f32.mrf.mxu0
    %v4481 = vadd.f32 0.0, %v4480
    %v4482 = vpop.f32.mrf.mxu0
    %v4483 = vpop.f32.mrf.mxu0
    %v4484 = vadd.f32 0.0, %v4483
    %v4485 = vpop.f32.mrf.mxu0
    %4486 = vmatprep.mubr.bf16.mxu0 0
    %4487 = vmatmul.mubr.bf16.gmra.mxu0 %v4397
    %v4488 = vpop.f32.mrf.mxu0
    %v4489 = vadd.f32 0.0, %v4488
    %v4490 = vpop.f32.mrf.mxu0
    %v4491 = vpop.f32.mrf.mxu0
    %v4492 = vadd.f32 0.0, %v4491
    %v4493 = vpop.f32.mrf.mxu0
    %4494 = vmatprep.mubr.bf16.mxu0 0
    %4495 = vmatmul.mubr.bf16.gmra.mxu0 %v4400
    %v4496 = vpop.f32.mrf.mxu0
    %v4497 = vadd.f32 0.0, %v4496
    %v4498 = vpop.f32.mrf.mxu0
    %v4499 = vpop.f32.mrf.mxu0
    %v4500 = vadd.f32 0.0, %v4499
    %v4501 = vpop.f32.mrf.mxu0
    %4502 = vmatprep.mubr.bf16.mxu0 0
    %4503 = vmatmul.mubr.bf16.gmra.mxu0 %v4403
    %v4504 = vpop.f32.mrf.mxu0
    %v4505 = vadd.f32 0.0, %v4504
    %v4506 = vpop.f32.mrf.mxu0
    %v4507 = vpop.f32.mrf.mxu0
    %v4508 = vadd.f32 0.0, %v4507
    %v4509 = vpop.f32.mrf.mxu0
    %4510 = vmatprep.mubr.bf16.mxu0 0
    %4511 = vmatmul.mubr.bf16.gmra.mxu0 %v4406
    %v4512 = vpop.f32.mrf.mxu0
    %v4513 = vadd.f32 0.0, %v4512
    %v4514 = vpop.f32.mrf.mxu0
    %v4515 = vpop.f32.mrf.mxu0
    %v4516 = vadd.f32 0.0, %v4515
    %v4517 = vpop.f32.mrf.mxu0
    %4518 = vmatprep.mubr.bf16.mxu0 0
    %4519 = vmatmul.mubr.bf16.gmra.mxu0 %v4409
    %v4520 = vpop.f32.mrf.mxu0
    %v4521 = vadd.f32 0.0, %v4520
    %v4522 = vpop.f32.mrf.mxu0
    %v4523 = vpop.f32.mrf.mxu0
    %v4524 = vadd.f32 0.0, %v4523
    %v4525 = vpop.f32.mrf.mxu0
    %4526 = vmatprep.mubr.bf16.mxu0 0
    %4527 = vmatmul.mubr.bf16.gmra.mxu0 %v4412
    %v4528 = vpop.f32.mrf.mxu0
    %v4529 = vadd.f32 0.0, %v4528
    %v4530 = vpop.f32.mrf.mxu0
    %v4531 = vpop.f32.mrf.mxu0
    %v4532 = vpop.f32.mrf.mxu0
    %4533 = vdwg.mxu0
    %v4538 = vunpack.c.l.b16 %v4273
    %v4539 = vunpack.c.l.b16 %v4274
    %v4540 = vunpack.c.l.b16 %v4275
    %v4541 = vunpack.c.l.b16 %v4276
    %v4542 = vpack.c.b16 %v4539, %v4538
    %v4543 = vpack.c.b16 %v4541, %v4540
    %v4546 = vsel %vm4028, %v4262, 0
    %v4548 = vsel %vm4028, %v4263, 0
    %v4550 = vsel %vm4028, %v4264, 0
    %v4552 = vsel %vm4028, %v4265, 0
    %v4554 = vsel %vm4028, %v4266, 0
    %v4556 = vsel %vm4028, %v4267, 0
    %v4558 = vsel %vm4028, %v4268, 0
    %v4560 = vsel %vm4028, %v4269, 0
    %v4562 = vsel %vm4028, %v4270, 0
    %v4564 = vsel %vm4028, %v4271, 0
    %v4566 = vsel %vm4028, %v4272, 0
    %4568 = vmatprep.subr.bf16.mxu0 0
    %4569 = vmatpush1.bf16.msra.mxu0 0
    %4570 = vmatprep.subr.bf16.mxu0 0
    %4571 = vmatpush1.bf16.msra.mxu0 0
    %4572 = vmatprep.subr.bf16.mxu0 0
    %4573 = vmatpush1.bf16.msra.mxu0 0
    %4574 = vmatprep.subr.bf16.mxu0 0
    %4575 = vmatpush1.bf16.msra.mxu0 0
    %4576 = vmatprep.subr.bf16.mxu0 0
    %4577 = vmatpush1.bf16.msra.mxu0 0
    %4578 = vmatprep.subr.bf16.mxu0 0
    %4579 = vmatpush1.bf16.msra.mxu0 0
    %4580 = vmatprep.subr.bf16.mxu0 0
    %4581 = vmatpush1.bf16.msra.mxu0 %v4543
    %4582 = vmatprep.subr.bf16.mxu0 0
    %4583 = vmatpush1.bf16.msra.mxu0 %v4542
    %4584 = vmatprep.subr.bf16.mxu0 0
    %4585 = vmatpush2.bf16.msra.mxu0 0
    %4586 = vmatprep.subr.bf16.mxu0 0
    %4587 = vmatpush2.bf16.msra.mxu0 0
    %4588 = vmatprep.subr.bf16.mxu0 0
    %4589 = vmatpush2.bf16.msra.mxu0 0
    %4590 = vmatprep.subr.bf16.mxu0 0
    %4591 = vmatpush2.bf16.msra.mxu0 0
    %4592 = vmatprep.subr.bf16.mxu0 0
    %4593 = vmatpush2.bf16.msra.mxu0 0
    %4594 = vmatprep.subr.bf16.mxu0 0
    %4595 = vmatpush2.bf16.msra.mxu0 0
    %4596 = vmatprep.subr.bf16.mxu0 0
    %4597 = vmatpush2.bf16.msra.mxu0 0
    %4598 = vmatprep.subr.bf16.mxu0 0
    %4599 = vmatpush2.bf16.msra.mxu0 0
    %4600 = vmatprep.mubr.bf16.mxu0 0
    %4601 = vmatmul.mubr.bf16.gmra.mxu0 %v4546
    %v4602 = vpop.f32.mrf.mxu0
    %v4603 = vadd.f32 %v4449, %v4602
    %v4604 = vpop.f32.mrf.mxu0
    %v4605 = vpop.f32.mrf.mxu0
    %v4606 = vadd.f32 %v4452, %v4605
    %v4607 = vpop.f32.mrf.mxu0
    %4608 = vmatprep.mubr.bf16.mxu0 0
    %4609 = vmatmul.mubr.bf16.gmra.mxu0 %v4548
    %v4610 = vpop.f32.mrf.mxu0
    %v4611 = vadd.f32 %v4457, %v4610
    %v4612 = vpop.f32.mrf.mxu0
    %v4613 = vpop.f32.mrf.mxu0
    %v4614 = vadd.f32 %v4460, %v4613
    %v4615 = vpop.f32.mrf.mxu0
    %4616 = vmatprep.mubr.bf16.mxu0 0
    %4617 = vmatmul.mubr.bf16.gmra.mxu0 %v4550
    %v4618 = vpop.f32.mrf.mxu0
    %v4619 = vadd.f32 %v4465, %v4618
    %v4620 = vpop.f32.mrf.mxu0
    %v4621 = vpop.f32.mrf.mxu0
    %v4622 = vadd.f32 %v4468, %v4621
    %v4623 = vpop.f32.mrf.mxu0
    %4624 = vmatprep.mubr.bf16.mxu0 0
    %4625 = vmatmul.mubr.bf16.gmra.mxu0 %v4552
    %v4626 = vpop.f32.mrf.mxu0
    %v4627 = vadd.f32 %v4473, %v4626
    %v4628 = vpop.f32.mrf.mxu0
    %v4629 = vpop.f32.mrf.mxu0
    %v4630 = vadd.f32 %v4476, %v4629
    %v4631 = vpop.f32.mrf.mxu0
    %4632 = vmatprep.mubr.bf16.mxu0 0
    %4633 = vmatmul.mubr.bf16.gmra.mxu0 %v4554
    %v4634 = vpop.f32.mrf.mxu0
    %v4635 = vadd.f32 %v4481, %v4634
    %v4636 = vpop.f32.mrf.mxu0
    %v4637 = vpop.f32.mrf.mxu0
    %v4638 = vadd.f32 %v4484, %v4637
    %v4639 = vpop.f32.mrf.mxu0
    %4640 = vmatprep.mubr.bf16.mxu0 0
    %4641 = vmatmul.mubr.bf16.gmra.mxu0 %v4556
    %v4642 = vpop.f32.mrf.mxu0
    %v4643 = vadd.f32 %v4489, %v4642
    %v4644 = vpop.f32.mrf.mxu0
    %v4645 = vpop.f32.mrf.mxu0
    %v4646 = vadd.f32 %v4492, %v4645
    %v4647 = vpop.f32.mrf.mxu0
    %4648 = vmatprep.mubr.bf16.mxu0 0
    %4649 = vmatmul.mubr.bf16.gmra.mxu0 %v4558
    %v4650 = vpop.f32.mrf.mxu0
    %v4651 = vadd.f32 %v4497, %v4650
    %v4652 = vpop.f32.mrf.mxu0
    %v4653 = vpop.f32.mrf.mxu0
    %v4654 = vadd.f32 %v4500, %v4653
    %v4655 = vpop.f32.mrf.mxu0
    %4656 = vmatprep.mubr.bf16.mxu0 0
    %4657 = vmatmul.mubr.bf16.gmra.mxu0 %v4560
    %v4658 = vpop.f32.mrf.mxu0
    %v4659 = vadd.f32 %v4505, %v4658
    %v4660 = vpop.f32.mrf.mxu0
    %v4661 = vpop.f32.mrf.mxu0
    %v4662 = vadd.f32 %v4508, %v4661
    %v4663 = vpop.f32.mrf.mxu0
    %4664 = vmatprep.mubr.bf16.mxu0 0
    %4665 = vmatmul.mubr.bf16.gmra.mxu0 %v4562
    %v4666 = vpop.f32.mrf.mxu0
    %v4667 = vadd.f32 %v4513, %v4666
    %v4668 = vpop.f32.mrf.mxu0
    %v4669 = vpop.f32.mrf.mxu0
    %v4670 = vadd.f32 %v4516, %v4669
    %v4671 = vpop.f32.mrf.mxu0
    %4672 = vmatprep.mubr.bf16.mxu0 0
    %4673 = vmatmul.mubr.bf16.gmra.mxu0 %v4564
    %v4674 = vpop.f32.mrf.mxu0
    %v4675 = vadd.f32 %v4521, %v4674
    %v4676 = vpop.f32.mrf.mxu0
    %v4677 = vpop.f32.mrf.mxu0
    %v4678 = vadd.f32 %v4524, %v4677
    %v4679 = vpop.f32.mrf.mxu0
    %4680 = vmatprep.mubr.bf16.mxu0 0
    %4681 = vmatmul.mubr.bf16.gmra.mxu0 %v4566
    %v4682 = vpop.f32.mrf.mxu0
    %v4683 = vadd.f32 %v4529, %v4682
    %v4684 = vpop.f32.mrf.mxu0
    %v4685 = vpop.f32.mrf.mxu0
    %v4686 = vpop.f32.mrf.mxu0
    %4687 = vdwg.mxu0
    %s4688 = scalar_lea.vmem %s6, 32
    %v4689 = vld [vmem:[%s4688] sm:$0xf]
    %v4690 = vld [vmem:[%s4688 + $0x4] sm:$0xf]
    %v4691 = vld [vmem:[%s4688 + $0x8] sm:$0xf]
    %v4692 = vld [vmem:[%s4688 + $0xc] sm:$0xf]
    %v4704 = vrot.slane %v4262, 1
    %v4705 = vrot.slane %v4263, 1
    %v4706 = vsel %vm3126, %v4704, %v4705
    %v4707 = vrot.slane %v4264, 1
    %v4708 = vsel %vm3126, %v4705, %v4707
    %v4709 = vrot.slane %v4265, 1
    %v4710 = vsel %vm3126, %v4707, %v4709
    %v4711 = vrot.slane %v4266, 1
    %v4712 = vsel %vm3126, %v4709, %v4711
    %v4713 = vrot.slane %v4267, 1
    %v4714 = vsel %vm3126, %v4711, %v4713
    %v4715 = vrot.slane %v4268, 1
    %v4716 = vsel %vm3126, %v4713, %v4715
    %v4717 = vrot.slane %v4269, 1
    %v4718 = vsel %vm3126, %v4715, %v4717
    %v4719 = vrot.slane %v4270, 1
    %v4720 = vsel %vm3126, %v4717, %v4719
    %v4721 = vrot.slane %v4271, 1
    %v4722 = vsel %vm3126, %v4719, %v4721
    %v4723 = vrot.slane %v4272, 1
    %v4724 = vsel %vm3126, %v4721, %v4723
    %v4729 = vunpack.c.l.b16 %v4689
    %v4730 = vunpack.c.l.b16 %v4690
    %v4731 = vunpack.c.l.b16 %v4691
    %v4732 = vunpack.c.l.b16 %v4692
    %v4733 = vpack.c.b16 %v4730, %v4729
    %v4734 = vpack.c.b16 %v4732, %v4731
    %v4738 = vsel %vm4028, %v4706, 0
    %v4741 = vsel %vm4028, %v4708, 0
    %v4744 = vsel %vm4028, %v4710, 0
    %v4747 = vsel %vm4028, %v4712, 0
    %v4750 = vsel %vm4028, %v4714, 0
    %v4753 = vsel %vm4028, %v4716, 0
    %v4756 = vsel %vm4028, %v4718, 0
    %v4759 = vsel %vm4028, %v4720, 0
    %v4762 = vsel %vm4028, %v4722, 0
    %v4765 = vsel %vm4028, %v4724, 0
    %v4768 = vsel %vm4028, %v4723, 0
    %4770 = vmatprep.subr.bf16.mxu0 0
    %4771 = vmatpush1.bf16.msra.mxu0 0
    %4772 = vmatprep.subr.bf16.mxu0 0
    %4773 = vmatpush1.bf16.msra.mxu0 0
    %4774 = vmatprep.subr.bf16.mxu0 0
    %4775 = vmatpush1.bf16.msra.mxu0 0
    %4776 = vmatprep.subr.bf16.mxu0 0
    %4777 = vmatpush1.bf16.msra.mxu0 0
    %4778 = vmatprep.subr.bf16.mxu0 0
    %4779 = vmatpush1.bf16.msra.mxu0 0
    %4780 = vmatprep.subr.bf16.mxu0 0
    %4781 = vmatpush1.bf16.msra.mxu0 0
    %4782 = vmatprep.subr.bf16.mxu0 0
    %4783 = vmatpush1.bf16.msra.mxu0 %v4734
    %4784 = vmatprep.subr.bf16.mxu0 0
    %4785 = vmatpush1.bf16.msra.mxu0 %v4733
    %4786 = vmatprep.subr.bf16.mxu0 0
    %4787 = vmatpush2.bf16.msra.mxu0 0
    %4788 = vmatprep.subr.bf16.mxu0 0
    %4789 = vmatpush2.bf16.msra.mxu0 0
    %4790 = vmatprep.subr.bf16.mxu0 0
    %4791 = vmatpush2.bf16.msra.mxu0 0
    %4792 = vmatprep.subr.bf16.mxu0 0
    %4793 = vmatpush2.bf16.msra.mxu0 0
    %4794 = vmatprep.subr.bf16.mxu0 0
    %4795 = vmatpush2.bf16.msra.mxu0 0
    %4796 = vmatprep.subr.bf16.mxu0 0
    %4797 = vmatpush2.bf16.msra.mxu0 0
    %4798 = vmatprep.subr.bf16.mxu0 0
    %4799 = vmatpush2.bf16.msra.mxu0 0
    %4800 = vmatprep.subr.bf16.mxu0 0
    %4801 = vmatpush2.bf16.msra.mxu0 0
    %4802 = vmatprep.mubr.bf16.mxu0 0
    %4803 = vmatmul.mubr.bf16.gmra.mxu0 %v4738
    %v4804 = vpop.f32.mrf.mxu0
    %v4805 = vadd.f32 0.0, %v4804
    %v4806 = vpop.f32.mrf.mxu0
    %v4807 = vpop.f32.mrf.mxu0
    %v4808 = vadd.f32 0.0, %v4807
    %v4809 = vpop.f32.mrf.mxu0
    %4810 = vmatprep.mubr.bf16.mxu0 0
    %4811 = vmatmul.mubr.bf16.gmra.mxu0 %v4741
    %v4812 = vpop.f32.mrf.mxu0
    %v4813 = vadd.f32 0.0, %v4812
    %v4814 = vpop.f32.mrf.mxu0
    %v4815 = vpop.f32.mrf.mxu0
    %v4816 = vadd.f32 0.0, %v4815
    %v4817 = vpop.f32.mrf.mxu0
    %4818 = vmatprep.mubr.bf16.mxu0 0
    %4819 = vmatmul.mubr.bf16.gmra.mxu0 %v4744
    %v4820 = vpop.f32.mrf.mxu0
    %v4821 = vadd.f32 0.0, %v4820
    %v4822 = vpop.f32.mrf.mxu0
    %v4823 = vpop.f32.mrf.mxu0
    %v4824 = vadd.f32 0.0, %v4823
    %v4825 = vpop.f32.mrf.mxu0
    %4826 = vmatprep.mubr.bf16.mxu0 0
    %4827 = vmatmul.mubr.bf16.gmra.mxu0 %v4747
    %v4828 = vpop.f32.mrf.mxu0
    %v4829 = vadd.f32 0.0, %v4828
    %v4830 = vpop.f32.mrf.mxu0
    %v4831 = vpop.f32.mrf.mxu0
    %v4832 = vadd.f32 0.0, %v4831
    %v4833 = vpop.f32.mrf.mxu0
    %4834 = vmatprep.mubr.bf16.mxu0 0
    %4835 = vmatmul.mubr.bf16.gmra.mxu0 %v4750
    %v4836 = vpop.f32.mrf.mxu0
    %v4837 = vadd.f32 0.0, %v4836
    %v4838 = vpop.f32.mrf.mxu0
    %v4839 = vpop.f32.mrf.mxu0
    %v4840 = vadd.f32 0.0, %v4839
    %v4841 = vpop.f32.mrf.mxu0
    %4842 = vmatprep.mubr.bf16.mxu0 0
    %4843 = vmatmul.mubr.bf16.gmra.mxu0 %v4753
    %v4844 = vpop.f32.mrf.mxu0
    %v4845 = vadd.f32 0.0, %v4844
    %v4846 = vpop.f32.mrf.mxu0
    %v4847 = vpop.f32.mrf.mxu0
    %v4848 = vadd.f32 0.0, %v4847
    %v4849 = vpop.f32.mrf.mxu0
    %4850 = vmatprep.mubr.bf16.mxu0 0
    %4851 = vmatmul.mubr.bf16.gmra.mxu0 %v4756
    %v4852 = vpop.f32.mrf.mxu0
    %v4853 = vadd.f32 0.0, %v4852
    %v4854 = vpop.f32.mrf.mxu0
    %v4855 = vpop.f32.mrf.mxu0
    %v4856 = vadd.f32 0.0, %v4855
    %v4857 = vpop.f32.mrf.mxu0
    %4858 = vmatprep.mubr.bf16.mxu0 0
    %4859 = vmatmul.mubr.bf16.gmra.mxu0 %v4759
    %v4860 = vpop.f32.mrf.mxu0
    %v4861 = vadd.f32 0.0, %v4860
    %v4862 = vpop.f32.mrf.mxu0
    %v4863 = vpop.f32.mrf.mxu0
    %v4864 = vadd.f32 0.0, %v4863
    %v4865 = vpop.f32.mrf.mxu0
    %4866 = vmatprep.mubr.bf16.mxu0 0
    %4867 = vmatmul.mubr.bf16.gmra.mxu0 %v4762
    %v4868 = vpop.f32.mrf.mxu0
    %v4869 = vadd.f32 0.0, %v4868
    %v4870 = vpop.f32.mrf.mxu0
    %v4871 = vpop.f32.mrf.mxu0
    %v4872 = vadd.f32 0.0, %v4871
    %v4873 = vpop.f32.mrf.mxu0
    %4874 = vmatprep.mubr.bf16.mxu0 0
    %4875 = vmatmul.mubr.bf16.gmra.mxu0 %v4765
    %v4876 = vpop.f32.mrf.mxu0
    %v4877 = vadd.f32 0.0, %v4876
    %v4878 = vpop.f32.mrf.mxu0
    %v4879 = vpop.f32.mrf.mxu0
    %v4880 = vadd.f32 0.0, %v4879
    %v4881 = vpop.f32.mrf.mxu0
    %4882 = vmatprep.mubr.bf16.mxu0 0
    %4883 = vmatmul.mubr.bf16.gmra.mxu0 %v4768
    %v4884 = vpop.f32.mrf.mxu0
    %v4885 = vadd.f32 0.0, %v4884
    %v4886 = vpop.f32.mrf.mxu0
    %v4887 = vpop.f32.mrf.mxu0
    %v4888 = vpop.f32.mrf.mxu0
    %4889 = vdwg.mxu0
    %v4890 = vadd.f32 %v4603, %v4805
    %v4891 = vadd.f32 %v4606, %v4808
    %v4892 = vadd.f32 %v4611, %v4813
    %v4893 = vadd.f32 %v4614, %v4816
    %v4894 = vadd.f32 %v4619, %v4821
    %v4895 = vadd.f32 %v4622, %v4824
    %v4896 = vadd.f32 %v4627, %v4829
    %v4897 = vadd.f32 %v4630, %v4832
    %v4898 = vadd.f32 %v4635, %v4837
    %v4899 = vadd.f32 %v4638, %v4840
    %v4900 = vadd.f32 %v4643, %v4845
    %v4901 = vadd.f32 %v4646, %v4848
    %v4902 = vadd.f32 %v4651, %v4853
    %v4903 = vadd.f32 %v4654, %v4856
    %v4904 = vadd.f32 %v4659, %v4861
    %v4905 = vadd.f32 %v4662, %v4864
    %v4906 = vadd.f32 %v4667, %v4869
    %v4907 = vadd.f32 %v4670, %v4872
    %v4908 = vadd.f32 %v4675, %v4877
    %v4909 = vadd.f32 %v4678, %v4880
    %v4910 = vadd.f32 %v4683, %v4885
    %v4911 = vld [vmem:[%s7] sm:$0x1]
    %v4913 = vlaneseq
    %v4914 = vshrl.u32 %v4913, 7
    %v4915 = vsub.s32 0, %v4914
    %v4916 = vrot.slane %v4911, %v4915
    %v4918 = vadd.f32 %v4890, %v4916
    %v4919 = vadd.f32 %v4891, %v4916
    %v4920 = vadd.f32 %v4892, %v4916
    %v4921 = vadd.f32 %v4893, %v4916
    %v4922 = vadd.f32 %v4894, %v4916
    %v4923 = vadd.f32 %v4895, %v4916
    %v4924 = vadd.f32 %v4896, %v4916
    %v4925 = vadd.f32 %v4897, %v4916
    %v4926 = vadd.f32 %v4898, %v4916
    %v4927 = vadd.f32 %v4899, %v4916
    %v4928 = vadd.f32 %v4900, %v4916
    %v4929 = vadd.f32 %v4901, %v4916
    %v4930 = vadd.f32 %v4902, %v4916
    %v4931 = vadd.f32 %v4903, %v4916
    %v4932 = vadd.f32 %v4904, %v4916
    %v4933 = vadd.f32 %v4905, %v4916
    %v4934 = vadd.f32 %v4906, %v4916
    %v4935 = vadd.f32 %v4907, %v4916
    %v4936 = vadd.f32 %v4908, %v4916
    %v4937 = vadd.f32 %v4909, %v4916
    %v4938 = vadd.f32 %v4910, %v4916
    %v4939 = vmul.f32 %v4918, 0.5
    %v4940 = vmul.f32 %v4919, 0.5
    %v4941 = vmul.f32 %v4920, 0.5
    %v4942 = vmul.f32 %v4921, 0.5
    %v4943 = vmul.f32 %v4922, 0.5
    %v4944 = vmul.f32 %v4923, 0.5
    %v4945 = vmul.f32 %v4924, 0.5
    %v4946 = vmul.f32 %v4925, 0.5
    %v4947 = vmul.f32 %v4926, 0.5
    %v4948 = vmul.f32 %v4927, 0.5
    %v4949 = vmul.f32 %v4928, 0.5
    %v4950 = vmul.f32 %v4929, 0.5
    %v4951 = vmul.f32 %v4930, 0.5
    %v4952 = vmul.f32 %v4931, 0.5
    %v4953 = vmul.f32 %v4932, 0.5
    %v4954 = vmul.f32 %v4933, 0.5
    %v4955 = vmul.f32 %v4934, 0.5
    %v4956 = vmul.f32 %v4935, 0.5
    %v4957 = vmul.f32 %v4936, 0.5
    %v4958 = vmul.f32 %v4937, 0.5
    %v4959 = vmul.f32 %v4938, 0.5
    %v4960 = vmul.f32 %v4918, 0.70710677
    %v4961 = vmul.f32 %v4919, 0.70710677
    %v4962 = vmul.f32 %v4920, 0.70710677
    %v4963 = vmul.f32 %v4921, 0.70710677
    %v4964 = vmul.f32 %v4922, 0.70710677
    %v4965 = vmul.f32 %v4923, 0.70710677
    %v4966 = vmul.f32 %v4924, 0.70710677
    %v4967 = vmul.f32 %v4925, 0.70710677
    %v4968 = vmul.f32 %v4926, 0.70710677
    %v4969 = vmul.f32 %v4927, 0.70710677
    %v4970 = vmul.f32 %v4928, 0.70710677
    %v4971 = vmul.f32 %v4929, 0.70710677
    %v4972 = vmul.f32 %v4930, 0.70710677
    %v4973 = vmul.f32 %v4931, 0.70710677
    %v4974 = vmul.f32 %v4932, 0.70710677
    %v4975 = vmul.f32 %v4933, 0.70710677
    %v4976 = vmul.f32 %v4934, 0.70710677
    %v4977 = vmul.f32 %v4935, 0.70710677
    %v4978 = vmul.f32 %v4936, 0.70710677
    %v4979 = vmul.f32 %v4937, 0.70710677
    %v4980 = vmul.f32 %v4938, 0.70710677
    %v4981 = verf.f32.pop %v4960
    %v4982 = verf.f32.pop %v4961
    %v4983 = verf.f32.pop %v4962
    %v4984 = verf.f32.pop %v4963
    %v4985 = verf.f32.pop %v4964
    %v4986 = verf.f32.pop %v4965
    %v4987 = verf.f32.pop %v4966
    %v4988 = verf.f32.pop %v4967
    %v4989 = verf.f32.pop %v4968
    %v4990 = verf.f32.pop %v4969
    %v4991 = verf.f32.pop %v4970
    %v4992 = verf.f32.pop %v4971
    %v4993 = verf.f32.pop %v4972
    %v4994 = verf.f32.pop %v4973
    %v4995 = verf.f32.pop %v4974
    %v4996 = verf.f32.pop %v4975
    %v4997 = verf.f32.pop %v4976
    %v4998 = verf.f32.pop %v4977
    %v4999 = verf.f32.pop %v4978
    %v5000 = verf.f32.pop %v4979
    %v5001 = verf.f32.pop %v4980
    %v5002 = vadd.f32 %v4981, 1.0
    %v5003 = vadd.f32 %v4982, 1.0
    %v5004 = vadd.f32 %v4983, 1.0
    %v5005 = vadd.f32 %v4984, 1.0
    %v5006 = vadd.f32 %v4985, 1.0
    %v5007 = vadd.f32 %v4986, 1.0
    %v5008 = vadd.f32 %v4987, 1.0
    %v5009 = vadd.f32 %v4988, 1.0
    %v5010 = vadd.f32 %v4989, 1.0
    %v5011 = vadd.f32 %v4990, 1.0
    %v5012 = vadd.f32 %v4991, 1.0
    %v5013 = vadd.f32 %v4992, 1.0
    %v5014 = vadd.f32 %v4993, 1.0
    %v5015 = vadd.f32 %v4994, 1.0
    %v5016 = vadd.f32 %v4995, 1.0
    %v5017 = vadd.f32 %v4996, 1.0
    %v5018 = vadd.f32 %v4997, 1.0
    %v5019 = vadd.f32 %v4998, 1.0
    %v5020 = vadd.f32 %v4999, 1.0
    %v5021 = vadd.f32 %v5000, 1.0
    %v5022 = vadd.f32 %v5001, 1.0
    %v5023 = vmul.f32 %v4939, %v5002
    %v5024 = vmul.f32 %v4940, %v5003
    %v5025 = vmul.f32 %v4941, %v5004
    %v5026 = vmul.f32 %v4942, %v5005
    %v5027 = vmul.f32 %v4943, %v5006
    %v5028 = vmul.f32 %v4944, %v5007
    %v5029 = vmul.f32 %v4945, %v5008
    %v5030 = vmul.f32 %v4946, %v5009
    %v5031 = vmul.f32 %v4947, %v5010
    %v5032 = vmul.f32 %v4948, %v5011
    %v5033 = vmul.f32 %v4949, %v5012
    %v5034 = vmul.f32 %v4950, %v5013
    %v5035 = vmul.f32 %v4951, %v5014
    %v5036 = vmul.f32 %v4952, %v5015
    %v5037 = vmul.f32 %v4953, %v5016
    %v5038 = vmul.f32 %v4954, %v5017
    %v5039 = vmul.f32 %v4955, %v5018
    %v5040 = vmul.f32 %v4956, %v5019
    %v5041 = vmul.f32 %v4957, %v5020
    %v5042 = vmul.f32 %v4958, %v5021
    %v5043 = vmul.f32 %v4959, %v5022
    %vm5044 = vcmask 523264
    %5045 = vst.msk [vmem:[#allocation3] sm:$0xff] %vm5044, %v5023
    %5046 = vst.msk [vmem:[#allocation3 + $0x8] sm:$0xff] %vm5044, %v5024
    %5047 = vst.msk [vmem:[#allocation3 + $0x10] sm:$0xff] %vm5044, %v5025
    %5048 = vst.msk [vmem:[#allocation3 + $0x18] sm:$0xff] %vm5044, %v5026
    %5049 = vst.msk [vmem:[#allocation3 + $0x20] sm:$0xff] %vm5044, %v5027
    %5050 = vst.msk [vmem:[#allocation3 + $0x28] sm:$0xff] %vm5044, %v5028
    %5051 = vst.msk [vmem:[#allocation3 + $0x30] sm:$0xff] %vm5044, %v5029
    %5052 = vst.msk [vmem:[#allocation3 + $0x38] sm:$0xff] %vm5044, %v5030
    %5053 = vst.msk [vmem:[#allocation3 + $0x40] sm:$0xff] %vm5044, %v5031
    %5054 = vst.msk [vmem:[#allocation3 + $0x48] sm:$0xff] %vm5044, %v5032
    %5055 = vst.msk [vmem:[#allocation3 + $0x50] sm:$0xff] %vm5044, %v5033
    %5056 = vst.msk [vmem:[#allocation3 + $0x58] sm:$0xff] %vm5044, %v5034
    %5057 = vst.msk [vmem:[#allocation3 + $0x60] sm:$0xff] %vm5044, %v5035
    %5058 = vst.msk [vmem:[#allocation3 + $0x68] sm:$0xff] %vm5044, %v5036
    %5059 = vst.msk [vmem:[#allocation3 + $0x70] sm:$0xff] %vm5044, %v5037
    %5060 = vst.msk [vmem:[#allocation3 + $0x78] sm:$0xff] %vm5044, %v5038
    %5061 = vst.msk [vmem:[#allocation3 + $0x80] sm:$0xff] %vm5044, %v5039
    %5062 = vst.msk [vmem:[#allocation3 + $0x88] sm:$0xff] %vm5044, %v5040
    %5063 = vst.msk [vmem:[#allocation3 + $0x90] sm:$0xff] %vm5044, %v5041
    %5064 = vst.msk [vmem:[#allocation3 + $0x98] sm:$0xff] %vm5044, %v5042
    %vm5065 = vcmask 521216
    %5066 = vst.msk [vmem:[#allocation3 + $0xa0] sm:$0x3f] %vm5065, %v5043
    %vm5067 = vcmask 517120
    %5068 = vst.msk [vmem:[#allocation3 + $0xa6] sm:$0x3] %vm5067, 0.0
    %v5069 = vld [vmem:[#allocation3] ss:$21 sm:$0xff]
    %s5070 = scalar_lea.vmem [#allocation3], 1
    %v5071 = vld [vmem:[%s5070] ss:$21 sm:$0xff]
    %v5072 = vmax.f32 %v5069, %v5071
    %s5073 = scalar_lea.vmem [#allocation3], 2
    %v5074 = vld [vmem:[%s5073] ss:$21 sm:$0xff]
    %v5075 = vmax.f32 %v5072, %v5074
    %5076 = vst.msk [vmem:[#allocation4] sm:$0xff] %vm5044, %v5075
    %s5077 = scalar_lea.vmem [#allocation3], 3
    %v5078 = vld [vmem:[%s5077] ss:$21 sm:$0xff]
    %s5079 = scalar_lea.vmem [#allocation3], 4
    %v5080 = vld [vmem:[%s5079] ss:$21 sm:$0xff]
    %v5081 = vmax.f32 %v5078, %v5080
    %s5082 = scalar_lea.vmem [#allocation3], 5
    %v5083 = vld [vmem:[%s5082] ss:$21 sm:$0xff]
    %v5084 = vmax.f32 %v5081, %v5083
    %5086 = vrot.lane.b32.xlu0 %v5084, 64
    %v5087 = vpop.permute.xlu0 %5086
    %vm5089 = vcmask 1048064
    %5090 = vst.msk [vmem:[#allocation4] sm:$0xff] %vm5089, %v5087
    %s5091 = scalar_lea.vmem [#allocation3], 6
    %v5092 = vld [vmem:[%s5091] ss:$21 sm:$0xff]
    %s5093 = scalar_lea.vmem [#allocation3], 7
    %v5094 = vld [vmem:[%s5093] ss:$21 sm:$0xff]
    %v5095 = vmax.f32 %v5092, %v5094
    %s5096 = scalar_lea.vmem [#allocation3], 8
    %v5097 = vld [vmem:[%s5096] ss:$21 sm:$0xff]
    %v5098 = vmax.f32 %v5095, %v5097
    %5099 = vst.msk [vmem:[#allocation4 + $0x8] sm:$0xff] %vm5044, %v5098
    %s5100 = scalar_lea.vmem [#allocation3], 9
    %v5101 = vld [vmem:[%s5100] ss:$21 sm:$0xff]
    %s5102 = scalar_lea.vmem [#allocation3], 10
    %v5103 = vld [vmem:[%s5102] ss:$21 sm:$0xff]
    %v5104 = vmax.f32 %v5101, %v5103
    %s5105 = scalar_lea.vmem [#allocation3], 11
    %v5106 = vld [vmem:[%s5105] ss:$21 sm:$0xff]
    %v5107 = vmax.f32 %v5104, %v5106
    %5109 = vrot.lane.b32.xlu0 %v5107, 64
    %v5110 = vpop.permute.xlu0 %5109
    %5112 = vst.msk [vmem:[#allocation4 + $0x8] sm:$0xff] %vm5089, %v5110
    %s5113 = scalar_lea.vmem [#allocation3], 12
    %v5114 = vld [vmem:[%s5113] ss:$21 sm:$0xff]
    %s5115 = scalar_lea.vmem [#allocation3], 13
    %v5116 = vld [vmem:[%s5115] ss:$21 sm:$0xff]
    %v5117 = vmax.f32 %v5114, %v5116
    %s5118 = scalar_lea.vmem [#allocation3], 14
    %v5119 = vld [vmem:[%s5118] ss:$21 sm:$0xff]
    %v5120 = vmax.f32 %v5117, %v5119
    %5121 = vst.msk [vmem:[#allocation4 + $0x10] sm:$0xff] %vm5044, %v5120
    %s5122 = scalar_lea.vmem [#allocation3], 15
    %v5123 = vld [vmem:[%s5122] ss:$21 sm:$0xff]
    %s5124 = scalar_lea.vmem [#allocation3], 16
    %v5125 = vld [vmem:[%s5124] ss:$21 sm:$0xff]
    %v5126 = vmax.f32 %v5123, %v5125
    %s5127 = scalar_lea.vmem [#allocation3], 17
    %v5128 = vld [vmem:[%s5127] ss:$21 sm:$0xff]
    %v5129 = vmax.f32 %v5126, %v5128
    %5131 = vrot.lane.b32.xlu0 %v5129, 64
    %v5132 = vpop.permute.xlu0 %5131
    %5134 = vst.msk [vmem:[#allocation4 + $0x10] sm:$0xff] %vm5089, %v5132
    %v5135 = vld [vmem:[#allocation4] sm:$0xff]
    %v5136 = vld [vmem:[#allocation4 + $0x8] sm:$0xff]
    %v5137 = vld [vmem:[#allocation4 + $0x10] sm:$0xff]
    %v5138 = vpack.c.bf16 %v5135, %v5135
    %v5139 = vpack.c.bf16 %v5136, %v5136
    %v5140 = vpack.c.bf16 %v5137, %v5137
    %v5141 = vld [vmem:[%s8] sm:$0xf]
    %v5142 = vld [vmem:[%s8 + $0x4] sm:$0xf]
    %v5143 = vld [vmem:[%s8 + $0x8] sm:$0xf]
    %v5144 = vld [vmem:[%s8 + $0xc] sm:$0xf]
    %v5145 = vld [vmem:[%s8 + $0x10] sm:$0xf]
    %v5146 = vld [vmem:[%s8 + $0x14] sm:$0xf]
    %v5147 = vld [vmem:[%s8 + $0x18] sm:$0xf]
    %v5148 = vld [vmem:[%s8 + $0x1c] sm:$0xf]
    %v5149 = vld [vmem:[%s8 + $0x20] sm:$0xf]
    %v5150 = vld [vmem:[%s8 + $0x24] sm:$0xf]
    %v5151 = vld [vmem:[%s8 + $0x28] sm:$0xf]
    %v5152 = vld [vmem:[%s8 + $0x2c] sm:$0xf]
    %v5153 = vld [vmem:[%s8 + $0x30] sm:$0xf]
    %v5154 = vld [vmem:[%s8 + $0x34] sm:$0xf]
    %v5155 = vld [vmem:[%s8 + $0x38] sm:$0xf]
    %v5156 = vld [vmem:[%s8 + $0x3c] sm:$0xf]
    %v5157 = vld [vmem:[%s8 + $0x40] sm:$0xf]
    %v5158 = vld [vmem:[%s8 + $0x44] sm:$0xf]
    %v5159 = vld [vmem:[%s8 + $0x48] sm:$0xf]
    %v5160 = vld [vmem:[%s8 + $0x4c] sm:$0xf]
    %v5161 = vld [vmem:[%s8 + $0x50] sm:$0xf]
    %v5162 = vld [vmem:[%s8 + $0x54] sm:$0xf]
    %v5163 = vld [vmem:[%s8 + $0x58] sm:$0xf]
    %v5164 = vld [vmem:[%s8 + $0x5c] sm:$0xf]
    %v5165 = vld [vmem:[%s8 + $0x60] sm:$0xf]
    %v5166 = vld [vmem:[%s8 + $0x64] sm:$0xf]
    %v5167 = vld [vmem:[%s8 + $0x68] sm:$0xf]
    %v5168 = vld [vmem:[%s8 + $0x6c] sm:$0xf]
    %v5169 = vld [vmem:[%s8 + $0x70] sm:$0xf]
    %v5170 = vld [vmem:[%s8 + $0x74] sm:$0xf]
    %v5171 = vld [vmem:[%s8 + $0x78] sm:$0xf]
    %v5172 = vld [vmem:[%s8 + $0x7c] sm:$0xf]
    %v5173 = vld [vmem:[%s8 + $0x80] sm:$0xf]
    %v5174 = vld [vmem:[%s8 + $0x84] sm:$0xf]
    %v5175 = vld [vmem:[%s8 + $0x88] sm:$0xf]
    %v5176 = vld [vmem:[%s8 + $0x8c] sm:$0xf]
    %v5177 = vld [vmem:[%s8 + $0x90] sm:$0xf]
    %v5178 = vld [vmem:[%s8 + $0x94] sm:$0xf]
    %v5179 = vld [vmem:[%s8 + $0x98] sm:$0xf]
    %v5180 = vld [vmem:[%s8 + $0x9c] sm:$0xf]
    %v5181 = vld [vmem:[%s8 + $0xa0] sm:$0xf]
    %v5182 = vld [vmem:[%s8 + $0xa4] sm:$0xf]
    %v5183 = vld [vmem:[%s8 + $0xa8] sm:$0xf]
    %v5184 = vld [vmem:[%s8 + $0xac] sm:$0xf]
    %v5185 = vld [vmem:[%s8 + $0xb0] sm:$0xf]
    %v5186 = vld [vmem:[%s8 + $0xb4] sm:$0xf]
    %v5187 = vld [vmem:[%s8 + $0xb8] sm:$0xf]
    %v5188 = vld [vmem:[%s8 + $0xbc] sm:$0xf]
    %v5189 = vld [vmem:[%s9] sm:$0x1]
    %v5191 = vlaneseq
    %v5192 = vshrl.u32 %v5191, 7
    %v5193 = vsub.s32 0, %v5192
    %v5194 = vrot.slane %v5189, %v5193
    %v5244 = vunpack.c.l.b16 %v5141
    %v5245 = vunpack.c.l.b16 %v5142
    %v5246 = vunpack.c.l.b16 %v5143
    %v5247 = vunpack.c.l.b16 %v5144
    %v5248 = vunpack.c.l.b16 %v5145
    %v5249 = vunpack.c.l.b16 %v5146
    %v5250 = vunpack.c.l.b16 %v5147
    %v5251 = vunpack.c.l.b16 %v5148
    %v5252 = vunpack.c.l.b16 %v5149
    %v5253 = vunpack.c.l.b16 %v5150
    %v5254 = vunpack.c.l.b16 %v5151
    %v5255 = vunpack.c.l.b16 %v5152
    %v5256 = vunpack.c.l.b16 %v5153
    %v5257 = vunpack.c.l.b16 %v5154
    %v5258 = vunpack.c.l.b16 %v5155
    %v5259 = vunpack.c.l.b16 %v5156
    %v5260 = vunpack.c.l.b16 %v5157
    %v5261 = vunpack.c.l.b16 %v5158
    %v5262 = vunpack.c.l.b16 %v5159
    %v5263 = vunpack.c.l.b16 %v5160
    %v5264 = vunpack.c.l.b16 %v5161
    %v5265 = vunpack.c.l.b16 %v5162
    %v5266 = vunpack.c.l.b16 %v5163
    %v5267 = vunpack.c.l.b16 %v5164
    %v5268 = vunpack.c.l.b16 %v5165
    %v5269 = vunpack.c.l.b16 %v5166
    %v5270 = vunpack.c.l.b16 %v5167
    %v5271 = vunpack.c.l.b16 %v5168
    %v5272 = vunpack.c.l.b16 %v5169
    %v5273 = vunpack.c.l.b16 %v5170
    %v5274 = vunpack.c.l.b16 %v5171
    %v5275 = vunpack.c.l.b16 %v5172
    %v5276 = vunpack.c.l.b16 %v5173
    %v5277 = vunpack.c.l.b16 %v5174
    %v5278 = vunpack.c.l.b16 %v5175
    %v5279 = vunpack.c.l.b16 %v5176
    %v5280 = vunpack.c.l.b16 %v5177
    %v5281 = vunpack.c.l.b16 %v5178
    %v5282 = vunpack.c.l.b16 %v5179
    %v5283 = vunpack.c.l.b16 %v5180
    %v5284 = vunpack.c.l.b16 %v5181
    %v5285 = vunpack.c.l.b16 %v5182
    %v5286 = vunpack.c.l.b16 %v5183
    %v5287 = vunpack.c.l.b16 %v5184
    %v5288 = vunpack.c.l.b16 %v5185
    %v5289 = vunpack.c.l.b16 %v5186
    %v5290 = vunpack.c.l.b16 %v5187
    %v5291 = vunpack.c.l.b16 %v5188
    %v5292 = vpack.c.b16 %v5245, %v5244
    %v5293 = vpack.c.b16 %v5247, %v5246
    %v5294 = vpack.c.b16 %v5249, %v5248
    %v5295 = vpack.c.b16 %v5251, %v5250
    %v5296 = vpack.c.b16 %v5253, %v5252
    %v5297 = vpack.c.b16 %v5255, %v5254
    %v5298 = vpack.c.b16 %v5257, %v5256
    %v5299 = vpack.c.b16 %v5259, %v5258
    %v5300 = vpack.c.b16 %v5261, %v5260
    %v5301 = vpack.c.b16 %v5263, %v5262
    %v5302 = vpack.c.b16 %v5265, %v5264
    %v5303 = vpack.c.b16 %v5267, %v5266
    %v5304 = vpack.c.b16 %v5269, %v5268
    %v5305 = vpack.c.b16 %v5271, %v5270
    %v5306 = vpack.c.b16 %v5273, %v5272
    %v5307 = vpack.c.b16 %v5275, %v5274
    %v5308 = vpack.c.b16 %v5277, %v5276
    %v5309 = vpack.c.b16 %v5279, %v5278
    %v5310 = vpack.c.b16 %v5281, %v5280
    %v5311 = vpack.c.b16 %v5283, %v5282
    %v5312 = vpack.c.b16 %v5285, %v5284
    %v5313 = vpack.c.b16 %v5287, %v5286
    %v5314 = vpack.c.b16 %v5289, %v5288
    %v5315 = vpack.c.b16 %v5291, %v5290
    %5340 = vmatprep.subr.bf16.mxu0 0
    %5341 = vmatpush1.bf16.msra.mxu0 %v5299
    %5342 = vmatprep.subr.bf16.mxu0 0
    %5343 = vmatpush1.bf16.msra.mxu0 %v5298
    %5344 = vmatprep.subr.bf16.mxu0 0
    %5345 = vmatpush1.bf16.msra.mxu0 %v5297
    %5346 = vmatprep.subr.bf16.mxu0 0
    %5347 = vmatpush1.bf16.msra.mxu0 %v5296
    %5348 = vmatprep.subr.bf16.mxu0 0
    %5349 = vmatpush1.bf16.msra.mxu0 %v5295
    %5350 = vmatprep.subr.bf16.mxu0 0
    %5351 = vmatpush1.bf16.msra.mxu0 %v5294
    %5352 = vmatprep.subr.bf16.mxu0 0
    %5353 = vmatpush1.bf16.msra.mxu0 %v5293
    %5354 = vmatprep.subr.bf16.mxu0 0
    %5355 = vmatpush1.bf16.msra.mxu0 %v5292
    %5356 = vmatprep.subr.bf16.mxu0 0
    %5357 = vmatpush2.bf16.msra.mxu0 %v5307
    %5358 = vmatprep.subr.bf16.mxu0 0
    %5359 = vmatpush2.bf16.msra.mxu0 %v5306
    %5360 = vmatprep.subr.bf16.mxu0 0
    %5361 = vmatpush2.bf16.msra.mxu0 %v5305
    %5362 = vmatprep.subr.bf16.mxu0 0
    %5363 = vmatpush2.bf16.msra.mxu0 %v5304
    %5364 = vmatprep.subr.bf16.mxu0 0
    %5365 = vmatpush2.bf16.msra.mxu0 %v5303
    %5366 = vmatprep.subr.bf16.mxu0 0
    %5367 = vmatpush2.bf16.msra.mxu0 %v5302
    %5368 = vmatprep.subr.bf16.mxu0 0
    %5369 = vmatpush2.bf16.msra.mxu0 %v5301
    %5370 = vmatprep.subr.bf16.mxu0 0
    %5371 = vmatpush2.bf16.msra.mxu0 %v5300
    %5372 = vmatprep.mubr.bf16.mxu0 %v5139
    %5373 = vmatmul.mubr.bf16.gmra.mxu0 %v5138
    %v5374 = vpop.f32.mrf.mxu0
    %v5375 = vadd.f32 %v5194, %v5374
    %v5376 = vpop.f32.mrf.mxu0
    %v5377 = vpop.f32.mrf.mxu0
    %v5378 = vpop.f32.mrf.mxu0
    %5379 = vdwg.mxu0
    %5380 = vmatprep.subr.bf16.mxu0 0
    %5381 = vmatpush1.bf16.msra.mxu0 %v5315
    %5382 = vmatprep.subr.bf16.mxu0 0
    %5383 = vmatpush1.bf16.msra.mxu0 %v5314
    %5384 = vmatprep.subr.bf16.mxu0 0
    %5385 = vmatpush1.bf16.msra.mxu0 %v5313
    %5386 = vmatprep.subr.bf16.mxu0 0
    %5387 = vmatpush1.bf16.msra.mxu0 %v5312
    %5388 = vmatprep.subr.bf16.mxu0 0
    %5389 = vmatpush1.bf16.msra.mxu0 %v5311
    %5390 = vmatprep.subr.bf16.mxu0 0
    %5391 = vmatpush1.bf16.msra.mxu0 %v5310
    %5392 = vmatprep.subr.bf16.mxu0 0
    %5393 = vmatpush1.bf16.msra.mxu0 %v5309
    %5394 = vmatprep.subr.bf16.mxu0 0
    %5395 = vmatpush1.bf16.msra.mxu0 %v5308
    %5396 = vmatprep.subr.bf16.mxu0 0
    %5397 = vmatpush2.bf16.msra.mxu0 0
    %5398 = vmatprep.subr.bf16.mxu0 0
    %5399 = vmatpush2.bf16.msra.mxu0 0
    %5400 = vmatprep.subr.bf16.mxu0 0
    %5401 = vmatpush2.bf16.msra.mxu0 0
    %5402 = vmatprep.subr.bf16.mxu0 0
    %5403 = vmatpush2.bf16.msra.mxu0 0
    %5404 = vmatprep.subr.bf16.mxu0 0
    %5405 = vmatpush2.bf16.msra.mxu0 0
    %5406 = vmatprep.subr.bf16.mxu0 0
    %5407 = vmatpush2.bf16.msra.mxu0 0
    %5408 = vmatprep.subr.bf16.mxu0 0
    %5409 = vmatpush2.bf16.msra.mxu0 0
    %5410 = vmatprep.subr.bf16.mxu0 0
    %5411 = vmatpush2.bf16.msra.mxu0 0
    %5412 = vmatprep.mubr.bf16.mxu0 0
    %5413 = vmatmul.mubr.bf16.gmra.mxu0 %v5140
    %v5414 = vpop.f32.mrf.mxu0
    %v5415 = vadd.f32 %v5375, %v5414
    %v5416 = vpop.f32.mrf.mxu0
    %v5417 = vpop.f32.mrf.mxu0
    %v5418 = vpop.f32.mrf.mxu0
    %5419 = vdwg.mxu0
    %v5420 = vmul.f32 %v5415, 0.5
    %v5421 = vmul.f32 %v5415, 0.70710677
    %v5422 = verf.f32.pop %v5421
    %v5423 = vadd.f32 %v5422, 1.0
    %v5424 = vmul.f32 %v5420, %v5423
    %v5425 = vpack.c.bf16 %v5424, %v5424
    %v5426 = vld [vmem:[%s10] sm:$0xf]
    %v5427 = vld [vmem:[%s10 + $0x4] sm:$0xf]
    %v5428 = vld [vmem:[%s10 + $0x8] sm:$0xf]
    %v5429 = vld [vmem:[%s10 + $0xc] sm:$0xf]
    %v5430 = vld [vmem:[%s10 + $0x10] sm:$0xf]
    %v5431 = vld [vmem:[%s10 + $0x14] sm:$0xf]
    %v5432 = vld [vmem:[%s10 + $0x18] sm:$0xf]
    %v5433 = vld [vmem:[%s10 + $0x1c] sm:$0xf]
    %v5434 = vld [vmem:[%s11] sm:$0x1]
    %v5436 = vlaneseq
    %v5437 = vshrl.u32 %v5436, 7
    %v5438 = vsub.s32 0, %v5437
    %v5439 = vrot.slane %v5434, %v5438
    %v5449 = vunpack.c.l.b16 %v5426
    %v5450 = vunpack.c.l.b16 %v5427
    %v5451 = vunpack.c.l.b16 %v5428
    %v5452 = vunpack.c.l.b16 %v5429
    %v5453 = vunpack.c.l.b16 %v5430
    %v5454 = vunpack.c.l.b16 %v5431
    %v5455 = vunpack.c.l.b16 %v5432
    %v5456 = vunpack.c.l.b16 %v5433
    %v5457 = vpack.c.b16 %v5450, %v5449
    %v5458 = vpack.c.b16 %v5452, %v5451
    %v5459 = vpack.c.b16 %v5454, %v5453
    %v5460 = vpack.c.b16 %v5456, %v5455
    %v5466 = vsel %vm5044, %v5425, 0
    %5468 = vmatprep.subr.bf16.mxu0 0
    %5469 = vmatpush1.bf16.msra.mxu0 0
    %5470 = vmatprep.subr.bf16.mxu0 0
    %5471 = vmatpush1.bf16.msra.mxu0 0
    %5472 = vmatprep.subr.bf16.mxu0 0
    %5473 = vmatpush1.bf16.msra.mxu0 0
    %5474 = vmatprep.subr.bf16.mxu0 0
    %5475 = vmatpush1.bf16.msra.mxu0 0
    %5476 = vmatprep.subr.bf16.mxu0 0
    %5477 = vmatpush1.bf16.msra.mxu0 %v5460
    %5478 = vmatprep.subr.bf16.mxu0 0
    %5479 = vmatpush1.bf16.msra.mxu0 %v5459
    %5480 = vmatprep.subr.bf16.mxu0 0
    %5481 = vmatpush1.bf16.msra.mxu0 %v5458
    %5482 = vmatprep.subr.bf16.mxu0 0
    %5483 = vmatpush1.bf16.msra.mxu0 %v5457
    %5484 = vmatprep.subr.bf16.mxu0 0
    %5485 = vmatpush2.bf16.msra.mxu0 0
    %5486 = vmatprep.subr.bf16.mxu0 0
    %5487 = vmatpush2.bf16.msra.mxu0 0
    %5488 = vmatprep.subr.bf16.mxu0 0
    %5489 = vmatpush2.bf16.msra.mxu0 0
    %5490 = vmatprep.subr.bf16.mxu0 0
    %5491 = vmatpush2.bf16.msra.mxu0 0
    %5492 = vmatprep.subr.bf16.mxu0 0
    %5493 = vmatpush2.bf16.msra.mxu0 0
    %5494 = vmatprep.subr.bf16.mxu0 0
    %5495 = vmatpush2.bf16.msra.mxu0 0
    %5496 = vmatprep.subr.bf16.mxu0 0
    %5497 = vmatpush2.bf16.msra.mxu0 0
    %5498 = vmatprep.subr.bf16.mxu0 0
    %5499 = vmatpush2.bf16.msra.mxu0 0
    %5500 = vmatprep.mubr.bf16.mxu0 0
    %5501 = vmatmul.mubr.bf16.gmra.mxu0 %v5466
    %v5502 = vpop.f32.mrf.mxu0
    %v5503 = vadd.f32 %v5439, %v5502
    %v5504 = vpop.f32.mrf.mxu0
    %v5505 = vpop.f32.mrf.mxu0
    %v5506 = vpop.f32.mrf.mxu0
    %5507 = vdwg.mxu0
    %v5508 = vmul.f32 %v5503, 0.5
    %v5509 = vmul.f32 %v5503, 0.70710677
    %v5510 = verf.f32.pop %v5509
    %v5511 = vadd.f32 %v5510, 1.0
    %v5512 = vmul.f32 %v5508, %v5511
    %v5513 = vpack.c.bf16 %v5512, %v5512
    %v5514 = vld [vmem:[%s12] sm:$0xf]
    %v5515 = vld [vmem:[%s12 + $0x4] sm:$0xf]
    %v5516 = vld [vmem:[%s13] sm:$0x1]
    %v5518 = vlaneseq
    %v5519 = vshrl.u32 %v5518, 7
    %v5520 = vsub.s32 0, %v5519
    %v5521 = vrot.slane %v5516, %v5520
    %v5525 = vunpack.c.l.b16 %v5514
    %v5526 = vunpack.c.l.b16 %v5515
    %v5527 = vpack.c.b16 %v5526, %v5525
    %v5530 = vsel %vm2348, %v5513, 0
    %5532 = vmatprep.subr.bf16.mxu0 0
    %5533 = vmatpush1.bf16.msra.mxu0 0
    %5534 = vmatprep.subr.bf16.mxu0 0
    %5535 = vmatpush1.bf16.msra.mxu0 0
    %5536 = vmatprep.subr.bf16.mxu0 0
    %5537 = vmatpush1.bf16.msra.mxu0 0
    %5538 = vmatprep.subr.bf16.mxu0 0
    %5539 = vmatpush1.bf16.msra.mxu0 0
    %5540 = vmatprep.subr.bf16.mxu0 0
    %5541 = vmatpush1.bf16.msra.mxu0 0
    %5542 = vmatprep.subr.bf16.mxu0 0
    %5543 = vmatpush1.bf16.msra.mxu0 0
    %5544 = vmatprep.subr.bf16.mxu0 0
    %5545 = vmatpush1.bf16.msra.mxu0 0
    %5546 = vmatprep.subr.bf16.mxu0 0
    %5547 = vmatpush1.bf16.msra.mxu0 %v5527
    %5548 = vmatprep.subr.bf16.mxu0 0
    %5549 = vmatpush2.bf16.msra.mxu0 0
    %5550 = vmatprep.subr.bf16.mxu0 0
    %5551 = vmatpush2.bf16.msra.mxu0 0
    %5552 = vmatprep.subr.bf16.mxu0 0
    %5553 = vmatpush2.bf16.msra.mxu0 0
    %5554 = vmatprep.subr.bf16.mxu0 0
    %5555 = vmatpush2.bf16.msra.mxu0 0
    %5556 = vmatprep.subr.bf16.mxu0 0
    %5557 = vmatpush2.bf16.msra.mxu0 0
    %5558 = vmatprep.subr.bf16.mxu0 0
    %5559 = vmatpush2.bf16.msra.mxu0 0
    %5560 = vmatprep.subr.bf16.mxu0 0
    %5561 = vmatpush2.bf16.msra.mxu0 0
    %5562 = vmatprep.subr.bf16.mxu0 0
    %5563 = vmatpush2.bf16.msra.mxu0 0
    %5564 = vmatprep.mubr.bf16.mxu0 0
    %5565 = vmatmul.mubr.bf16.gmra.mxu0 %v5530
    %v5566 = vpop.f32.mrf.mxu0
    %v5567 = vadd.f32 %v5521, %v5566
    %v5568 = vpop.f32.mrf.mxu0
    %v5569 = vpop.f32.mrf.mxu0
    %v5570 = vpop.f32.mrf.mxu0
    %5571 = vdwg.mxu0
    %5572 = vst.msk [vmem:[#allocation5] sm:$0xff] %vm152, %v5567
    // Predicated region
    $region58: #{tpu_custom_call.1} parent=1 // pred_check
      _
    $region59: #{tpu_custom_call.1} parent=1 // pred_check_branch
      %5574 = sbr.rel (0) target = $region61
    $region60: #{tpu_custom_call.1} parent=1 // pred_region
      %s5576 = ssub.s32 128, 128
      %5577 = vsyncadd [#allocation6], %s5576
      %s5579 = sshll.u32 [#allocation5], 4
      %s5580 = int_to_ptr.vmem [resolvable:$true] %s5579
      %5582 = dma.vmem_to_hbm [thread:$0]  %s5580, 128, %s14, [#allocation6]
    $region61: #{tpu_custom_call.1} parent=1 // pred_fallthru
      _
    // Predicated region
    $region62: #{tpu_custom_call.1} parent=1 // pred_check
      _
    $region63: #{tpu_custom_call.1} parent=1 // pred_check_branch
      %5584 = sbr.rel (0) target = $region65
    $region64: #{tpu_custom_call.1} parent=1 // pred_region
      %5585 = dma.done [#allocation6], 128
    $region65: #{tpu_custom_call.1} parent=1 // pred_fallthru
      _
    %5586 = vsyncpa [#allocation6], 1

</llo_original>
